<compile_context>
chip_gen: v7x
topology: tpu7x:2x2x1
jax: 0.10.0
libtpu: 0.0.40
codegen_flags: <defaults>
</compile_context>

<pallas_src>
import math

import jax
import jax.numpy as jnp
from jax.experimental import pallas as pl
from jax.experimental.pallas import tpu as pltpu

INPUT_DIM = 3                           # module default input_dim
FREQ = 9                                # module default freq
ENC_DIM = INPUT_DIM * FREQ * 2          # 54
OUT_DIM = 3
SIN_BLOCK = FREQ * OUT_DIM * INPUT_DIM  # 81: offset of the cos-weight block
NUM_W = OUT_DIM * ENC_DIM               # 162 weights; 3 biases appended after
CHUNK_ROWS = 8                          # sublane rows processed per inner step


def _rhino_kernel(w_ref, x_ref, o_ref):
    """One (3, block_rows, tile_l) tile of the forward pass.

    w_ref: SMEM (NUM_W + OUT_DIM,) f32 with layout
           w_flat[((t*FREQ + k)*OUT_DIM + o)*INPUT_DIM + d] = W[o, t*27 + 3k + d]
           (t = 0 sin block, t = 1 cos block), followed by the 3 biases.
    x_ref / o_ref: VMEM (3, block_rows, tile_l) f32 -- samples dense on both
           the sublane and lane axes, channel-major.
    """
    block_rows, tile_l = x_ref.shape[1], x_ref.shape[2]
    n_chunks = block_rows // CHUNK_ROWS

    @pl.loop(0, n_chunks)
    def _chunk(g):
        r0 = pl.multiple_of(g * CHUNK_ROWS, CHUNK_ROWS)
        rows = pl.ds(r0, CHUNK_ROWS)

        accs = [jnp.zeros((CHUNK_ROWS, tile_l), jnp.float32)
                for _ in range(OUT_DIM)]

        for d in range(INPUT_DIM):
            xd = x_ref[d, rows, :]                     # (CHUNK_ROWS, tile_l)
            # k = 0 features; higher frequencies via double-angle recurrence
            # (one sin + one cos per channel instead of 9 each).
            s = jnp.sin(xd * math.pi)
            c = jnp.cos(xd * math.pi)
            for k in range(FREQ):
                for o in range(OUT_DIM):
                    ws = w_ref[(k * OUT_DIM + o) * INPUT_DIM + d]
                    wc = w_ref[SIN_BLOCK + (k * OUT_DIM + o) * INPUT_DIM + d]
                    accs[o] = accs[o] + ws * s + wc * c
                if k + 1 < FREQ:
                    s, c = 2.0 * (s * c), 1.0 - 2.0 * (s * s)

        for o in range(OUT_DIM):
            o_ref[o, rows, :] = accs[o] + w_ref[NUM_W + o]


def _ceil_div(a, b):
    return -(-a // b)


def _round_up(a, b):
    return _ceil_div(a, b) * b


def _pick_tiling(n, tile_l, max_block_rows):
    """Pick (block_rows, grid_rows) for N samples laid out as rows of tile_l."""
    rows = _round_up(_ceil_div(n, tile_l), CHUNK_ROWS)
    if rows <= CHUNK_ROWS:
        block_rows = CHUNK_ROWS
    else:
        # At least 2 grid steps (keeps both v7x TensorCores busy under the
        # "parallel" grid axis), each step as large as possible but capped.
        n_blocks = max(2, _ceil_div(rows, max_block_rows))
        block_rows = _round_up(_ceil_div(rows, n_blocks), CHUNK_ROWS)
    grid_rows = _ceil_div(rows, block_rows)
    return block_rows, grid_rows


def _pack_weights(w, b):
    # (t, k, o, d)-major flattening of the (3, 54) nn.Linear weight + bias
    # (input-feature index in the PyTorch module is t*27 + 3k + d).
    w4 = w.reshape(OUT_DIM, 2, FREQ, INPUT_DIM).transpose(1, 2, 0, 3)
    return jnp.concatenate([w4.reshape(-1), b]).astype(jnp.float32)


def mlp_transformer_rhino_channel_major(x_cm, w, b, *, tile_l=512,
                                        max_block_rows=64):
    """Forward pass, channel-major interface.

    x_cm: (3, N) f32; w: (3, 54) f32 (PyTorch nn.Linear weight, out x in);
    b: (3,) f32.  Returns (3, N) f32.  Prefer this entry point when the
    surrounding model already keeps positions channel-major: it avoids the
    (N,3)<->(3,N) relayout HBM passes entirely.
    """
    d_in, n = x_cm.shape
    assert d_in == INPUT_DIM
    assert tile_l % 128 == 0 and max_block_rows % CHUNK_ROWS == 0

    block_rows, grid_rows = _pick_tiling(n, tile_l, max_block_rows)
    r_pad = block_rows * grid_rows
    n_pad = r_pad * tile_l

    x_t = jnp.pad(x_cm, ((0, 0), (0, n_pad - n)))
    x_t = x_t.reshape(INPUT_DIM, r_pad, tile_l)
    w_flat = _pack_weights(w, b)

    cost = pl.CostEstimate(
        flops=n_pad * (2 * ENC_DIM * OUT_DIM + 40 * INPUT_DIM),
        transcendentals=n_pad * 2 * INPUT_DIM,
        bytes_accessed=2 * n_pad * INPUT_DIM * 4 + int(w_flat.size) * 4,
    )

    out = pl.pallas_call(
        _rhino_kernel,
        out_shape=jax.ShapeDtypeStruct((INPUT_DIM, r_pad, tile_l), jnp.float32),
        grid_spec=pltpu.PrefetchScalarGridSpec(
            num_scalar_prefetch=0,
            grid=(grid_rows,),
            in_specs=[
                pl.BlockSpec(memory_space=pltpu.MemorySpace.SMEM),
                pl.BlockSpec((INPUT_DIM, block_rows, tile_l),
                             lambda i: (0, i, 0)),
            ],
            out_specs=pl.BlockSpec((INPUT_DIM, block_rows, tile_l),
                                   lambda i: (0, i, 0)),
        ),
        compiler_params=pltpu.CompilerParams(
            dimension_semantics=("parallel",)),
        cost_estimate=cost,
    )(w_flat, x_t)

    return out.reshape(INPUT_DIM, n_pad)[:, :n]


def mlp_transformer_rhino(x, w, b, **tiling_kwargs):
    """Forward pass matching the PyTorch module's (N, 3) -> (N, 3) interface."""
    # TODO(synk): the (N,3)<->(3,N) relayouts here are extra HBM passes; in a
    # real pipeline keep positions channel-major end-to-end and call
    # mlp_transformer_rhino_channel_major directly (biggest relative win on v5e).
    out_cm = mlp_transformer_rhino_channel_major(x.T, w, b, **tiling_kwargs)
    return out_cm.T


def _reference(x, w, b):
    feats = jnp.concatenate(
        [jnp.sin(x * (math.pi * float(2 ** k))) for k in range(FREQ)]
        + [jnp.cos(x * (math.pi * float(2 ** k))) for k in range(FREQ)],
        axis=-1,
    )
    return feats @ w.T + b


if __name__ == "__main__":
    key = jax.random.PRNGKey(0)
    k_x, k_w, k_b = jax.random.split(key, 3)

    # N deliberately not a multiple of the tile to exercise the padded tail;
    # with tile_l=512 the wrapper picks block_rows=16 -> a 2-step grid
    # (even split, so a v7x chip keeps both TensorCores busy).
    N = 10000
    x = jax.random.uniform(k_x, (N, INPUT_DIM), jnp.float32,
                           minval=-1.0, maxval=1.0)

    bound = 1.0 / math.sqrt(ENC_DIM)
    w = jax.random.uniform(k_w, (OUT_DIM, ENC_DIM), jnp.float32,
                           minval=-bound, maxval=bound)   # (out, in) like nn.Linear
    b = jax.random.uniform(k_b, (OUT_DIM,), jnp.float32,
                           minval=-bound, maxval=bound)

    fwd = jax.jit(mlp_transformer_rhino)
    out = jax.block_until_ready(fwd(x, w, b))

    ref = _reference(x, w, b)
    assert out.shape == (N, OUT_DIM)
    max_err = float(jnp.max(jnp.abs(out - ref)))
    # Tolerance budget: the double-angle recurrence amplifies f32 rounding by
    # ~2^k (~1e-4 worst case at k=8) and the f32 reference's own range
    # reduction at arguments up to 256*pi carries a similar, uncorrelated
    # ~1e-4 error, so compare at 5e-4 (typical observed max ~1e-4).
    assert jnp.allclose(out, ref, atol=5e-4, rtol=2e-3), (
        f"max abs err {max_err}")

    print("KERNEL_OK")
</pallas_src>

<mosaic_0001>
module attributes {stable_mosaic.version = 11 : i64} {
  func.func @_rhino_kernel(%arg0: i32, %arg1: memref<165xf32, #tpu.memory_space<smem>>, %arg2: memref<3x16x512xf32, #tpu.memory_space<vmem>>, %arg3: memref<3x16x512xf32, #tpu.memory_space<vmem>>) attributes {dimension_semantics = [#tpu.dimension_semantics<parallel>], iteration_bounds = array<i64: 2>, scalar_prefetch = 0 : i64, scratch_operands = 0 : i64, tpu.core_type = #tpu.core_type<tc>, window_params = [{transform_indices = @transform_0, window_bounds = array<i64: 165>}, {transform_indices = @transform_1, window_bounds = array<i64: 3, 16, 512>}, {transform_indices = @transform_2, window_bounds = array<i64: 3, 16, 512>}]} {
    %c0_i32 = arith.constant 0 : i32
    %c2_i32 = arith.constant 2 : i32
    %0 = arith.addi %c0_i32, %c2_i32 : i32
    %c1_i32 = arith.constant 1 : i32
    scf.for %arg4 = %c0_i32 to %0 step %c1_i32  : i32 {
      %c1_i32_1 = arith.constant 1 : i32
      %1 = arith.muli %arg4, %c1_i32_1 : i32
      %c0_i32_2 = arith.constant 0 : i32
      %2 = arith.addi %c0_i32_2, %1 : i32
      %c8_i32 = arith.constant 8 : i32
      %3 = arith.muli %2, %c8_i32 : i32
      %4 = tpu.assume_multiple %3, 8 : i32
      %cst = arith.constant 0.000000e+00 : f32
      %5 = vector.broadcast %cst : f32 to vector<8x512xf32>
      %cst_3 = arith.constant 0.000000e+00 : f32
      %6 = vector.broadcast %cst_3 : f32 to vector<8x512xf32>
      %cst_4 = arith.constant 0.000000e+00 : f32
      %7 = vector.broadcast %cst_4 : f32 to vector<8x512xf32>
      %c0 = arith.constant 0 : index
      %8 = arith.index_cast %4 : i32 to index
      %c0_5 = arith.constant 0 : index
      %9 = vector.load %arg2[%c0, %8, %c0_5] : memref<3x16x512xf32, #tpu.memory_space<vmem>>, vector<1x8x512xf32>
      %10 = vector.shape_cast %9 : vector<1x8x512xf32> to vector<8x512xf32>
      %cst_6 = arith.constant 3.14159274 : f32
      %11 = vector.broadcast %cst_6 : f32 to vector<8x512xf32>
      %12 = arith.mulf %10, %11 : vector<8x512xf32>
      %13 = math.sin %12 : vector<8x512xf32>
      %cst_7 = arith.constant 3.14159274 : f32
      %14 = vector.broadcast %cst_7 : f32 to vector<8x512xf32>
      %15 = arith.mulf %10, %14 : vector<8x512xf32>
      %16 = math.cos %15 : vector<8x512xf32>
      %c0_8 = arith.constant 0 : index
      %17 = memref.load %arg1[%c0_8] : memref<165xf32, #tpu.memory_space<smem>>
      %c81 = arith.constant 81 : index
      %18 = memref.load %arg1[%c81] : memref<165xf32, #tpu.memory_space<smem>>
      %19 = vector.broadcast %17 : f32 to vector<8x512xf32>
      %20 = arith.mulf %19, %13 : vector<8x512xf32>
      %21 = arith.addf %5, %20 : vector<8x512xf32>
      %22 = vector.broadcast %18 : f32 to vector<8x512xf32>
      %23 = arith.mulf %22, %16 : vector<8x512xf32>
      %24 = arith.addf %21, %23 : vector<8x512xf32>
      %c3 = arith.constant 3 : index
      %25 = memref.load %arg1[%c3] : memref<165xf32, #tpu.memory_space<smem>>
      %c84 = arith.constant 84 : index
      %26 = memref.load %arg1[%c84] : memref<165xf32, #tpu.memory_space<smem>>
      %27 = vector.broadcast %25 : f32 to vector<8x512xf32>
      %28 = arith.mulf %27, %13 : vector<8x512xf32>
      %29 = arith.addf %6, %28 : vector<8x512xf32>
      %30 = vector.broadcast %26 : f32 to vector<8x512xf32>
      %31 = arith.mulf %30, %16 : vector<8x512xf32>
      %32 = arith.addf %29, %31 : vector<8x512xf32>
      %c6 = arith.constant 6 : index
      %33 = memref.load %arg1[%c6] : memref<165xf32, #tpu.memory_space<smem>>
      %c87 = arith.constant 87 : index
      %34 = memref.load %arg1[%c87] : memref<165xf32, #tpu.memory_space<smem>>
      %35 = vector.broadcast %33 : f32 to vector<8x512xf32>
      %36 = arith.mulf %35, %13 : vector<8x512xf32>
      %37 = arith.addf %7, %36 : vector<8x512xf32>
      %38 = vector.broadcast %34 : f32 to vector<8x512xf32>
      %39 = arith.mulf %38, %16 : vector<8x512xf32>
      %40 = arith.addf %37, %39 : vector<8x512xf32>
      %41 = arith.mulf %13, %16 : vector<8x512xf32>
      %cst_9 = arith.constant 2.000000e+00 : f32
      %42 = vector.broadcast %cst_9 : f32 to vector<8x512xf32>
      %43 = arith.mulf %42, %41 : vector<8x512xf32>
      %44 = arith.mulf %13, %13 : vector<8x512xf32>
      %cst_10 = arith.constant 2.000000e+00 : f32
      %45 = vector.broadcast %cst_10 : f32 to vector<8x512xf32>
      %46 = arith.mulf %45, %44 : vector<8x512xf32>
      %cst_11 = arith.constant 1.000000e+00 : f32
      %47 = vector.broadcast %cst_11 : f32 to vector<8x512xf32>
      %48 = arith.subf %47, %46 : vector<8x512xf32>
      %c9 = arith.constant 9 : index
      %49 = memref.load %arg1[%c9] : memref<165xf32, #tpu.memory_space<smem>>
      %c90 = arith.constant 90 : index
      %50 = memref.load %arg1[%c90] : memref<165xf32, #tpu.memory_space<smem>>
      %51 = vector.broadcast %49 : f32 to vector<8x512xf32>
      %52 = arith.mulf %51, %43 : vector<8x512xf32>
      %53 = arith.addf %24, %52 : vector<8x512xf32>
      %54 = vector.broadcast %50 : f32 to vector<8x512xf32>
      %55 = arith.mulf %54, %48 : vector<8x512xf32>
      %56 = arith.addf %53, %55 : vector<8x512xf32>
      %c12 = arith.constant 12 : index
      %57 = memref.load %arg1[%c12] : memref<165xf32, #tpu.memory_space<smem>>
      %c93 = arith.constant 93 : index
      %58 = memref.load %arg1[%c93] : memref<165xf32, #tpu.memory_space<smem>>
      %59 = vector.broadcast %57 : f32 to vector<8x512xf32>
      %60 = arith.mulf %59, %43 : vector<8x512xf32>
      %61 = arith.addf %32, %60 : vector<8x512xf32>
      %62 = vector.broadcast %58 : f32 to vector<8x512xf32>
      %63 = arith.mulf %62, %48 : vector<8x512xf32>
      %64 = arith.addf %61, %63 : vector<8x512xf32>
      %c15 = arith.constant 15 : index
      %65 = memref.load %arg1[%c15] : memref<165xf32, #tpu.memory_space<smem>>
      %c96 = arith.constant 96 : index
      %66 = memref.load %arg1[%c96] : memref<165xf32, #tpu.memory_space<smem>>
      %67 = vector.broadcast %65 : f32 to vector<8x512xf32>
      %68 = arith.mulf %67, %43 : vector<8x512xf32>
      %69 = arith.addf %40, %68 : vector<8x512xf32>
      %70 = vector.broadcast %66 : f32 to vector<8x512xf32>
      %71 = arith.mulf %70, %48 : vector<8x512xf32>
      %72 = arith.addf %69, %71 : vector<8x512xf32>
      %73 = arith.mulf %43, %48 : vector<8x512xf32>
      %cst_12 = arith.constant 2.000000e+00 : f32
      %74 = vector.broadcast %cst_12 : f32 to vector<8x512xf32>
      %75 = arith.mulf %74, %73 : vector<8x512xf32>
      %76 = arith.mulf %43, %43 : vector<8x512xf32>
      %cst_13 = arith.constant 2.000000e+00 : f32
      %77 = vector.broadcast %cst_13 : f32 to vector<8x512xf32>
      %78 = arith.mulf %77, %76 : vector<8x512xf32>
      %cst_14 = arith.constant 1.000000e+00 : f32
      %79 = vector.broadcast %cst_14 : f32 to vector<8x512xf32>
      %80 = arith.subf %79, %78 : vector<8x512xf32>
      %c18 = arith.constant 18 : index
      %81 = memref.load %arg1[%c18] : memref<165xf32, #tpu.memory_space<smem>>
      %c99 = arith.constant 99 : index
      %82 = memref.load %arg1[%c99] : memref<165xf32, #tpu.memory_space<smem>>
      %83 = vector.broadcast %81 : f32 to vector<8x512xf32>
      %84 = arith.mulf %83, %75 : vector<8x512xf32>
      %85 = arith.addf %56, %84 : vector<8x512xf32>
      %86 = vector.broadcast %82 : f32 to vector<8x512xf32>
      %87 = arith.mulf %86, %80 : vector<8x512xf32>
      %88 = arith.addf %85, %87 : vector<8x512xf32>
      %c21 = arith.constant 21 : index
      %89 = memref.load %arg1[%c21] : memref<165xf32, #tpu.memory_space<smem>>
      %c102 = arith.constant 102 : index
      %90 = memref.load %arg1[%c102] : memref<165xf32, #tpu.memory_space<smem>>
      %91 = vector.broadcast %89 : f32 to vector<8x512xf32>
      %92 = arith.mulf %91, %75 : vector<8x512xf32>
      %93 = arith.addf %64, %92 : vector<8x512xf32>
      %94 = vector.broadcast %90 : f32 to vector<8x512xf32>
      %95 = arith.mulf %94, %80 : vector<8x512xf32>
      %96 = arith.addf %93, %95 : vector<8x512xf32>
      %c24 = arith.constant 24 : index
      %97 = memref.load %arg1[%c24] : memref<165xf32, #tpu.memory_space<smem>>
      %c105 = arith.constant 105 : index
      %98 = memref.load %arg1[%c105] : memref<165xf32, #tpu.memory_space<smem>>
      %99 = vector.broadcast %97 : f32 to vector<8x512xf32>
      %100 = arith.mulf %99, %75 : vector<8x512xf32>
      %101 = arith.addf %72, %100 : vector<8x512xf32>
      %102 = vector.broadcast %98 : f32 to vector<8x512xf32>
      %103 = arith.mulf %102, %80 : vector<8x512xf32>
      %104 = arith.addf %101, %103 : vector<8x512xf32>
      %105 = arith.mulf %75, %80 : vector<8x512xf32>
      %cst_15 = arith.constant 2.000000e+00 : f32
      %106 = vector.broadcast %cst_15 : f32 to vector<8x512xf32>
      %107 = arith.mulf %106, %105 : vector<8x512xf32>
      %108 = arith.mulf %75, %75 : vector<8x512xf32>
      %cst_16 = arith.constant 2.000000e+00 : f32
      %109 = vector.broadcast %cst_16 : f32 to vector<8x512xf32>
      %110 = arith.mulf %109, %108 : vector<8x512xf32>
      %cst_17 = arith.constant 1.000000e+00 : f32
      %111 = vector.broadcast %cst_17 : f32 to vector<8x512xf32>
      %112 = arith.subf %111, %110 : vector<8x512xf32>
      %c27 = arith.constant 27 : index
      %113 = memref.load %arg1[%c27] : memref<165xf32, #tpu.memory_space<smem>>
      %c108 = arith.constant 108 : index
      %114 = memref.load %arg1[%c108] : memref<165xf32, #tpu.memory_space<smem>>
      %115 = vector.broadcast %113 : f32 to vector<8x512xf32>
      %116 = arith.mulf %115, %107 : vector<8x512xf32>
      %117 = arith.addf %88, %116 : vector<8x512xf32>
      %118 = vector.broadcast %114 : f32 to vector<8x512xf32>
      %119 = arith.mulf %118, %112 : vector<8x512xf32>
      %120 = arith.addf %117, %119 : vector<8x512xf32>
      %c30 = arith.constant 30 : index
      %121 = memref.load %arg1[%c30] : memref<165xf32, #tpu.memory_space<smem>>
      %c111 = arith.constant 111 : index
      %122 = memref.load %arg1[%c111] : memref<165xf32, #tpu.memory_space<smem>>
      %123 = vector.broadcast %121 : f32 to vector<8x512xf32>
      %124 = arith.mulf %123, %107 : vector<8x512xf32>
      %125 = arith.addf %96, %124 : vector<8x512xf32>
      %126 = vector.broadcast %122 : f32 to vector<8x512xf32>
      %127 = arith.mulf %126, %112 : vector<8x512xf32>
      %128 = arith.addf %125, %127 : vector<8x512xf32>
      %c33 = arith.constant 33 : index
      %129 = memref.load %arg1[%c33] : memref<165xf32, #tpu.memory_space<smem>>
      %c114 = arith.constant 114 : index
      %130 = memref.load %arg1[%c114] : memref<165xf32, #tpu.memory_space<smem>>
      %131 = vector.broadcast %129 : f32 to vector<8x512xf32>
      %132 = arith.mulf %131, %107 : vector<8x512xf32>
      %133 = arith.addf %104, %132 : vector<8x512xf32>
      %134 = vector.broadcast %130 : f32 to vector<8x512xf32>
      %135 = arith.mulf %134, %112 : vector<8x512xf32>
      %136 = arith.addf %133, %135 : vector<8x512xf32>
      %137 = arith.mulf %107, %112 : vector<8x512xf32>
      %cst_18 = arith.constant 2.000000e+00 : f32
      %138 = vector.broadcast %cst_18 : f32 to vector<8x512xf32>
      %139 = arith.mulf %138, %137 : vector<8x512xf32>
      %140 = arith.mulf %107, %107 : vector<8x512xf32>
      %cst_19 = arith.constant 2.000000e+00 : f32
      %141 = vector.broadcast %cst_19 : f32 to vector<8x512xf32>
      %142 = arith.mulf %141, %140 : vector<8x512xf32>
      %cst_20 = arith.constant 1.000000e+00 : f32
      %143 = vector.broadcast %cst_20 : f32 to vector<8x512xf32>
      %144 = arith.subf %143, %142 : vector<8x512xf32>
      %c36 = arith.constant 36 : index
      %145 = memref.load %arg1[%c36] : memref<165xf32, #tpu.memory_space<smem>>
      %c117 = arith.constant 117 : index
      %146 = memref.load %arg1[%c117] : memref<165xf32, #tpu.memory_space<smem>>
      %147 = vector.broadcast %145 : f32 to vector<8x512xf32>
      %148 = arith.mulf %147, %139 : vector<8x512xf32>
      %149 = arith.addf %120, %148 : vector<8x512xf32>
      %150 = vector.broadcast %146 : f32 to vector<8x512xf32>
      %151 = arith.mulf %150, %144 : vector<8x512xf32>
      %152 = arith.addf %149, %151 : vector<8x512xf32>
      %c39 = arith.constant 39 : index
      %153 = memref.load %arg1[%c39] : memref<165xf32, #tpu.memory_space<smem>>
      %c120 = arith.constant 120 : index
      %154 = memref.load %arg1[%c120] : memref<165xf32, #tpu.memory_space<smem>>
      %155 = vector.broadcast %153 : f32 to vector<8x512xf32>
      %156 = arith.mulf %155, %139 : vector<8x512xf32>
      %157 = arith.addf %128, %156 : vector<8x512xf32>
      %158 = vector.broadcast %154 : f32 to vector<8x512xf32>
      %159 = arith.mulf %158, %144 : vector<8x512xf32>
      %160 = arith.addf %157, %159 : vector<8x512xf32>
      %c42 = arith.constant 42 : index
      %161 = memref.load %arg1[%c42] : memref<165xf32, #tpu.memory_space<smem>>
      %c123 = arith.constant 123 : index
      %162 = memref.load %arg1[%c123] : memref<165xf32, #tpu.memory_space<smem>>
      %163 = vector.broadcast %161 : f32 to vector<8x512xf32>
      %164 = arith.mulf %163, %139 : vector<8x512xf32>
      %165 = arith.addf %136, %164 : vector<8x512xf32>
      %166 = vector.broadcast %162 : f32 to vector<8x512xf32>
      %167 = arith.mulf %166, %144 : vector<8x512xf32>
      %168 = arith.addf %165, %167 : vector<8x512xf32>
      %169 = arith.mulf %139, %144 : vector<8x512xf32>
      %cst_21 = arith.constant 2.000000e+00 : f32
      %170 = vector.broadcast %cst_21 : f32 to vector<8x512xf32>
      %171 = arith.mulf %170, %169 : vector<8x512xf32>
      %172 = arith.mulf %139, %139 : vector<8x512xf32>
      %cst_22 = arith.constant 2.000000e+00 : f32
      %173 = vector.broadcast %cst_22 : f32 to vector<8x512xf32>
      %174 = arith.mulf %173, %172 : vector<8x512xf32>
      %cst_23 = arith.constant 1.000000e+00 : f32
      %175 = vector.broadcast %cst_23 : f32 to vector<8x512xf32>
      %176 = arith.subf %175, %174 : vector<8x512xf32>
      %c45 = arith.constant 45 : index
      %177 = memref.load %arg1[%c45] : memref<165xf32, #tpu.memory_space<smem>>
      %c126 = arith.constant 126 : index
      %178 = memref.load %arg1[%c126] : memref<165xf32, #tpu.memory_space<smem>>
      %179 = vector.broadcast %177 : f32 to vector<8x512xf32>
      %180 = arith.mulf %179, %171 : vector<8x512xf32>
      %181 = arith.addf %152, %180 : vector<8x512xf32>
      %182 = vector.broadcast %178 : f32 to vector<8x512xf32>
      %183 = arith.mulf %182, %176 : vector<8x512xf32>
      %184 = arith.addf %181, %183 : vector<8x512xf32>
      %c48 = arith.constant 48 : index
      %185 = memref.load %arg1[%c48] : memref<165xf32, #tpu.memory_space<smem>>
      %c129 = arith.constant 129 : index
      %186 = memref.load %arg1[%c129] : memref<165xf32, #tpu.memory_space<smem>>
      %187 = vector.broadcast %185 : f32 to vector<8x512xf32>
      %188 = arith.mulf %187, %171 : vector<8x512xf32>
      %189 = arith.addf %160, %188 : vector<8x512xf32>
      %190 = vector.broadcast %186 : f32 to vector<8x512xf32>
      %191 = arith.mulf %190, %176 : vector<8x512xf32>
      %192 = arith.addf %189, %191 : vector<8x512xf32>
      %c51 = arith.constant 51 : index
      %193 = memref.load %arg1[%c51] : memref<165xf32, #tpu.memory_space<smem>>
      %c132 = arith.constant 132 : index
      %194 = memref.load %arg1[%c132] : memref<165xf32, #tpu.memory_space<smem>>
      %195 = vector.broadcast %193 : f32 to vector<8x512xf32>
      %196 = arith.mulf %195, %171 : vector<8x512xf32>
      %197 = arith.addf %168, %196 : vector<8x512xf32>
      %198 = vector.broadcast %194 : f32 to vector<8x512xf32>
      %199 = arith.mulf %198, %176 : vector<8x512xf32>
      %200 = arith.addf %197, %199 : vector<8x512xf32>
      %201 = arith.mulf %171, %176 : vector<8x512xf32>
      %cst_24 = arith.constant 2.000000e+00 : f32
      %202 = vector.broadcast %cst_24 : f32 to vector<8x512xf32>
      %203 = arith.mulf %202, %201 : vector<8x512xf32>
      %204 = arith.mulf %171, %171 : vector<8x512xf32>
      %cst_25 = arith.constant 2.000000e+00 : f32
      %205 = vector.broadcast %cst_25 : f32 to vector<8x512xf32>
      %206 = arith.mulf %205, %204 : vector<8x512xf32>
      %cst_26 = arith.constant 1.000000e+00 : f32
      %207 = vector.broadcast %cst_26 : f32 to vector<8x512xf32>
      %208 = arith.subf %207, %206 : vector<8x512xf32>
      %c54 = arith.constant 54 : index
      %209 = memref.load %arg1[%c54] : memref<165xf32, #tpu.memory_space<smem>>
      %c135 = arith.constant 135 : index
      %210 = memref.load %arg1[%c135] : memref<165xf32, #tpu.memory_space<smem>>
      %211 = vector.broadcast %209 : f32 to vector<8x512xf32>
      %212 = arith.mulf %211, %203 : vector<8x512xf32>
      %213 = arith.addf %184, %212 : vector<8x512xf32>
      %214 = vector.broadcast %210 : f32 to vector<8x512xf32>
      %215 = arith.mulf %214, %208 : vector<8x512xf32>
      %216 = arith.addf %213, %215 : vector<8x512xf32>
      %c57 = arith.constant 57 : index
      %217 = memref.load %arg1[%c57] : memref<165xf32, #tpu.memory_space<smem>>
      %c138 = arith.constant 138 : index
      %218 = memref.load %arg1[%c138] : memref<165xf32, #tpu.memory_space<smem>>
      %219 = vector.broadcast %217 : f32 to vector<8x512xf32>
      %220 = arith.mulf %219, %203 : vector<8x512xf32>
      %221 = arith.addf %192, %220 : vector<8x512xf32>
      %222 = vector.broadcast %218 : f32 to vector<8x512xf32>
      %223 = arith.mulf %222, %208 : vector<8x512xf32>
      %224 = arith.addf %221, %223 : vector<8x512xf32>
      %c60 = arith.constant 60 : index
      %225 = memref.load %arg1[%c60] : memref<165xf32, #tpu.memory_space<smem>>
      %c141 = arith.constant 141 : index
      %226 = memref.load %arg1[%c141] : memref<165xf32, #tpu.memory_space<smem>>
      %227 = vector.broadcast %225 : f32 to vector<8x512xf32>
      %228 = arith.mulf %227, %203 : vector<8x512xf32>
      %229 = arith.addf %200, %228 : vector<8x512xf32>
      %230 = vector.broadcast %226 : f32 to vector<8x512xf32>
      %231 = arith.mulf %230, %208 : vector<8x512xf32>
      %232 = arith.addf %229, %231 : vector<8x512xf32>
      %233 = arith.mulf %203, %208 : vector<8x512xf32>
      %cst_27 = arith.constant 2.000000e+00 : f32
      %234 = vector.broadcast %cst_27 : f32 to vector<8x512xf32>
      %235 = arith.mulf %234, %233 : vector<8x512xf32>
      %236 = arith.mulf %203, %203 : vector<8x512xf32>
      %cst_28 = arith.constant 2.000000e+00 : f32
      %237 = vector.broadcast %cst_28 : f32 to vector<8x512xf32>
      %238 = arith.mulf %237, %236 : vector<8x512xf32>
      %cst_29 = arith.constant 1.000000e+00 : f32
      %239 = vector.broadcast %cst_29 : f32 to vector<8x512xf32>
      %240 = arith.subf %239, %238 : vector<8x512xf32>
      %c63 = arith.constant 63 : index
      %241 = memref.load %arg1[%c63] : memref<165xf32, #tpu.memory_space<smem>>
      %c144 = arith.constant 144 : index
      %242 = memref.load %arg1[%c144] : memref<165xf32, #tpu.memory_space<smem>>
      %243 = vector.broadcast %241 : f32 to vector<8x512xf32>
      %244 = arith.mulf %243, %235 : vector<8x512xf32>
      %245 = arith.addf %216, %244 : vector<8x512xf32>
      %246 = vector.broadcast %242 : f32 to vector<8x512xf32>
      %247 = arith.mulf %246, %240 : vector<8x512xf32>
      %248 = arith.addf %245, %247 : vector<8x512xf32>
      %c66 = arith.constant 66 : index
      %249 = memref.load %arg1[%c66] : memref<165xf32, #tpu.memory_space<smem>>
      %c147 = arith.constant 147 : index
      %250 = memref.load %arg1[%c147] : memref<165xf32, #tpu.memory_space<smem>>
      %251 = vector.broadcast %249 : f32 to vector<8x512xf32>
      %252 = arith.mulf %251, %235 : vector<8x512xf32>
      %253 = arith.addf %224, %252 : vector<8x512xf32>
      %254 = vector.broadcast %250 : f32 to vector<8x512xf32>
      %255 = arith.mulf %254, %240 : vector<8x512xf32>
      %256 = arith.addf %253, %255 : vector<8x512xf32>
      %c69 = arith.constant 69 : index
      %257 = memref.load %arg1[%c69] : memref<165xf32, #tpu.memory_space<smem>>
      %c150 = arith.constant 150 : index
      %258 = memref.load %arg1[%c150] : memref<165xf32, #tpu.memory_space<smem>>
      %259 = vector.broadcast %257 : f32 to vector<8x512xf32>
      %260 = arith.mulf %259, %235 : vector<8x512xf32>
      %261 = arith.addf %232, %260 : vector<8x512xf32>
      %262 = vector.broadcast %258 : f32 to vector<8x512xf32>
      %263 = arith.mulf %262, %240 : vector<8x512xf32>
      %264 = arith.addf %261, %263 : vector<8x512xf32>
      %265 = arith.mulf %235, %240 : vector<8x512xf32>
      %cst_30 = arith.constant 2.000000e+00 : f32
      %266 = vector.broadcast %cst_30 : f32 to vector<8x512xf32>
      %267 = arith.mulf %266, %265 : vector<8x512xf32>
      %268 = arith.mulf %235, %235 : vector<8x512xf32>
      %cst_31 = arith.constant 2.000000e+00 : f32
      %269 = vector.broadcast %cst_31 : f32 to vector<8x512xf32>
      %270 = arith.mulf %269, %268 : vector<8x512xf32>
      %cst_32 = arith.constant 1.000000e+00 : f32
      %271 = vector.broadcast %cst_32 : f32 to vector<8x512xf32>
      %272 = arith.subf %271, %270 : vector<8x512xf32>
      %c72 = arith.constant 72 : index
      %273 = memref.load %arg1[%c72] : memref<165xf32, #tpu.memory_space<smem>>
      %c153 = arith.constant 153 : index
      %274 = memref.load %arg1[%c153] : memref<165xf32, #tpu.memory_space<smem>>
      %275 = vector.broadcast %273 : f32 to vector<8x512xf32>
      %276 = arith.mulf %275, %267 : vector<8x512xf32>
      %277 = arith.addf %248, %276 : vector<8x512xf32>
      %278 = vector.broadcast %274 : f32 to vector<8x512xf32>
      %279 = arith.mulf %278, %272 : vector<8x512xf32>
      %280 = arith.addf %277, %279 : vector<8x512xf32>
      %c75 = arith.constant 75 : index
      %281 = memref.load %arg1[%c75] : memref<165xf32, #tpu.memory_space<smem>>
      %c156 = arith.constant 156 : index
      %282 = memref.load %arg1[%c156] : memref<165xf32, #tpu.memory_space<smem>>
      %283 = vector.broadcast %281 : f32 to vector<8x512xf32>
      %284 = arith.mulf %283, %267 : vector<8x512xf32>
      %285 = arith.addf %256, %284 : vector<8x512xf32>
      %286 = vector.broadcast %282 : f32 to vector<8x512xf32>
      %287 = arith.mulf %286, %272 : vector<8x512xf32>
      %288 = arith.addf %285, %287 : vector<8x512xf32>
      %c78 = arith.constant 78 : index
      %289 = memref.load %arg1[%c78] : memref<165xf32, #tpu.memory_space<smem>>
      %c159 = arith.constant 159 : index
      %290 = memref.load %arg1[%c159] : memref<165xf32, #tpu.memory_space<smem>>
      %291 = vector.broadcast %289 : f32 to vector<8x512xf32>
      %292 = arith.mulf %291, %267 : vector<8x512xf32>
      %293 = arith.addf %264, %292 : vector<8x512xf32>
      %294 = vector.broadcast %290 : f32 to vector<8x512xf32>
      %295 = arith.mulf %294, %272 : vector<8x512xf32>
      %296 = arith.addf %293, %295 : vector<8x512xf32>
      %c1 = arith.constant 1 : index
      %297 = arith.index_cast %4 : i32 to index
      %c0_33 = arith.constant 0 : index
      %298 = vector.load %arg2[%c1, %297, %c0_33] : memref<3x16x512xf32, #tpu.memory_space<vmem>>, vector<1x8x512xf32>
      %299 = vector.shape_cast %298 : vector<1x8x512xf32> to vector<8x512xf32>
      %cst_34 = arith.constant 3.14159274 : f32
      %300 = vector.broadcast %cst_34 : f32 to vector<8x512xf32>
      %301 = arith.mulf %299, %300 : vector<8x512xf32>
      %302 = math.sin %301 : vector<8x512xf32>
      %cst_35 = arith.constant 3.14159274 : f32
      %303 = vector.broadcast %cst_35 : f32 to vector<8x512xf32>
      %304 = arith.mulf %299, %303 : vector<8x512xf32>
      %305 = math.cos %304 : vector<8x512xf32>
      %c1_36 = arith.constant 1 : index
      %306 = memref.load %arg1[%c1_36] : memref<165xf32, #tpu.memory_space<smem>>
      %c82 = arith.constant 82 : index
      %307 = memref.load %arg1[%c82] : memref<165xf32, #tpu.memory_space<smem>>
      %308 = vector.broadcast %306 : f32 to vector<8x512xf32>
      %309 = arith.mulf %308, %302 : vector<8x512xf32>
      %310 = arith.addf %280, %309 : vector<8x512xf32>
      %311 = vector.broadcast %307 : f32 to vector<8x512xf32>
      %312 = arith.mulf %311, %305 : vector<8x512xf32>
      %313 = arith.addf %310, %312 : vector<8x512xf32>
      %c4 = arith.constant 4 : index
      %314 = memref.load %arg1[%c4] : memref<165xf32, #tpu.memory_space<smem>>
      %c85 = arith.constant 85 : index
      %315 = memref.load %arg1[%c85] : memref<165xf32, #tpu.memory_space<smem>>
      %316 = vector.broadcast %314 : f32 to vector<8x512xf32>
      %317 = arith.mulf %316, %302 : vector<8x512xf32>
      %318 = arith.addf %288, %317 : vector<8x512xf32>
      %319 = vector.broadcast %315 : f32 to vector<8x512xf32>
      %320 = arith.mulf %319, %305 : vector<8x512xf32>
      %321 = arith.addf %318, %320 : vector<8x512xf32>
      %c7 = arith.constant 7 : index
      %322 = memref.load %arg1[%c7] : memref<165xf32, #tpu.memory_space<smem>>
      %c88 = arith.constant 88 : index
      %323 = memref.load %arg1[%c88] : memref<165xf32, #tpu.memory_space<smem>>
      %324 = vector.broadcast %322 : f32 to vector<8x512xf32>
      %325 = arith.mulf %324, %302 : vector<8x512xf32>
      %326 = arith.addf %296, %325 : vector<8x512xf32>
      %327 = vector.broadcast %323 : f32 to vector<8x512xf32>
      %328 = arith.mulf %327, %305 : vector<8x512xf32>
      %329 = arith.addf %326, %328 : vector<8x512xf32>
      %330 = arith.mulf %302, %305 : vector<8x512xf32>
      %cst_37 = arith.constant 2.000000e+00 : f32
      %331 = vector.broadcast %cst_37 : f32 to vector<8x512xf32>
      %332 = arith.mulf %331, %330 : vector<8x512xf32>
      %333 = arith.mulf %302, %302 : vector<8x512xf32>
      %cst_38 = arith.constant 2.000000e+00 : f32
      %334 = vector.broadcast %cst_38 : f32 to vector<8x512xf32>
      %335 = arith.mulf %334, %333 : vector<8x512xf32>
      %cst_39 = arith.constant 1.000000e+00 : f32
      %336 = vector.broadcast %cst_39 : f32 to vector<8x512xf32>
      %337 = arith.subf %336, %335 : vector<8x512xf32>
      %c10 = arith.constant 10 : index
      %338 = memref.load %arg1[%c10] : memref<165xf32, #tpu.memory_space<smem>>
      %c91 = arith.constant 91 : index
      %339 = memref.load %arg1[%c91] : memref<165xf32, #tpu.memory_space<smem>>
      %340 = vector.broadcast %338 : f32 to vector<8x512xf32>
      %341 = arith.mulf %340, %332 : vector<8x512xf32>
      %342 = arith.addf %313, %341 : vector<8x512xf32>
      %343 = vector.broadcast %339 : f32 to vector<8x512xf32>
      %344 = arith.mulf %343, %337 : vector<8x512xf32>
      %345 = arith.addf %342, %344 : vector<8x512xf32>
      %c13 = arith.constant 13 : index
      %346 = memref.load %arg1[%c13] : memref<165xf32, #tpu.memory_space<smem>>
      %c94 = arith.constant 94 : index
      %347 = memref.load %arg1[%c94] : memref<165xf32, #tpu.memory_space<smem>>
      %348 = vector.broadcast %346 : f32 to vector<8x512xf32>
      %349 = arith.mulf %348, %332 : vector<8x512xf32>
      %350 = arith.addf %321, %349 : vector<8x512xf32>
      %351 = vector.broadcast %347 : f32 to vector<8x512xf32>
      %352 = arith.mulf %351, %337 : vector<8x512xf32>
      %353 = arith.addf %350, %352 : vector<8x512xf32>
      %c16 = arith.constant 16 : index
      %354 = memref.load %arg1[%c16] : memref<165xf32, #tpu.memory_space<smem>>
      %c97 = arith.constant 97 : index
      %355 = memref.load %arg1[%c97] : memref<165xf32, #tpu.memory_space<smem>>
      %356 = vector.broadcast %354 : f32 to vector<8x512xf32>
      %357 = arith.mulf %356, %332 : vector<8x512xf32>
      %358 = arith.addf %329, %357 : vector<8x512xf32>
      %359 = vector.broadcast %355 : f32 to vector<8x512xf32>
      %360 = arith.mulf %359, %337 : vector<8x512xf32>
      %361 = arith.addf %358, %360 : vector<8x512xf32>
      %362 = arith.mulf %332, %337 : vector<8x512xf32>
      %cst_40 = arith.constant 2.000000e+00 : f32
      %363 = vector.broadcast %cst_40 : f32 to vector<8x512xf32>
      %364 = arith.mulf %363, %362 : vector<8x512xf32>
      %365 = arith.mulf %332, %332 : vector<8x512xf32>
      %cst_41 = arith.constant 2.000000e+00 : f32
      %366 = vector.broadcast %cst_41 : f32 to vector<8x512xf32>
      %367 = arith.mulf %366, %365 : vector<8x512xf32>
      %cst_42 = arith.constant 1.000000e+00 : f32
      %368 = vector.broadcast %cst_42 : f32 to vector<8x512xf32>
      %369 = arith.subf %368, %367 : vector<8x512xf32>
      %c19 = arith.constant 19 : index
      %370 = memref.load %arg1[%c19] : memref<165xf32, #tpu.memory_space<smem>>
      %c100 = arith.constant 100 : index
      %371 = memref.load %arg1[%c100] : memref<165xf32, #tpu.memory_space<smem>>
      %372 = vector.broadcast %370 : f32 to vector<8x512xf32>
      %373 = arith.mulf %372, %364 : vector<8x512xf32>
      %374 = arith.addf %345, %373 : vector<8x512xf32>
      %375 = vector.broadcast %371 : f32 to vector<8x512xf32>
      %376 = arith.mulf %375, %369 : vector<8x512xf32>
      %377 = arith.addf %374, %376 : vector<8x512xf32>
      %c22 = arith.constant 22 : index
      %378 = memref.load %arg1[%c22] : memref<165xf32, #tpu.memory_space<smem>>
      %c103 = arith.constant 103 : index
      %379 = memref.load %arg1[%c103] : memref<165xf32, #tpu.memory_space<smem>>
      %380 = vector.broadcast %378 : f32 to vector<8x512xf32>
      %381 = arith.mulf %380, %364 : vector<8x512xf32>
      %382 = arith.addf %353, %381 : vector<8x512xf32>
      %383 = vector.broadcast %379 : f32 to vector<8x512xf32>
      %384 = arith.mulf %383, %369 : vector<8x512xf32>
      %385 = arith.addf %382, %384 : vector<8x512xf32>
      %c25 = arith.constant 25 : index
      %386 = memref.load %arg1[%c25] : memref<165xf32, #tpu.memory_space<smem>>
      %c106 = arith.constant 106 : index
      %387 = memref.load %arg1[%c106] : memref<165xf32, #tpu.memory_space<smem>>
      %388 = vector.broadcast %386 : f32 to vector<8x512xf32>
      %389 = arith.mulf %388, %364 : vector<8x512xf32>
      %390 = arith.addf %361, %389 : vector<8x512xf32>
      %391 = vector.broadcast %387 : f32 to vector<8x512xf32>
      %392 = arith.mulf %391, %369 : vector<8x512xf32>
      %393 = arith.addf %390, %392 : vector<8x512xf32>
      %394 = arith.mulf %364, %369 : vector<8x512xf32>
      %cst_43 = arith.constant 2.000000e+00 : f32
      %395 = vector.broadcast %cst_43 : f32 to vector<8x512xf32>
      %396 = arith.mulf %395, %394 : vector<8x512xf32>
      %397 = arith.mulf %364, %364 : vector<8x512xf32>
      %cst_44 = arith.constant 2.000000e+00 : f32
      %398 = vector.broadcast %cst_44 : f32 to vector<8x512xf32>
      %399 = arith.mulf %398, %397 : vector<8x512xf32>
      %cst_45 = arith.constant 1.000000e+00 : f32
      %400 = vector.broadcast %cst_45 : f32 to vector<8x512xf32>
      %401 = arith.subf %400, %399 : vector<8x512xf32>
      %c28 = arith.constant 28 : index
      %402 = memref.load %arg1[%c28] : memref<165xf32, #tpu.memory_space<smem>>
      %c109 = arith.constant 109 : index
      %403 = memref.load %arg1[%c109] : memref<165xf32, #tpu.memory_space<smem>>
      %404 = vector.broadcast %402 : f32 to vector<8x512xf32>
      %405 = arith.mulf %404, %396 : vector<8x512xf32>
      %406 = arith.addf %377, %405 : vector<8x512xf32>
      %407 = vector.broadcast %403 : f32 to vector<8x512xf32>
      %408 = arith.mulf %407, %401 : vector<8x512xf32>
      %409 = arith.addf %406, %408 : vector<8x512xf32>
      %c31 = arith.constant 31 : index
      %410 = memref.load %arg1[%c31] : memref<165xf32, #tpu.memory_space<smem>>
      %c112 = arith.constant 112 : index
      %411 = memref.load %arg1[%c112] : memref<165xf32, #tpu.memory_space<smem>>
      %412 = vector.broadcast %410 : f32 to vector<8x512xf32>
      %413 = arith.mulf %412, %396 : vector<8x512xf32>
      %414 = arith.addf %385, %413 : vector<8x512xf32>
      %415 = vector.broadcast %411 : f32 to vector<8x512xf32>
      %416 = arith.mulf %415, %401 : vector<8x512xf32>
      %417 = arith.addf %414, %416 : vector<8x512xf32>
      %c34 = arith.constant 34 : index
      %418 = memref.load %arg1[%c34] : memref<165xf32, #tpu.memory_space<smem>>
      %c115 = arith.constant 115 : index
      %419 = memref.load %arg1[%c115] : memref<165xf32, #tpu.memory_space<smem>>
      %420 = vector.broadcast %418 : f32 to vector<8x512xf32>
      %421 = arith.mulf %420, %396 : vector<8x512xf32>
      %422 = arith.addf %393, %421 : vector<8x512xf32>
      %423 = vector.broadcast %419 : f32 to vector<8x512xf32>
      %424 = arith.mulf %423, %401 : vector<8x512xf32>
      %425 = arith.addf %422, %424 : vector<8x512xf32>
      %426 = arith.mulf %396, %401 : vector<8x512xf32>
      %cst_46 = arith.constant 2.000000e+00 : f32
      %427 = vector.broadcast %cst_46 : f32 to vector<8x512xf32>
      %428 = arith.mulf %427, %426 : vector<8x512xf32>
      %429 = arith.mulf %396, %396 : vector<8x512xf32>
      %cst_47 = arith.constant 2.000000e+00 : f32
      %430 = vector.broadcast %cst_47 : f32 to vector<8x512xf32>
      %431 = arith.mulf %430, %429 : vector<8x512xf32>
      %cst_48 = arith.constant 1.000000e+00 : f32
      %432 = vector.broadcast %cst_48 : f32 to vector<8x512xf32>
      %433 = arith.subf %432, %431 : vector<8x512xf32>
      %c37 = arith.constant 37 : index
      %434 = memref.load %arg1[%c37] : memref<165xf32, #tpu.memory_space<smem>>
      %c118 = arith.constant 118 : index
      %435 = memref.load %arg1[%c118] : memref<165xf32, #tpu.memory_space<smem>>
      %436 = vector.broadcast %434 : f32 to vector<8x512xf32>
      %437 = arith.mulf %436, %428 : vector<8x512xf32>
      %438 = arith.addf %409, %437 : vector<8x512xf32>
      %439 = vector.broadcast %435 : f32 to vector<8x512xf32>
      %440 = arith.mulf %439, %433 : vector<8x512xf32>
      %441 = arith.addf %438, %440 : vector<8x512xf32>
      %c40 = arith.constant 40 : index
      %442 = memref.load %arg1[%c40] : memref<165xf32, #tpu.memory_space<smem>>
      %c121 = arith.constant 121 : index
      %443 = memref.load %arg1[%c121] : memref<165xf32, #tpu.memory_space<smem>>
      %444 = vector.broadcast %442 : f32 to vector<8x512xf32>
      %445 = arith.mulf %444, %428 : vector<8x512xf32>
      %446 = arith.addf %417, %445 : vector<8x512xf32>
      %447 = vector.broadcast %443 : f32 to vector<8x512xf32>
      %448 = arith.mulf %447, %433 : vector<8x512xf32>
      %449 = arith.addf %446, %448 : vector<8x512xf32>
      %c43 = arith.constant 43 : index
      %450 = memref.load %arg1[%c43] : memref<165xf32, #tpu.memory_space<smem>>
      %c124 = arith.constant 124 : index
      %451 = memref.load %arg1[%c124] : memref<165xf32, #tpu.memory_space<smem>>
      %452 = vector.broadcast %450 : f32 to vector<8x512xf32>
      %453 = arith.mulf %452, %428 : vector<8x512xf32>
      %454 = arith.addf %425, %453 : vector<8x512xf32>
      %455 = vector.broadcast %451 : f32 to vector<8x512xf32>
      %456 = arith.mulf %455, %433 : vector<8x512xf32>
      %457 = arith.addf %454, %456 : vector<8x512xf32>
      %458 = arith.mulf %428, %433 : vector<8x512xf32>
      %cst_49 = arith.constant 2.000000e+00 : f32
      %459 = vector.broadcast %cst_49 : f32 to vector<8x512xf32>
      %460 = arith.mulf %459, %458 : vector<8x512xf32>
      %461 = arith.mulf %428, %428 : vector<8x512xf32>
      %cst_50 = arith.constant 2.000000e+00 : f32
      %462 = vector.broadcast %cst_50 : f32 to vector<8x512xf32>
      %463 = arith.mulf %462, %461 : vector<8x512xf32>
      %cst_51 = arith.constant 1.000000e+00 : f32
      %464 = vector.broadcast %cst_51 : f32 to vector<8x512xf32>
      %465 = arith.subf %464, %463 : vector<8x512xf32>
      %c46 = arith.constant 46 : index
      %466 = memref.load %arg1[%c46] : memref<165xf32, #tpu.memory_space<smem>>
      %c127 = arith.constant 127 : index
      %467 = memref.load %arg1[%c127] : memref<165xf32, #tpu.memory_space<smem>>
      %468 = vector.broadcast %466 : f32 to vector<8x512xf32>
      %469 = arith.mulf %468, %460 : vector<8x512xf32>
      %470 = arith.addf %441, %469 : vector<8x512xf32>
      %471 = vector.broadcast %467 : f32 to vector<8x512xf32>
      %472 = arith.mulf %471, %465 : vector<8x512xf32>
      %473 = arith.addf %470, %472 : vector<8x512xf32>
      %c49 = arith.constant 49 : index
      %474 = memref.load %arg1[%c49] : memref<165xf32, #tpu.memory_space<smem>>
      %c130 = arith.constant 130 : index
      %475 = memref.load %arg1[%c130] : memref<165xf32, #tpu.memory_space<smem>>
      %476 = vector.broadcast %474 : f32 to vector<8x512xf32>
      %477 = arith.mulf %476, %460 : vector<8x512xf32>
      %478 = arith.addf %449, %477 : vector<8x512xf32>
      %479 = vector.broadcast %475 : f32 to vector<8x512xf32>
      %480 = arith.mulf %479, %465 : vector<8x512xf32>
      %481 = arith.addf %478, %480 : vector<8x512xf32>
      %c52 = arith.constant 52 : index
      %482 = memref.load %arg1[%c52] : memref<165xf32, #tpu.memory_space<smem>>
      %c133 = arith.constant 133 : index
      %483 = memref.load %arg1[%c133] : memref<165xf32, #tpu.memory_space<smem>>
      %484 = vector.broadcast %482 : f32 to vector<8x512xf32>
      %485 = arith.mulf %484, %460 : vector<8x512xf32>
      %486 = arith.addf %457, %485 : vector<8x512xf32>
      %487 = vector.broadcast %483 : f32 to vector<8x512xf32>
      %488 = arith.mulf %487, %465 : vector<8x512xf32>
      %489 = arith.addf %486, %488 : vector<8x512xf32>
      %490 = arith.mulf %460, %465 : vector<8x512xf32>
      %cst_52 = arith.constant 2.000000e+00 : f32
      %491 = vector.broadcast %cst_52 : f32 to vector<8x512xf32>
      %492 = arith.mulf %491, %490 : vector<8x512xf32>
      %493 = arith.mulf %460, %460 : vector<8x512xf32>
      %cst_53 = arith.constant 2.000000e+00 : f32
      %494 = vector.broadcast %cst_53 : f32 to vector<8x512xf32>
      %495 = arith.mulf %494, %493 : vector<8x512xf32>
      %cst_54 = arith.constant 1.000000e+00 : f32
      %496 = vector.broadcast %cst_54 : f32 to vector<8x512xf32>
      %497 = arith.subf %496, %495 : vector<8x512xf32>
      %c55 = arith.constant 55 : index
      %498 = memref.load %arg1[%c55] : memref<165xf32, #tpu.memory_space<smem>>
      %c136 = arith.constant 136 : index
      %499 = memref.load %arg1[%c136] : memref<165xf32, #tpu.memory_space<smem>>
      %500 = vector.broadcast %498 : f32 to vector<8x512xf32>
      %501 = arith.mulf %500, %492 : vector<8x512xf32>
      %502 = arith.addf %473, %501 : vector<8x512xf32>
      %503 = vector.broadcast %499 : f32 to vector<8x512xf32>
      %504 = arith.mulf %503, %497 : vector<8x512xf32>
      %505 = arith.addf %502, %504 : vector<8x512xf32>
      %c58 = arith.constant 58 : index
      %506 = memref.load %arg1[%c58] : memref<165xf32, #tpu.memory_space<smem>>
      %c139 = arith.constant 139 : index
      %507 = memref.load %arg1[%c139] : memref<165xf32, #tpu.memory_space<smem>>
      %508 = vector.broadcast %506 : f32 to vector<8x512xf32>
      %509 = arith.mulf %508, %492 : vector<8x512xf32>
      %510 = arith.addf %481, %509 : vector<8x512xf32>
      %511 = vector.broadcast %507 : f32 to vector<8x512xf32>
      %512 = arith.mulf %511, %497 : vector<8x512xf32>
      %513 = arith.addf %510, %512 : vector<8x512xf32>
      %c61 = arith.constant 61 : index
      %514 = memref.load %arg1[%c61] : memref<165xf32, #tpu.memory_space<smem>>
      %c142 = arith.constant 142 : index
      %515 = memref.load %arg1[%c142] : memref<165xf32, #tpu.memory_space<smem>>
      %516 = vector.broadcast %514 : f32 to vector<8x512xf32>
      %517 = arith.mulf %516, %492 : vector<8x512xf32>
      %518 = arith.addf %489, %517 : vector<8x512xf32>
      %519 = vector.broadcast %515 : f32 to vector<8x512xf32>
      %520 = arith.mulf %519, %497 : vector<8x512xf32>
      %521 = arith.addf %518, %520 : vector<8x512xf32>
      %522 = arith.mulf %492, %497 : vector<8x512xf32>
      %cst_55 = arith.constant 2.000000e+00 : f32
      %523 = vector.broadcast %cst_55 : f32 to vector<8x512xf32>
      %524 = arith.mulf %523, %522 : vector<8x512xf32>
      %525 = arith.mulf %492, %492 : vector<8x512xf32>
      %cst_56 = arith.constant 2.000000e+00 : f32
      %526 = vector.broadcast %cst_56 : f32 to vector<8x512xf32>
      %527 = arith.mulf %526, %525 : vector<8x512xf32>
      %cst_57 = arith.constant 1.000000e+00 : f32
      %528 = vector.broadcast %cst_57 : f32 to vector<8x512xf32>
      %529 = arith.subf %528, %527 : vector<8x512xf32>
      %c64 = arith.constant 64 : index
      %530 = memref.load %arg1[%c64] : memref<165xf32, #tpu.memory_space<smem>>
      %c145 = arith.constant 145 : index
      %531 = memref.load %arg1[%c145] : memref<165xf32, #tpu.memory_space<smem>>
      %532 = vector.broadcast %530 : f32 to vector<8x512xf32>
      %533 = arith.mulf %532, %524 : vector<8x512xf32>
      %534 = arith.addf %505, %533 : vector<8x512xf32>
      %535 = vector.broadcast %531 : f32 to vector<8x512xf32>
      %536 = arith.mulf %535, %529 : vector<8x512xf32>
      %537 = arith.addf %534, %536 : vector<8x512xf32>
      %c67 = arith.constant 67 : index
      %538 = memref.load %arg1[%c67] : memref<165xf32, #tpu.memory_space<smem>>
      %c148 = arith.constant 148 : index
      %539 = memref.load %arg1[%c148] : memref<165xf32, #tpu.memory_space<smem>>
      %540 = vector.broadcast %538 : f32 to vector<8x512xf32>
      %541 = arith.mulf %540, %524 : vector<8x512xf32>
      %542 = arith.addf %513, %541 : vector<8x512xf32>
      %543 = vector.broadcast %539 : f32 to vector<8x512xf32>
      %544 = arith.mulf %543, %529 : vector<8x512xf32>
      %545 = arith.addf %542, %544 : vector<8x512xf32>
      %c70 = arith.constant 70 : index
      %546 = memref.load %arg1[%c70] : memref<165xf32, #tpu.memory_space<smem>>
      %c151 = arith.constant 151 : index
      %547 = memref.load %arg1[%c151] : memref<165xf32, #tpu.memory_space<smem>>
      %548 = vector.broadcast %546 : f32 to vector<8x512xf32>
      %549 = arith.mulf %548, %524 : vector<8x512xf32>
      %550 = arith.addf %521, %549 : vector<8x512xf32>
      %551 = vector.broadcast %547 : f32 to vector<8x512xf32>
      %552 = arith.mulf %551, %529 : vector<8x512xf32>
      %553 = arith.addf %550, %552 : vector<8x512xf32>
      %554 = arith.mulf %524, %529 : vector<8x512xf32>
      %cst_58 = arith.constant 2.000000e+00 : f32
      %555 = vector.broadcast %cst_58 : f32 to vector<8x512xf32>
      %556 = arith.mulf %555, %554 : vector<8x512xf32>
      %557 = arith.mulf %524, %524 : vector<8x512xf32>
      %cst_59 = arith.constant 2.000000e+00 : f32
      %558 = vector.broadcast %cst_59 : f32 to vector<8x512xf32>
      %559 = arith.mulf %558, %557 : vector<8x512xf32>
      %cst_60 = arith.constant 1.000000e+00 : f32
      %560 = vector.broadcast %cst_60 : f32 to vector<8x512xf32>
      %561 = arith.subf %560, %559 : vector<8x512xf32>
      %c73 = arith.constant 73 : index
      %562 = memref.load %arg1[%c73] : memref<165xf32, #tpu.memory_space<smem>>
      %c154 = arith.constant 154 : index
      %563 = memref.load %arg1[%c154] : memref<165xf32, #tpu.memory_space<smem>>
      %564 = vector.broadcast %562 : f32 to vector<8x512xf32>
      %565 = arith.mulf %564, %556 : vector<8x512xf32>
      %566 = arith.addf %537, %565 : vector<8x512xf32>
      %567 = vector.broadcast %563 : f32 to vector<8x512xf32>
      %568 = arith.mulf %567, %561 : vector<8x512xf32>
      %569 = arith.addf %566, %568 : vector<8x512xf32>
      %c76 = arith.constant 76 : index
      %570 = memref.load %arg1[%c76] : memref<165xf32, #tpu.memory_space<smem>>
      %c157 = arith.constant 157 : index
      %571 = memref.load %arg1[%c157] : memref<165xf32, #tpu.memory_space<smem>>
      %572 = vector.broadcast %570 : f32 to vector<8x512xf32>
      %573 = arith.mulf %572, %556 : vector<8x512xf32>
      %574 = arith.addf %545, %573 : vector<8x512xf32>
      %575 = vector.broadcast %571 : f32 to vector<8x512xf32>
      %576 = arith.mulf %575, %561 : vector<8x512xf32>
      %577 = arith.addf %574, %576 : vector<8x512xf32>
      %c79 = arith.constant 79 : index
      %578 = memref.load %arg1[%c79] : memref<165xf32, #tpu.memory_space<smem>>
      %c160 = arith.constant 160 : index
      %579 = memref.load %arg1[%c160] : memref<165xf32, #tpu.memory_space<smem>>
      %580 = vector.broadcast %578 : f32 to vector<8x512xf32>
      %581 = arith.mulf %580, %556 : vector<8x512xf32>
      %582 = arith.addf %553, %581 : vector<8x512xf32>
      %583 = vector.broadcast %579 : f32 to vector<8x512xf32>
      %584 = arith.mulf %583, %561 : vector<8x512xf32>
      %585 = arith.addf %582, %584 : vector<8x512xf32>
      %c2 = arith.constant 2 : index
      %586 = arith.index_cast %4 : i32 to index
      %c0_61 = arith.constant 0 : index
      %587 = vector.load %arg2[%c2, %586, %c0_61] : memref<3x16x512xf32, #tpu.memory_space<vmem>>, vector<1x8x512xf32>
      %588 = vector.shape_cast %587 : vector<1x8x512xf32> to vector<8x512xf32>
      %cst_62 = arith.constant 3.14159274 : f32
      %589 = vector.broadcast %cst_62 : f32 to vector<8x512xf32>
      %590 = arith.mulf %588, %589 : vector<8x512xf32>
      %591 = math.sin %590 : vector<8x512xf32>
      %cst_63 = arith.constant 3.14159274 : f32
      %592 = vector.broadcast %cst_63 : f32 to vector<8x512xf32>
      %593 = arith.mulf %588, %592 : vector<8x512xf32>
      %594 = math.cos %593 : vector<8x512xf32>
      %c2_64 = arith.constant 2 : index
      %595 = memref.load %arg1[%c2_64] : memref<165xf32, #tpu.memory_space<smem>>
      %c83 = arith.constant 83 : index
      %596 = memref.load %arg1[%c83] : memref<165xf32, #tpu.memory_space<smem>>
      %597 = vector.broadcast %595 : f32 to vector<8x512xf32>
      %598 = arith.mulf %597, %591 : vector<8x512xf32>
      %599 = arith.addf %569, %598 : vector<8x512xf32>
      %600 = vector.broadcast %596 : f32 to vector<8x512xf32>
      %601 = arith.mulf %600, %594 : vector<8x512xf32>
      %602 = arith.addf %599, %601 : vector<8x512xf32>
      %c5 = arith.constant 5 : index
      %603 = memref.load %arg1[%c5] : memref<165xf32, #tpu.memory_space<smem>>
      %c86 = arith.constant 86 : index
      %604 = memref.load %arg1[%c86] : memref<165xf32, #tpu.memory_space<smem>>
      %605 = vector.broadcast %603 : f32 to vector<8x512xf32>
      %606 = arith.mulf %605, %591 : vector<8x512xf32>
      %607 = arith.addf %577, %606 : vector<8x512xf32>
      %608 = vector.broadcast %604 : f32 to vector<8x512xf32>
      %609 = arith.mulf %608, %594 : vector<8x512xf32>
      %610 = arith.addf %607, %609 : vector<8x512xf32>
      %c8 = arith.constant 8 : index
      %611 = memref.load %arg1[%c8] : memref<165xf32, #tpu.memory_space<smem>>
      %c89 = arith.constant 89 : index
      %612 = memref.load %arg1[%c89] : memref<165xf32, #tpu.memory_space<smem>>
      %613 = vector.broadcast %611 : f32 to vector<8x512xf32>
      %614 = arith.mulf %613, %591 : vector<8x512xf32>
      %615 = arith.addf %585, %614 : vector<8x512xf32>
      %616 = vector.broadcast %612 : f32 to vector<8x512xf32>
      %617 = arith.mulf %616, %594 : vector<8x512xf32>
      %618 = arith.addf %615, %617 : vector<8x512xf32>
      %619 = arith.mulf %591, %594 : vector<8x512xf32>
      %cst_65 = arith.constant 2.000000e+00 : f32
      %620 = vector.broadcast %cst_65 : f32 to vector<8x512xf32>
      %621 = arith.mulf %620, %619 : vector<8x512xf32>
      %622 = arith.mulf %591, %591 : vector<8x512xf32>
      %cst_66 = arith.constant 2.000000e+00 : f32
      %623 = vector.broadcast %cst_66 : f32 to vector<8x512xf32>
      %624 = arith.mulf %623, %622 : vector<8x512xf32>
      %cst_67 = arith.constant 1.000000e+00 : f32
      %625 = vector.broadcast %cst_67 : f32 to vector<8x512xf32>
      %626 = arith.subf %625, %624 : vector<8x512xf32>
      %c11 = arith.constant 11 : index
      %627 = memref.load %arg1[%c11] : memref<165xf32, #tpu.memory_space<smem>>
      %c92 = arith.constant 92 : index
      %628 = memref.load %arg1[%c92] : memref<165xf32, #tpu.memory_space<smem>>
      %629 = vector.broadcast %627 : f32 to vector<8x512xf32>
      %630 = arith.mulf %629, %621 : vector<8x512xf32>
      %631 = arith.addf %602, %630 : vector<8x512xf32>
      %632 = vector.broadcast %628 : f32 to vector<8x512xf32>
      %633 = arith.mulf %632, %626 : vector<8x512xf32>
      %634 = arith.addf %631, %633 : vector<8x512xf32>
      %c14 = arith.constant 14 : index
      %635 = memref.load %arg1[%c14] : memref<165xf32, #tpu.memory_space<smem>>
      %c95 = arith.constant 95 : index
      %636 = memref.load %arg1[%c95] : memref<165xf32, #tpu.memory_space<smem>>
      %637 = vector.broadcast %635 : f32 to vector<8x512xf32>
      %638 = arith.mulf %637, %621 : vector<8x512xf32>
      %639 = arith.addf %610, %638 : vector<8x512xf32>
      %640 = vector.broadcast %636 : f32 to vector<8x512xf32>
      %641 = arith.mulf %640, %626 : vector<8x512xf32>
      %642 = arith.addf %639, %641 : vector<8x512xf32>
      %c17 = arith.constant 17 : index
      %643 = memref.load %arg1[%c17] : memref<165xf32, #tpu.memory_space<smem>>
      %c98 = arith.constant 98 : index
      %644 = memref.load %arg1[%c98] : memref<165xf32, #tpu.memory_space<smem>>
      %645 = vector.broadcast %643 : f32 to vector<8x512xf32>
      %646 = arith.mulf %645, %621 : vector<8x512xf32>
      %647 = arith.addf %618, %646 : vector<8x512xf32>
      %648 = vector.broadcast %644 : f32 to vector<8x512xf32>
      %649 = arith.mulf %648, %626 : vector<8x512xf32>
      %650 = arith.addf %647, %649 : vector<8x512xf32>
      %651 = arith.mulf %621, %626 : vector<8x512xf32>
      %cst_68 = arith.constant 2.000000e+00 : f32
      %652 = vector.broadcast %cst_68 : f32 to vector<8x512xf32>
      %653 = arith.mulf %652, %651 : vector<8x512xf32>
      %654 = arith.mulf %621, %621 : vector<8x512xf32>
      %cst_69 = arith.constant 2.000000e+00 : f32
      %655 = vector.broadcast %cst_69 : f32 to vector<8x512xf32>
      %656 = arith.mulf %655, %654 : vector<8x512xf32>
      %cst_70 = arith.constant 1.000000e+00 : f32
      %657 = vector.broadcast %cst_70 : f32 to vector<8x512xf32>
      %658 = arith.subf %657, %656 : vector<8x512xf32>
      %c20 = arith.constant 20 : index
      %659 = memref.load %arg1[%c20] : memref<165xf32, #tpu.memory_space<smem>>
      %c101 = arith.constant 101 : index
      %660 = memref.load %arg1[%c101] : memref<165xf32, #tpu.memory_space<smem>>
      %661 = vector.broadcast %659 : f32 to vector<8x512xf32>
      %662 = arith.mulf %661, %653 : vector<8x512xf32>
      %663 = arith.addf %634, %662 : vector<8x512xf32>
      %664 = vector.broadcast %660 : f32 to vector<8x512xf32>
      %665 = arith.mulf %664, %658 : vector<8x512xf32>
      %666 = arith.addf %663, %665 : vector<8x512xf32>
      %c23 = arith.constant 23 : index
      %667 = memref.load %arg1[%c23] : memref<165xf32, #tpu.memory_space<smem>>
      %c104 = arith.constant 104 : index
      %668 = memref.load %arg1[%c104] : memref<165xf32, #tpu.memory_space<smem>>
      %669 = vector.broadcast %667 : f32 to vector<8x512xf32>
      %670 = arith.mulf %669, %653 : vector<8x512xf32>
      %671 = arith.addf %642, %670 : vector<8x512xf32>
      %672 = vector.broadcast %668 : f32 to vector<8x512xf32>
      %673 = arith.mulf %672, %658 : vector<8x512xf32>
      %674 = arith.addf %671, %673 : vector<8x512xf32>
      %c26 = arith.constant 26 : index
      %675 = memref.load %arg1[%c26] : memref<165xf32, #tpu.memory_space<smem>>
      %c107 = arith.constant 107 : index
      %676 = memref.load %arg1[%c107] : memref<165xf32, #tpu.memory_space<smem>>
      %677 = vector.broadcast %675 : f32 to vector<8x512xf32>
      %678 = arith.mulf %677, %653 : vector<8x512xf32>
      %679 = arith.addf %650, %678 : vector<8x512xf32>
      %680 = vector.broadcast %676 : f32 to vector<8x512xf32>
      %681 = arith.mulf %680, %658 : vector<8x512xf32>
      %682 = arith.addf %679, %681 : vector<8x512xf32>
      %683 = arith.mulf %653, %658 : vector<8x512xf32>
      %cst_71 = arith.constant 2.000000e+00 : f32
      %684 = vector.broadcast %cst_71 : f32 to vector<8x512xf32>
      %685 = arith.mulf %684, %683 : vector<8x512xf32>
      %686 = arith.mulf %653, %653 : vector<8x512xf32>
      %cst_72 = arith.constant 2.000000e+00 : f32
      %687 = vector.broadcast %cst_72 : f32 to vector<8x512xf32>
      %688 = arith.mulf %687, %686 : vector<8x512xf32>
      %cst_73 = arith.constant 1.000000e+00 : f32
      %689 = vector.broadcast %cst_73 : f32 to vector<8x512xf32>
      %690 = arith.subf %689, %688 : vector<8x512xf32>
      %c29 = arith.constant 29 : index
      %691 = memref.load %arg1[%c29] : memref<165xf32, #tpu.memory_space<smem>>
      %c110 = arith.constant 110 : index
      %692 = memref.load %arg1[%c110] : memref<165xf32, #tpu.memory_space<smem>>
      %693 = vector.broadcast %691 : f32 to vector<8x512xf32>
      %694 = arith.mulf %693, %685 : vector<8x512xf32>
      %695 = arith.addf %666, %694 : vector<8x512xf32>
      %696 = vector.broadcast %692 : f32 to vector<8x512xf32>
      %697 = arith.mulf %696, %690 : vector<8x512xf32>
      %698 = arith.addf %695, %697 : vector<8x512xf32>
      %c32 = arith.constant 32 : index
      %699 = memref.load %arg1[%c32] : memref<165xf32, #tpu.memory_space<smem>>
      %c113 = arith.constant 113 : index
      %700 = memref.load %arg1[%c113] : memref<165xf32, #tpu.memory_space<smem>>
      %701 = vector.broadcast %699 : f32 to vector<8x512xf32>
      %702 = arith.mulf %701, %685 : vector<8x512xf32>
      %703 = arith.addf %674, %702 : vector<8x512xf32>
      %704 = vector.broadcast %700 : f32 to vector<8x512xf32>
      %705 = arith.mulf %704, %690 : vector<8x512xf32>
      %706 = arith.addf %703, %705 : vector<8x512xf32>
      %c35 = arith.constant 35 : index
      %707 = memref.load %arg1[%c35] : memref<165xf32, #tpu.memory_space<smem>>
      %c116 = arith.constant 116 : index
      %708 = memref.load %arg1[%c116] : memref<165xf32, #tpu.memory_space<smem>>
      %709 = vector.broadcast %707 : f32 to vector<8x512xf32>
      %710 = arith.mulf %709, %685 : vector<8x512xf32>
      %711 = arith.addf %682, %710 : vector<8x512xf32>
      %712 = vector.broadcast %708 : f32 to vector<8x512xf32>
      %713 = arith.mulf %712, %690 : vector<8x512xf32>
      %714 = arith.addf %711, %713 : vector<8x512xf32>
      %715 = arith.mulf %685, %690 : vector<8x512xf32>
      %cst_74 = arith.constant 2.000000e+00 : f32
      %716 = vector.broadcast %cst_74 : f32 to vector<8x512xf32>
      %717 = arith.mulf %716, %715 : vector<8x512xf32>
      %718 = arith.mulf %685, %685 : vector<8x512xf32>
      %cst_75 = arith.constant 2.000000e+00 : f32
      %719 = vector.broadcast %cst_75 : f32 to vector<8x512xf32>
      %720 = arith.mulf %719, %718 : vector<8x512xf32>
      %cst_76 = arith.constant 1.000000e+00 : f32
      %721 = vector.broadcast %cst_76 : f32 to vector<8x512xf32>
      %722 = arith.subf %721, %720 : vector<8x512xf32>
      %c38 = arith.constant 38 : index
      %723 = memref.load %arg1[%c38] : memref<165xf32, #tpu.memory_space<smem>>
      %c119 = arith.constant 119 : index
      %724 = memref.load %arg1[%c119] : memref<165xf32, #tpu.memory_space<smem>>
      %725 = vector.broadcast %723 : f32 to vector<8x512xf32>
      %726 = arith.mulf %725, %717 : vector<8x512xf32>
      %727 = arith.addf %698, %726 : vector<8x512xf32>
      %728 = vector.broadcast %724 : f32 to vector<8x512xf32>
      %729 = arith.mulf %728, %722 : vector<8x512xf32>
      %730 = arith.addf %727, %729 : vector<8x512xf32>
      %c41 = arith.constant 41 : index
      %731 = memref.load %arg1[%c41] : memref<165xf32, #tpu.memory_space<smem>>
      %c122 = arith.constant 122 : index
      %732 = memref.load %arg1[%c122] : memref<165xf32, #tpu.memory_space<smem>>
      %733 = vector.broadcast %731 : f32 to vector<8x512xf32>
      %734 = arith.mulf %733, %717 : vector<8x512xf32>
      %735 = arith.addf %706, %734 : vector<8x512xf32>
      %736 = vector.broadcast %732 : f32 to vector<8x512xf32>
      %737 = arith.mulf %736, %722 : vector<8x512xf32>
      %738 = arith.addf %735, %737 : vector<8x512xf32>
      %c44 = arith.constant 44 : index
      %739 = memref.load %arg1[%c44] : memref<165xf32, #tpu.memory_space<smem>>
      %c125 = arith.constant 125 : index
      %740 = memref.load %arg1[%c125] : memref<165xf32, #tpu.memory_space<smem>>
      %741 = vector.broadcast %739 : f32 to vector<8x512xf32>
      %742 = arith.mulf %741, %717 : vector<8x512xf32>
      %743 = arith.addf %714, %742 : vector<8x512xf32>
      %744 = vector.broadcast %740 : f32 to vector<8x512xf32>
      %745 = arith.mulf %744, %722 : vector<8x512xf32>
      %746 = arith.addf %743, %745 : vector<8x512xf32>
      %747 = arith.mulf %717, %722 : vector<8x512xf32>
      %cst_77 = arith.constant 2.000000e+00 : f32
      %748 = vector.broadcast %cst_77 : f32 to vector<8x512xf32>
      %749 = arith.mulf %748, %747 : vector<8x512xf32>
      %750 = arith.mulf %717, %717 : vector<8x512xf32>
      %cst_78 = arith.constant 2.000000e+00 : f32
      %751 = vector.broadcast %cst_78 : f32 to vector<8x512xf32>
      %752 = arith.mulf %751, %750 : vector<8x512xf32>
      %cst_79 = arith.constant 1.000000e+00 : f32
      %753 = vector.broadcast %cst_79 : f32 to vector<8x512xf32>
      %754 = arith.subf %753, %752 : vector<8x512xf32>
      %c47 = arith.constant 47 : index
      %755 = memref.load %arg1[%c47] : memref<165xf32, #tpu.memory_space<smem>>
      %c128 = arith.constant 128 : index
      %756 = memref.load %arg1[%c128] : memref<165xf32, #tpu.memory_space<smem>>
      %757 = vector.broadcast %755 : f32 to vector<8x512xf32>
      %758 = arith.mulf %757, %749 : vector<8x512xf32>
      %759 = arith.addf %730, %758 : vector<8x512xf32>
      %760 = vector.broadcast %756 : f32 to vector<8x512xf32>
      %761 = arith.mulf %760, %754 : vector<8x512xf32>
      %762 = arith.addf %759, %761 : vector<8x512xf32>
      %c50 = arith.constant 50 : index
      %763 = memref.load %arg1[%c50] : memref<165xf32, #tpu.memory_space<smem>>
      %c131 = arith.constant 131 : index
      %764 = memref.load %arg1[%c131] : memref<165xf32, #tpu.memory_space<smem>>
      %765 = vector.broadcast %763 : f32 to vector<8x512xf32>
      %766 = arith.mulf %765, %749 : vector<8x512xf32>
      %767 = arith.addf %738, %766 : vector<8x512xf32>
      %768 = vector.broadcast %764 : f32 to vector<8x512xf32>
      %769 = arith.mulf %768, %754 : vector<8x512xf32>
      %770 = arith.addf %767, %769 : vector<8x512xf32>
      %c53 = arith.constant 53 : index
      %771 = memref.load %arg1[%c53] : memref<165xf32, #tpu.memory_space<smem>>
      %c134 = arith.constant 134 : index
      %772 = memref.load %arg1[%c134] : memref<165xf32, #tpu.memory_space<smem>>
      %773 = vector.broadcast %771 : f32 to vector<8x512xf32>
      %774 = arith.mulf %773, %749 : vector<8x512xf32>
      %775 = arith.addf %746, %774 : vector<8x512xf32>
      %776 = vector.broadcast %772 : f32 to vector<8x512xf32>
      %777 = arith.mulf %776, %754 : vector<8x512xf32>
      %778 = arith.addf %775, %777 : vector<8x512xf32>
      %779 = arith.mulf %749, %754 : vector<8x512xf32>
      %cst_80 = arith.constant 2.000000e+00 : f32
      %780 = vector.broadcast %cst_80 : f32 to vector<8x512xf32>
      %781 = arith.mulf %780, %779 : vector<8x512xf32>
      %782 = arith.mulf %749, %749 : vector<8x512xf32>
      %cst_81 = arith.constant 2.000000e+00 : f32
      %783 = vector.broadcast %cst_81 : f32 to vector<8x512xf32>
      %784 = arith.mulf %783, %782 : vector<8x512xf32>
      %cst_82 = arith.constant 1.000000e+00 : f32
      %785 = vector.broadcast %cst_82 : f32 to vector<8x512xf32>
      %786 = arith.subf %785, %784 : vector<8x512xf32>
      %c56 = arith.constant 56 : index
      %787 = memref.load %arg1[%c56] : memref<165xf32, #tpu.memory_space<smem>>
      %c137 = arith.constant 137 : index
      %788 = memref.load %arg1[%c137] : memref<165xf32, #tpu.memory_space<smem>>
      %789 = vector.broadcast %787 : f32 to vector<8x512xf32>
      %790 = arith.mulf %789, %781 : vector<8x512xf32>
      %791 = arith.addf %762, %790 : vector<8x512xf32>
      %792 = vector.broadcast %788 : f32 to vector<8x512xf32>
      %793 = arith.mulf %792, %786 : vector<8x512xf32>
      %794 = arith.addf %791, %793 : vector<8x512xf32>
      %c59 = arith.constant 59 : index
      %795 = memref.load %arg1[%c59] : memref<165xf32, #tpu.memory_space<smem>>
      %c140 = arith.constant 140 : index
      %796 = memref.load %arg1[%c140] : memref<165xf32, #tpu.memory_space<smem>>
      %797 = vector.broadcast %795 : f32 to vector<8x512xf32>
      %798 = arith.mulf %797, %781 : vector<8x512xf32>
      %799 = arith.addf %770, %798 : vector<8x512xf32>
      %800 = vector.broadcast %796 : f32 to vector<8x512xf32>
      %801 = arith.mulf %800, %786 : vector<8x512xf32>
      %802 = arith.addf %799, %801 : vector<8x512xf32>
      %c62 = arith.constant 62 : index
      %803 = memref.load %arg1[%c62] : memref<165xf32, #tpu.memory_space<smem>>
      %c143 = arith.constant 143 : index
      %804 = memref.load %arg1[%c143] : memref<165xf32, #tpu.memory_space<smem>>
      %805 = vector.broadcast %803 : f32 to vector<8x512xf32>
      %806 = arith.mulf %805, %781 : vector<8x512xf32>
      %807 = arith.addf %778, %806 : vector<8x512xf32>
      %808 = vector.broadcast %804 : f32 to vector<8x512xf32>
      %809 = arith.mulf %808, %786 : vector<8x512xf32>
      %810 = arith.addf %807, %809 : vector<8x512xf32>
      %811 = arith.mulf %781, %786 : vector<8x512xf32>
      %cst_83 = arith.constant 2.000000e+00 : f32
      %812 = vector.broadcast %cst_83 : f32 to vector<8x512xf32>
      %813 = arith.mulf %812, %811 : vector<8x512xf32>
      %814 = arith.mulf %781, %781 : vector<8x512xf32>
      %cst_84 = arith.constant 2.000000e+00 : f32
      %815 = vector.broadcast %cst_84 : f32 to vector<8x512xf32>
      %816 = arith.mulf %815, %814 : vector<8x512xf32>
      %cst_85 = arith.constant 1.000000e+00 : f32
      %817 = vector.broadcast %cst_85 : f32 to vector<8x512xf32>
      %818 = arith.subf %817, %816 : vector<8x512xf32>
      %c65 = arith.constant 65 : index
      %819 = memref.load %arg1[%c65] : memref<165xf32, #tpu.memory_space<smem>>
      %c146 = arith.constant 146 : index
      %820 = memref.load %arg1[%c146] : memref<165xf32, #tpu.memory_space<smem>>
      %821 = vector.broadcast %819 : f32 to vector<8x512xf32>
      %822 = arith.mulf %821, %813 : vector<8x512xf32>
      %823 = arith.addf %794, %822 : vector<8x512xf32>
      %824 = vector.broadcast %820 : f32 to vector<8x512xf32>
      %825 = arith.mulf %824, %818 : vector<8x512xf32>
      %826 = arith.addf %823, %825 : vector<8x512xf32>
      %c68 = arith.constant 68 : index
      %827 = memref.load %arg1[%c68] : memref<165xf32, #tpu.memory_space<smem>>
      %c149 = arith.constant 149 : index
      %828 = memref.load %arg1[%c149] : memref<165xf32, #tpu.memory_space<smem>>
      %829 = vector.broadcast %827 : f32 to vector<8x512xf32>
      %830 = arith.mulf %829, %813 : vector<8x512xf32>
      %831 = arith.addf %802, %830 : vector<8x512xf32>
      %832 = vector.broadcast %828 : f32 to vector<8x512xf32>
      %833 = arith.mulf %832, %818 : vector<8x512xf32>
      %834 = arith.addf %831, %833 : vector<8x512xf32>
      %c71 = arith.constant 71 : index
      %835 = memref.load %arg1[%c71] : memref<165xf32, #tpu.memory_space<smem>>
      %c152 = arith.constant 152 : index
      %836 = memref.load %arg1[%c152] : memref<165xf32, #tpu.memory_space<smem>>
      %837 = vector.broadcast %835 : f32 to vector<8x512xf32>
      %838 = arith.mulf %837, %813 : vector<8x512xf32>
      %839 = arith.addf %810, %838 : vector<8x512xf32>
      %840 = vector.broadcast %836 : f32 to vector<8x512xf32>
      %841 = arith.mulf %840, %818 : vector<8x512xf32>
      %842 = arith.addf %839, %841 : vector<8x512xf32>
      %843 = arith.mulf %813, %818 : vector<8x512xf32>
      %cst_86 = arith.constant 2.000000e+00 : f32
      %844 = vector.broadcast %cst_86 : f32 to vector<8x512xf32>
      %845 = arith.mulf %844, %843 : vector<8x512xf32>
      %846 = arith.mulf %813, %813 : vector<8x512xf32>
      %cst_87 = arith.constant 2.000000e+00 : f32
      %847 = vector.broadcast %cst_87 : f32 to vector<8x512xf32>
      %848 = arith.mulf %847, %846 : vector<8x512xf32>
      %cst_88 = arith.constant 1.000000e+00 : f32
      %849 = vector.broadcast %cst_88 : f32 to vector<8x512xf32>
      %850 = arith.subf %849, %848 : vector<8x512xf32>
      %c74 = arith.constant 74 : index
      %851 = memref.load %arg1[%c74] : memref<165xf32, #tpu.memory_space<smem>>
      %c155 = arith.constant 155 : index
      %852 = memref.load %arg1[%c155] : memref<165xf32, #tpu.memory_space<smem>>
      %853 = vector.broadcast %851 : f32 to vector<8x512xf32>
      %854 = arith.mulf %853, %845 : vector<8x512xf32>
      %855 = arith.addf %826, %854 : vector<8x512xf32>
      %856 = vector.broadcast %852 : f32 to vector<8x512xf32>
      %857 = arith.mulf %856, %850 : vector<8x512xf32>
      %858 = arith.addf %855, %857 : vector<8x512xf32>
      %c77 = arith.constant 77 : index
      %859 = memref.load %arg1[%c77] : memref<165xf32, #tpu.memory_space<smem>>
      %c158 = arith.constant 158 : index
      %860 = memref.load %arg1[%c158] : memref<165xf32, #tpu.memory_space<smem>>
      %861 = vector.broadcast %859 : f32 to vector<8x512xf32>
      %862 = arith.mulf %861, %845 : vector<8x512xf32>
      %863 = arith.addf %834, %862 : vector<8x512xf32>
      %864 = vector.broadcast %860 : f32 to vector<8x512xf32>
      %865 = arith.mulf %864, %850 : vector<8x512xf32>
      %866 = arith.addf %863, %865 : vector<8x512xf32>
      %c80 = arith.constant 80 : index
      %867 = memref.load %arg1[%c80] : memref<165xf32, #tpu.memory_space<smem>>
      %c161 = arith.constant 161 : index
      %868 = memref.load %arg1[%c161] : memref<165xf32, #tpu.memory_space<smem>>
      %869 = vector.broadcast %867 : f32 to vector<8x512xf32>
      %870 = arith.mulf %869, %845 : vector<8x512xf32>
      %871 = arith.addf %842, %870 : vector<8x512xf32>
      %872 = vector.broadcast %868 : f32 to vector<8x512xf32>
      %873 = arith.mulf %872, %850 : vector<8x512xf32>
      %874 = arith.addf %871, %873 : vector<8x512xf32>
      %c162 = arith.constant 162 : index
      %875 = memref.load %arg1[%c162] : memref<165xf32, #tpu.memory_space<smem>>
      %876 = vector.broadcast %875 : f32 to vector<8x512xf32>
      %877 = arith.addf %858, %876 : vector<8x512xf32>
      %c0_89 = arith.constant 0 : index
      %878 = arith.index_cast %4 : i32 to index
      %c0_90 = arith.constant 0 : index
      %879 = vector.load %arg3[%c0_89, %878, %c0_90] : memref<3x16x512xf32, #tpu.memory_space<vmem>>, vector<1x8x512xf32>
      %880 = vector.shape_cast %879 : vector<1x8x512xf32> to vector<8x512xf32>
      %881 = vector.shape_cast %877 : vector<8x512xf32> to vector<1x8x512xf32>
      tpu.vector_store %arg3[%c0_89, %878, %c0_90], %881 {strides = array<i32>} : memref<3x16x512xf32, #tpu.memory_space<vmem>>, vector<1x8x512xf32>,
      %c163 = arith.constant 163 : index
      %882 = memref.load %arg1[%c163] : memref<165xf32, #tpu.memory_space<smem>>
      %883 = vector.broadcast %882 : f32 to vector<8x512xf32>
      %884 = arith.addf %866, %883 : vector<8x512xf32>
      %c1_91 = arith.constant 1 : index
      %885 = arith.index_cast %4 : i32 to index
      %c0_92 = arith.constant 0 : index
      %886 = vector.load %arg3[%c1_91, %885, %c0_92] : memref<3x16x512xf32, #tpu.memory_space<vmem>>, vector<1x8x512xf32>
      %887 = vector.shape_cast %886 : vector<1x8x512xf32> to vector<8x512xf32>
      %888 = vector.shape_cast %884 : vector<8x512xf32> to vector<1x8x512xf32>
      tpu.vector_store %arg3[%c1_91, %885, %c0_92], %888 {strides = array<i32>} : memref<3x16x512xf32, #tpu.memory_space<vmem>>, vector<1x8x512xf32>,
      %c164 = arith.constant 164 : index
      %889 = memref.load %arg1[%c164] : memref<165xf32, #tpu.memory_space<smem>>
      %890 = vector.broadcast %889 : f32 to vector<8x512xf32>
      %891 = arith.addf %874, %890 : vector<8x512xf32>
      %c2_93 = arith.constant 2 : index
      %892 = arith.index_cast %4 : i32 to index
      %c0_94 = arith.constant 0 : index
      %893 = vector.load %arg3[%c2_93, %892, %c0_94] : memref<3x16x512xf32, #tpu.memory_space<vmem>>, vector<1x8x512xf32>
      %894 = vector.shape_cast %893 : vector<1x8x512xf32> to vector<8x512xf32>
      %895 = vector.shape_cast %891 : vector<8x512xf32> to vector<1x8x512xf32>
      tpu.vector_store %arg3[%c2_93, %892, %c0_94], %895 {strides = array<i32>} : memref<3x16x512xf32, #tpu.memory_space<vmem>>, vector<1x8x512xf32>,
    }
    %c2_i32_0 = arith.constant 2 : i32
    return
  }
  func.func @transform_0(%arg0: i32) -> i32 {
    %c0_i32 = arith.constant 0 : i32
    %c0_i32_0 = arith.constant 0 : i32
    return %c0_i32 : i32
  }
  func.func @transform_1(%arg0: i32) -> (i32, i32, i32) {
    %c0_i32 = arith.constant 0 : i32
    %c0_i32_0 = arith.constant 0 : i32
    %c0_i32_1 = arith.constant 0 : i32
    return %c0_i32, %arg0, %c0_i32_0 : i32, i32, i32
  }
  func.func @transform_2(%arg0: i32) -> (i32, i32, i32) {
    %c0_i32 = arith.constant 0 : i32
    %c0_i32_0 = arith.constant 0 : i32
    %c0_i32_1 = arith.constant 0 : i32
    return %c0_i32, %arg0, %c0_i32_0 : i32, i32, i32
  }
}

</mosaic_0001>

<llo_original>
// kernel: mlp_transformer_rhino.1
$region0: #{mlp_transformer_rhino.1}
  #allocation0 [shape = 'u32[]', space=smem, size = 0x4, offset = 0x4, fixed_abs, tag = 'smem constant byte address 0x4 - core index']
  #allocation1 [shape = 'u32[144,128]{1,0:T(1,128)}', space=vmem, size = 0x12000, scoped, tag = 'internal scratch']
  %s0 = inlined_call_operand.vmem [shape: f32[165], index: 0, kind: input, shape index: {}]
  %s1 = inlined_call_operand.vmem [shape: f32[3,32,512], index: 1, kind: input, shape index: {}]
  %s2 = inlined_call_operand.vmem [shape: f32[3,32,512], index: 2, kind: output, shape index: {}]
  %s3 = sld [smem:[#allocation0]]
  $region94: #{mlp_transformer_rhino.1} parent=0
    _
  %s5 = ssub.s32 1, %s3
  %s6 = scalar_select 0, %s5, %s3
  $region1: #{mlp_transformer_rhino.1} parent=0
    #allocation2 [shape = 'u8[1024]{0}', space=smem, size = 0x400, scoped, tag = 'input window, operand 0, single buffered']
    #allocation3 [shape = 's32[2]{0}', space=sflag, size = 0x8, scoped, tag = 'scoped memory for mlp_transformer_rhino.1']
    #allocation4 [shape = 'u8[196608]{0}', space=vmem, size = 0x30000, scoped, tag = 'input window, operand 1']
    #allocation5 [shape = 'u8[196608]{0}', space=vmem, size = 0x30000, scoped, tag = 'output window, operand 0']
    %7 = vsyncpa [#allocation3], 0
    loop: start=0, step=1, limit=4
    $region2: #{mlp_transformer_rhino.1} parent=1 // loop_pre_header
      _
    $region3: #{mlp_transformer_rhino.1} parent=1 // loop_header
      %s9 = sphi 0, %s13
      %p10 = scmp.ge.s32.totalorder %s9, 4
      %s17 = sphi 0, %s17
      %s19 = sphi 0, %s17
      %s20 = sphi 0, %s19
      %s34 = sphi 0, %s20
      %s40 = sphi 0, %s42
      %s43 = sphi 0, %s40
      %s44 = sphi 0, %s43
      %s60 = sphi 0, %s44
      %s66 = sphi 0, %s68
      %s69 = sphi 0, %s66
      %s70 = sphi 0, %s69
      %s86 = sphi 0, %s70
    $region4: #{mlp_transformer_rhino.1} parent=1 // loop_header_branch
      %12 = sbr.rel (%p10) target = $region8
    $region5: #{mlp_transformer_rhino.1} parent=1 // loop_body
      %s14 = ssub.s32 %s9, 1
      %s15 = ssub.s32 %s9, 2
      %s16 = sadd.s32 %s9, 1
      %s18 = sadd.s32 %s17, 1
      %p21 = scmp.eq.s32.totalorder %s9, 1
      %p22 = scmp.ne.s32.totalorder %s17, %s19
      %p23 = scmp.eq.s32.totalorder %s9, 0
      %p24 = por %p22, %p23
      %p25 = scmp.ne.s32.totalorder %s17, %s19
      %p26 = scmp.eq.s32.totalorder %s14, 1
      %p27 = por %p25, %p26
      %p28 = scmp.ne.s32.totalorder %s19, %s20
      %p29 = scmp.eq.s32.totalorder %s14, 0
      %p30 = por %p28, %p29
      %p31 = scmp.ne.s32.totalorder %s19, %s20
      %p32 = scmp.eq.s32.totalorder %s15, 1
      %p33 = por %p31, %p32
      %p35 = scmp.ne.s32.totalorder %s20, %s34
      %p36 = scmp.eq.s32.totalorder %s15, 0
      %p37 = por %p35, %p36
      %s38 = ssub.s32 %s9, %s16
      %p39 = scmp.eq.s32.totalorder %s38, 0
      %s41 = sadd.s32 %s40, 1
      %s42 = scalar_select %p39, %s40, %s41
      %p45 = pneg %p39
      %p46 = scmp.eq.s32.totalorder %s9, 1
      %p47 = por %p45, %p46
      %p48 = scmp.ne.s32.totalorder %s40, %s43
      %p49 = scmp.eq.s32.totalorder %s9, 0
      %p50 = por %p48, %p49
      %p51 = scmp.ne.s32.totalorder %s40, %s43
      %p52 = scmp.eq.s32.totalorder %s14, 1
      %p53 = por %p51, %p52
      %p54 = scmp.ne.s32.totalorder %s43, %s44
      %p55 = scmp.eq.s32.totalorder %s14, 0
      %p56 = por %p54, %p55
      %p57 = scmp.ne.s32.totalorder %s43, %s44
      %p58 = scmp.eq.s32.totalorder %s15, 1
      %p59 = por %p57, %p58
      %p61 = scmp.ne.s32.totalorder %s44, %s60
      %p62 = scmp.eq.s32.totalorder %s15, 0
      %p63 = por %p61, %p62
      %s64 = ssub.s32 %s9, %s16
      %p65 = scmp.eq.s32.totalorder %s64, 0
      %s67 = sadd.s32 %s66, 1
      %s68 = scalar_select %p65, %s66, %s67
      %p71 = pneg %p65
      %p72 = scmp.eq.s32.totalorder %s9, 1
      %p73 = por %p71, %p72
      %p74 = scmp.ne.s32.totalorder %s66, %s69
      %p75 = scmp.eq.s32.totalorder %s9, 0
      %p76 = por %p74, %p75
      %p77 = scmp.ne.s32.totalorder %s66, %s69
      %p78 = scmp.eq.s32.totalorder %s14, 1
      %p79 = por %p77, %p78
      %p80 = scmp.ne.s32.totalorder %s69, %s70
      %p81 = scmp.eq.s32.totalorder %s14, 0
      %p82 = por %p80, %p81
      %p83 = scmp.ne.s32.totalorder %s69, %s70
      %p84 = scmp.eq.s32.totalorder %s15, 1
      %p85 = por %p83, %p84
      %p87 = scmp.ne.s32.totalorder %s70, %s86
      %p88 = scmp.eq.s32.totalorder %s15, 0
      %p89 = por %p87, %p88
      %p90 = scmp.le.s32.totalorder 1, %s9
      %p91 = scmp.lt.s32.totalorder %s9, 3
      %p92 = pnand %p90, %p91
      %p93 = pneg %p92
      // Predicated region
      $region9: #{mlp_transformer_rhino.1} parent=5 // pred_check
        _
      $region10: #{mlp_transformer_rhino.1} parent=5 // pred_check_branch
        %95 = sbr.rel (%p92) target = $region12
      $region11: #{mlp_transformer_rhino.1} parent=5 // pred_region
        %s96 = ssub.s32 %s9, 1
        // Predicated region
        $region13: #{mlp_transformer_rhino.1} parent=11 // pred_check
          %p97 = pneg %p30
        $region14: #{mlp_transformer_rhino.1} parent=11 // pred_check_branch
          %99 = sbr.rel (%p97) target = $region16
        $region15: #{mlp_transformer_rhino.1} parent=11 // pred_region
          %s101 = ssub.s32 32, 32
          %102 = vsyncadd [#allocation3], %s101
          %s104 = sshll.u32 %s0, 4
          %s105 = int_to_ptr.vmem [resolvable:$true] %s104
          %107 = dma.vmem_to_smem %s105, 32, [#allocation2], [#allocation3]
        $region16: #{mlp_transformer_rhino.1} parent=11 // pred_fallthru
          _
      $region12: #{mlp_transformer_rhino.1} parent=5 // pred_fallthru
        _
      %p108 = scmp.lt.s32.totalorder %s9, 2
      // Predicated region
      $region17: #{mlp_transformer_rhino.1} parent=5 // pred_check
        %p109 = pneg %p108
      $region18: #{mlp_transformer_rhino.1} parent=5 // pred_check_branch
        %111 = sbr.rel (%p109) target = $region20
      $region19: #{mlp_transformer_rhino.1} parent=5 // pred_region
        // Predicated region
        $region21: #{mlp_transformer_rhino.1} parent=19 // pred_check
          %p112 = pneg %p50
        $region22: #{mlp_transformer_rhino.1} parent=19 // pred_check_branch
          %114 = sbr.rel (%p112) target = $region24
        $region23: #{mlp_transformer_rhino.1} parent=19 // pred_region
          %s115 = sand.u32 %s40, 1
          %s116 = sand.u32 %s40, 1
          %s117 = smul.addr %s116, 192
          %s118 = scalar_lea.vmem [#allocation4], %s117
          %s119 = smul.u32 2, %s9
          %s120 = smul.addr %s119, 4
          %s121 = smul.addr %s120, 8
          %s122 = scalar_lea.vmem %s1, %s121
          // Predicated region
          $region25: #{mlp_transformer_rhino.1} parent=23 // pred_check
            _
          $region26: #{mlp_transformer_rhino.1} parent=23 // pred_check_branch
            %124 = sbr.rel (0) target = $region28
          $region27: #{mlp_transformer_rhino.1} parent=23 // pred_region
            // Predicated region
            $region29: #{mlp_transformer_rhino.1} parent=27 // pred_check
              _
            $region30: #{mlp_transformer_rhino.1} parent=27 // pred_check_branch
              %126 = sbr.rel (0) target = $region32
            $region31: #{mlp_transformer_rhino.1} parent=27 // pred_region
              loop: start=0, step=1, limit=1
              $region33: #{mlp_transformer_rhino.1} parent=31 // loop_pre_header
                _
              $region34: #{mlp_transformer_rhino.1} parent=31 // loop_header
                %s128 = sphi 0, %s132
                %p129 = scmp.ge.s32.totalorder %s128, 1
                %s133 = sphi %s122, %s122
                %s134 = sphi %s118, %s118
              $region35: #{mlp_transformer_rhino.1} parent=31 // loop_header_branch
                %131 = sbr.rel (%p129) target = $region39
              $region36: #{mlp_transformer_rhino.1} parent=31 // loop_body
                %v135 = vld [vmem:[%s133] sm:$0xff]
                %136 = vst [vmem:[%s134] sm:$0xff] %v135
                %v137 = vld [vmem:[%s133 + $0x8] sm:$0xff]
                %138 = vst [vmem:[%s134 + $0x8] sm:$0xff] %v137
                %v139 = vld [vmem:[%s133 + $0x10] sm:$0xff]
                %140 = vst [vmem:[%s134 + $0x10] sm:$0xff] %v139
                %v141 = vld [vmem:[%s133 + $0x18] sm:$0xff]
                %142 = vst [vmem:[%s134 + $0x18] sm:$0xff] %v141
                %v143 = vld [vmem:[%s133 + $0x20] sm:$0xff]
                %144 = vst [vmem:[%s134 + $0x20] sm:$0xff] %v143
                %v145 = vld [vmem:[%s133 + $0x28] sm:$0xff]
                %146 = vst [vmem:[%s134 + $0x28] sm:$0xff] %v145
                %v147 = vld [vmem:[%s133 + $0x30] sm:$0xff]
                %148 = vst [vmem:[%s134 + $0x30] sm:$0xff] %v147
                %v149 = vld [vmem:[%s133 + $0x38] sm:$0xff]
                %150 = vst [vmem:[%s134 + $0x38] sm:$0xff] %v149
                %v151 = vld [vmem:[%s133 + $0x80] sm:$0xff]
                %152 = vst [vmem:[%s134 + $0x40] sm:$0xff] %v151
                %v153 = vld [vmem:[%s133 + $0x88] sm:$0xff]
                %154 = vst [vmem:[%s134 + $0x48] sm:$0xff] %v153
                %v155 = vld [vmem:[%s133 + $0x90] sm:$0xff]
                %156 = vst [vmem:[%s134 + $0x50] sm:$0xff] %v155
                %v157 = vld [vmem:[%s133 + $0x98] sm:$0xff]
                %158 = vst [vmem:[%s134 + $0x58] sm:$0xff] %v157
                %v159 = vld [vmem:[%s133 + $0xa0] sm:$0xff]
                %160 = vst [vmem:[%s134 + $0x60] sm:$0xff] %v159
                %v161 = vld [vmem:[%s133 + $0xa8] sm:$0xff]
                %162 = vst [vmem:[%s134 + $0x68] sm:$0xff] %v161
                %v163 = vld [vmem:[%s133 + $0xb0] sm:$0xff]
                %164 = vst [vmem:[%s134 + $0x70] sm:$0xff] %v163
                %v165 = vld [vmem:[%s133 + $0xb8] sm:$0xff]
                %166 = vst [vmem:[%s134 + $0x78] sm:$0xff] %v165
                %v167 = vld [vmem:[%s133 + $0x100] sm:$0xff]
                %168 = vst [vmem:[%s134 + $0x80] sm:$0xff] %v167
                %v169 = vld [vmem:[%s133 + $0x108] sm:$0xff]
                %170 = vst [vmem:[%s134 + $0x88] sm:$0xff] %v169
                %v171 = vld [vmem:[%s133 + $0x110] sm:$0xff]
                %172 = vst [vmem:[%s134 + $0x90] sm:$0xff] %v171
                %v173 = vld [vmem:[%s133 + $0x118] sm:$0xff]
                %174 = vst [vmem:[%s134 + $0x98] sm:$0xff] %v173
                %v175 = vld [vmem:[%s133 + $0x120] sm:$0xff]
                %176 = vst [vmem:[%s134 + $0xa0] sm:$0xff] %v175
                %v177 = vld [vmem:[%s133 + $0x128] sm:$0xff]
                %178 = vst [vmem:[%s134 + $0xa8] sm:$0xff] %v177
                %v179 = vld [vmem:[%s133 + $0x130] sm:$0xff]
                %180 = vst [vmem:[%s134 + $0xb0] sm:$0xff] %v179
                %v181 = vld [vmem:[%s133 + $0x138] sm:$0xff]
                %182 = vst [vmem:[%s134 + $0xb8] sm:$0xff] %v181
              $region37: #{mlp_transformer_rhino.1} parent=31 // loop_footer
                %s132 = sadd.s32 1, %s128
              $region38: #{mlp_transformer_rhino.1} parent=31 // loop_footer_branch
                %127 = sbr.rel target = $region34
              $region39: #{mlp_transformer_rhino.1} parent=31 // loop_exit
                _
            $region32: #{mlp_transformer_rhino.1} parent=27 // pred_fallthru
              _
            // Predicated region
            $region40: #{mlp_transformer_rhino.1} parent=27 // pred_check
              _
            $region41: #{mlp_transformer_rhino.1} parent=27 // pred_check_branch
              %184 = sbr.rel target = $region43
            $region42: #{mlp_transformer_rhino.1} parent=27 // pred_region
              _
            $region43: #{mlp_transformer_rhino.1} parent=27 // pred_fallthru
              _
          $region28: #{mlp_transformer_rhino.1} parent=23 // pred_fallthru
            _
          %185 = vnop
        $region24: #{mlp_transformer_rhino.1} parent=19 // pred_fallthru
          _
      $region20: #{mlp_transformer_rhino.1} parent=5 // pred_fallthru
        _
      %p186 = scmp.le.s32.totalorder 1, %s9
      %p187 = scmp.lt.s32.totalorder %s9, 3
      %p188 = pnand %p186, %p187
      %p189 = pneg %p188
      // Predicated region
      $region44: #{mlp_transformer_rhino.1} parent=5 // pred_check
        _
      $region45: #{mlp_transformer_rhino.1} parent=5 // pred_check_branch
        %191 = sbr.rel (%p188) target = $region47
      $region46: #{mlp_transformer_rhino.1} parent=5 // pred_region
        %s192 = ssub.s32 %s9, 1
        // Predicated region
        $region48: #{mlp_transformer_rhino.1} parent=46 // pred_check
          %p193 = pneg %p30
        $region49: #{mlp_transformer_rhino.1} parent=46 // pred_check_branch
          %195 = sbr.rel (%p193) target = $region51
        $region50: #{mlp_transformer_rhino.1} parent=46 // pred_region
          %196 = dma.done [#allocation3], 32
        $region51: #{mlp_transformer_rhino.1} parent=46 // pred_fallthru
          _
        %s197 = sand.u32 %s43, 1
        %s198 = sand.u32 %s43, 1
        %s199 = smul.addr %s198, 192
        %s200 = scalar_lea.vmem [#allocation4], %s199
        // Predicated region
        $region52: #{mlp_transformer_rhino.1} parent=46 // pred_check
          %p201 = pneg %p56
        $region53: #{mlp_transformer_rhino.1} parent=46 // pred_check_branch
          %203 = sbr.rel (%p201) target = $region55
        $region54: #{mlp_transformer_rhino.1} parent=46 // pred_region
          _
        $region55: #{mlp_transformer_rhino.1} parent=46 // pred_fallthru
          _
        %204 = sfence
        %p205 = pneg %p30
        %p206 = pneg %p27
        %s207 = sand.u32 %s43, 1
        %s208 = sand.u32 %s43, 1
        %s209 = smul.addr %s208, 192
        %s210 = scalar_lea.vmem [#allocation4], %s209
        %p211 = pneg %p56
        %p212 = pneg %p53
        %p213 = pneg %p82
        %p214 = pneg %p79
        %s215 = sand.u32 %s69, 1
        %s216 = sand.u32 %s69, 1
        %s217 = smul.addr %s216, 192
        %s218 = scalar_lea.vmem [#allocation5], %s217
        %s219 = smul.u32 2, %s14
        %s220 = smul.u32 2, %s14
        loop: start=0, step=1, limit=2
        $region56: #{mlp_transformer_rhino.1} parent=46 // loop_pre_header
          _
        $region57: #{mlp_transformer_rhino.1} parent=46 // loop_header
          %s222 = sphi 0, %s226
          %p223 = scmp.ge.s32.totalorder %s222, 2
        $region58: #{mlp_transformer_rhino.1} parent=46 // loop_header_branch
          %225 = sbr.rel (%p223) target = $region62
        $region59: #{mlp_transformer_rhino.1} parent=46 // loop_body
          %s227 = smul.u32 %s222, 8
          %s228 = sshra.s32 %s227, 3
          %s229 = sand.u32 %s227, 7
          %s230 = smul.u32 %s228, 4
          %s231 = smul.addr %s230, 8
          %s232 = scalar_lea.vmem %s200, %s231 [#allocation4]
          %v233 = vld [vmem:[%s232] sm:$0xff]
          %v234 = vld [vmem:[%s232 + $0x8] sm:$0xff]
          %v235 = vld [vmem:[%s232 + $0x10] sm:$0xff]
          %v236 = vld [vmem:[%s232 + $0x18] sm:$0xff]
          %v237 = vmul.f32 %v233, 3.1415927
          %v238 = vmul.f32 %v234, 3.1415927
          %v239 = vmul.f32 %v235, 3.1415927
          %v240 = vmul.f32 %v236, 3.1415927
          %v241 = vand.u32 2147483647, %v237
          %vm242 = vcmp.le.f32.partialorder %v241, 0.7853982
          %vm243 = vcmp.lt.s32.totalorder %v237, 0
          %v244 = vand.u32 %v237, 2139095040
          %v245 = vshrl.u32 %v244, 23
          %v246 = vsub.s32 %v245, 127
          %v247 = vand.u32 2147483647, %v237
          %v248 = vand.u32 %v247, 8388607
          %v249 = vor.u32 %v248, 8388608
          %v250 = vsub.s32 0, %v249
          %v251 = vadd.s32 %v246, 1
          %vm252 = vcmp.gt.s32.totalorder %v251, 0
          %v253 = vsel %vm252, %v251, 0
          %v254 = vshrl.u32 %v253, 5
          %v255 = vand.u32 %v253, 31
          %v256 = vsub.s32 32, %v255
          %v257 = vshrl.u32 683565275, %v256
          %v258 = vshll.u32 683565275, %v255
          %v259 = vshrl.u32 2475754826, %v256
          %v260 = vor.u32 %v258, %v259
          %v261 = vshll.u32 2475754826, %v255
          %v262 = vshrl.u32 2131351028, %v256
          %v263 = vor.u32 %v261, %v262
          %v264 = vshll.u32 2131351028, %v255
          %v265 = vshrl.u32 2102212464, %v256
          %v266 = vor.u32 %v264, %v265
          %v267 = vshll.u32 2102212464, %v255
          %v268 = vshrl.u32 920167782, %v256
          %v269 = vor.u32 %v267, %v268
          %v270 = vshll.u32 920167782, %v255
          %v271 = vshrl.u32 1326507024, %v256
          %v272 = vor.u32 %v270, %v271
          %vm273 = vcmp.lt.s32.totalorder %v254, 1
          %vm274 = vcmp.lt.s32.totalorder %v254, 2
          %vm275 = vcmp.lt.s32.totalorder %v254, 3
          %vm276 = vcmp.lt.s32.totalorder %v254, 4
          %v277 = vsel %vm273, %v257, %v260
          %v278 = vsel %vm276, %v266, 2102212464
          %v279 = vsel %vm275, %v263, %v278
          %v280 = vsel %vm274, %v277, %v279
          %v281 = vsel %vm273, %v260, %v263
          %v282 = vsel %vm276, %v269, 920167782
          %v283 = vsel %vm275, %v266, %v282
          %v284 = vsel %vm274, %v281, %v283
          %v285 = vsel %vm273, %v263, %v266
          %v286 = vsel %vm276, %v272, 1326507024
          %v287 = vsel %vm275, %v269, %v286
          %v288 = vsel %vm274, %v285, %v287
          %v289 = vshll.u32 %v249, 8
          %v290 = vmul.u32.u64.compose %v289, %v288
          %v291 = vextract.low.u32 %v290
          %v292 = vextract.high.u32 %v290
          %v293 = vmul.u32.u64.compose %v289, %v284
          %v294 = vextract.low.u32 %v293
          %v295 = vextract.high.u32 %v293
          %v296 = vmul.u32 %v289, %v280
          %v297 = vadd.s32 %v292, %v294
          %vm298 = vc.u32 %v292, %v294
          %v299 = vadd.s32 %v295, 1
          %v300 = vsel %vm298, %v299, %v295
          %v301 = vadd.s32 %v296, %v300
          %v302 = vadd.s32 %v301, 536870912
          %v303 = vshrl.u32 %v302, 30
          %v304 = vshll.u32 %v303, 30
          %v305 = vsub.s32 %v301, %v304
          %vm306 = vcmp.lt.s32.totalorder %v305, 0
          %v307 = vsub.s32 0, %v305
          %v308 = vsel %vm306, %v307, %v305
          %v309 = vclz %v308
          %v310 = vsub.s32 %v309, 2
          %vm311 = vcmp.gt.s32.totalorder 0, %v310
          %v312 = vsel %vm311, 0, %v310
          %v313 = vsub.s32 32, %v312
          %v314 = vshll.u32 %v305, %v312
          %v315 = vshrl.u32 %v297, %v313
          %v316 = vor.u32 %v314, %v315
          %v317 = vsub.s32 4294967266, %v312
          %v318 = vadd.s32 %v317, 127
          %v319 = vshll.u32 %v318, 23
          %v320 = vor.u32 4788187, %v319
          %v321 = vand.u32 2147483647, %v320
          %v323 = vcvt.s32.f32 %v316
          %v324 = vmul.f32 %v323, %v321
          %v325 = vxor.u32 %v324, 2147483648
          %v326 = vsel %vm243, %v325, %v324
          %v327 = vsub.s32 4, %v303
          %v328 = vsel %vm243, %v327, %v303
          %v329 = vsel %vm242, %v237, %v326
          %v330 = vsel %vm242, 0, %v328
          %v331 = vcosq.f32.pop %v329
          %v332 = vsinq.f32.pop %v329
          %vm333 = vweird.f32 %v237
          %v334 = vadd.s32 %v330, 3
          %v335 = vand.u32 %v334, 3
          %vm336 = vcmp.lt.s32.totalorder %v335, 2
          %vm337 = vcmp.eq.s32.totalorder %v335, 0
          %v338 = vxor.u32 %v332, 2147483648
          %v339 = vsel %vm337, %v331, %v338
          %vm340 = vcmp.eq.s32.totalorder %v335, 2
          %v341 = vxor.u32 %v331, 2147483648
          %v342 = vsel %vm340, %v341, %v332
          %v343 = vsel %vm336, %v339, %v342
          %v344 = vsel %vm333, nan, %v343
          %v345 = vand.u32 2147483647, %v238
          %vm346 = vcmp.le.f32.partialorder %v345, 0.7853982
          %vm347 = vcmp.lt.s32.totalorder %v238, 0
          %v348 = vand.u32 %v238, 2139095040
          %v349 = vshrl.u32 %v348, 23
          %v350 = vsub.s32 %v349, 127
          %v351 = vand.u32 2147483647, %v238
          %v352 = vand.u32 %v351, 8388607
          %v353 = vor.u32 %v352, 8388608
          %v354 = vsub.s32 0, %v353
          %v355 = vadd.s32 %v350, 1
          %vm356 = vcmp.gt.s32.totalorder %v355, 0
          %v357 = vsel %vm356, %v355, 0
          %v358 = vshrl.u32 %v357, 5
          %v359 = vand.u32 %v357, 31
          %v360 = vsub.s32 32, %v359
          %v361 = vshrl.u32 683565275, %v360
          %v362 = vshll.u32 683565275, %v359
          %v363 = vshrl.u32 2475754826, %v360
          %v364 = vor.u32 %v362, %v363
          %v365 = vshll.u32 2475754826, %v359
          %v366 = vshrl.u32 2131351028, %v360
          %v367 = vor.u32 %v365, %v366
          %v368 = vshll.u32 2131351028, %v359
          %v369 = vshrl.u32 2102212464, %v360
          %v370 = vor.u32 %v368, %v369
          %v371 = vshll.u32 2102212464, %v359
          %v372 = vshrl.u32 920167782, %v360
          %v373 = vor.u32 %v371, %v372
          %v374 = vshll.u32 920167782, %v359
          %v375 = vshrl.u32 1326507024, %v360
          %v376 = vor.u32 %v374, %v375
          %vm377 = vcmp.lt.s32.totalorder %v358, 1
          %vm378 = vcmp.lt.s32.totalorder %v358, 2
          %vm379 = vcmp.lt.s32.totalorder %v358, 3
          %vm380 = vcmp.lt.s32.totalorder %v358, 4
          %v381 = vsel %vm377, %v361, %v364
          %v382 = vsel %vm380, %v370, 2102212464
          %v383 = vsel %vm379, %v367, %v382
          %v384 = vsel %vm378, %v381, %v383
          %v385 = vsel %vm377, %v364, %v367
          %v386 = vsel %vm380, %v373, 920167782
          %v387 = vsel %vm379, %v370, %v386
          %v388 = vsel %vm378, %v385, %v387
          %v389 = vsel %vm377, %v367, %v370
          %v390 = vsel %vm380, %v376, 1326507024
          %v391 = vsel %vm379, %v373, %v390
          %v392 = vsel %vm378, %v389, %v391
          %v393 = vshll.u32 %v353, 8
          %v394 = vmul.u32.u64.compose %v393, %v392
          %v395 = vextract.low.u32 %v394
          %v396 = vextract.high.u32 %v394
          %v397 = vmul.u32.u64.compose %v393, %v388
          %v398 = vextract.low.u32 %v397
          %v399 = vextract.high.u32 %v397
          %v400 = vmul.u32 %v393, %v384
          %v401 = vadd.s32 %v396, %v398
          %vm402 = vc.u32 %v396, %v398
          %v403 = vadd.s32 %v399, 1
          %v404 = vsel %vm402, %v403, %v399
          %v405 = vadd.s32 %v400, %v404
          %v406 = vadd.s32 %v405, 536870912
          %v407 = vshrl.u32 %v406, 30
          %v408 = vshll.u32 %v407, 30
          %v409 = vsub.s32 %v405, %v408
          %vm410 = vcmp.lt.s32.totalorder %v409, 0
          %v411 = vsub.s32 0, %v409
          %v412 = vsel %vm410, %v411, %v409
          %v413 = vclz %v412
          %v414 = vsub.s32 %v413, 2
          %vm415 = vcmp.gt.s32.totalorder 0, %v414
          %v416 = vsel %vm415, 0, %v414
          %v417 = vsub.s32 32, %v416
          %v418 = vshll.u32 %v409, %v416
          %v419 = vshrl.u32 %v401, %v417
          %v420 = vor.u32 %v418, %v419
          %v421 = vsub.s32 4294967266, %v416
          %v422 = vadd.s32 %v421, 127
          %v423 = vshll.u32 %v422, 23
          %v424 = vor.u32 4788187, %v423
          %v425 = vand.u32 2147483647, %v424
          %v427 = vcvt.s32.f32 %v420
          %v428 = vmul.f32 %v427, %v425
          %v429 = vxor.u32 %v428, 2147483648
          %v430 = vsel %vm347, %v429, %v428
          %v431 = vsub.s32 4, %v407
          %v432 = vsel %vm347, %v431, %v407
          %v433 = vsel %vm346, %v238, %v430
          %v434 = vsel %vm346, 0, %v432
          %v435 = vcosq.f32.pop %v433
          %v436 = vsinq.f32.pop %v433
          %vm437 = vweird.f32 %v238
          %v438 = vadd.s32 %v434, 3
          %v439 = vand.u32 %v438, 3
          %vm440 = vcmp.lt.s32.totalorder %v439, 2
          %vm441 = vcmp.eq.s32.totalorder %v439, 0
          %v442 = vxor.u32 %v436, 2147483648
          %v443 = vsel %vm441, %v435, %v442
          %vm444 = vcmp.eq.s32.totalorder %v439, 2
          %v445 = vxor.u32 %v435, 2147483648
          %v446 = vsel %vm444, %v445, %v436
          %v447 = vsel %vm440, %v443, %v446
          %v448 = vsel %vm437, nan, %v447
          %v449 = vand.u32 2147483647, %v239
          %vm450 = vcmp.le.f32.partialorder %v449, 0.7853982
          %vm451 = vcmp.lt.s32.totalorder %v239, 0
          %v452 = vand.u32 %v239, 2139095040
          %v453 = vshrl.u32 %v452, 23
          %v454 = vsub.s32 %v453, 127
          %v455 = vand.u32 2147483647, %v239
          %v456 = vand.u32 %v455, 8388607
          %v457 = vor.u32 %v456, 8388608
          %v458 = vsub.s32 0, %v457
          %v459 = vadd.s32 %v454, 1
          %vm460 = vcmp.gt.s32.totalorder %v459, 0
          %v461 = vsel %vm460, %v459, 0
          %v462 = vshrl.u32 %v461, 5
          %v463 = vand.u32 %v461, 31
          %v464 = vsub.s32 32, %v463
          %v465 = vshrl.u32 683565275, %v464
          %v466 = vshll.u32 683565275, %v463
          %v467 = vshrl.u32 2475754826, %v464
          %v468 = vor.u32 %v466, %v467
          %v469 = vshll.u32 2475754826, %v463
          %v470 = vshrl.u32 2131351028, %v464
          %v471 = vor.u32 %v469, %v470
          %v472 = vshll.u32 2131351028, %v463
          %v473 = vshrl.u32 2102212464, %v464
          %v474 = vor.u32 %v472, %v473
          %v475 = vshll.u32 2102212464, %v463
          %v476 = vshrl.u32 920167782, %v464
          %v477 = vor.u32 %v475, %v476
          %v478 = vshll.u32 920167782, %v463
          %v479 = vshrl.u32 1326507024, %v464
          %v480 = vor.u32 %v478, %v479
          %vm481 = vcmp.lt.s32.totalorder %v462, 1
          %vm482 = vcmp.lt.s32.totalorder %v462, 2
          %vm483 = vcmp.lt.s32.totalorder %v462, 3
          %vm484 = vcmp.lt.s32.totalorder %v462, 4
          %v485 = vsel %vm481, %v465, %v468
          %v486 = vsel %vm484, %v474, 2102212464
          %v487 = vsel %vm483, %v471, %v486
          %v488 = vsel %vm482, %v485, %v487
          %v489 = vsel %vm481, %v468, %v471
          %v490 = vsel %vm484, %v477, 920167782
          %v491 = vsel %vm483, %v474, %v490
          %v492 = vsel %vm482, %v489, %v491
          %v493 = vsel %vm481, %v471, %v474
          %v494 = vsel %vm484, %v480, 1326507024
          %v495 = vsel %vm483, %v477, %v494
          %v496 = vsel %vm482, %v493, %v495
          %v497 = vshll.u32 %v457, 8
          %v498 = vmul.u32.u64.compose %v497, %v496
          %v499 = vextract.low.u32 %v498
          %v500 = vextract.high.u32 %v498
          %v501 = vmul.u32.u64.compose %v497, %v492
          %v502 = vextract.low.u32 %v501
          %v503 = vextract.high.u32 %v501
          %v504 = vmul.u32 %v497, %v488
          %v505 = vadd.s32 %v500, %v502
          %vm506 = vc.u32 %v500, %v502
          %v507 = vadd.s32 %v503, 1
          %v508 = vsel %vm506, %v507, %v503
          %v509 = vadd.s32 %v504, %v508
          %v510 = vadd.s32 %v509, 536870912
          %v511 = vshrl.u32 %v510, 30
          %v512 = vshll.u32 %v511, 30
          %v513 = vsub.s32 %v509, %v512
          %vm514 = vcmp.lt.s32.totalorder %v513, 0
          %v515 = vsub.s32 0, %v513
          %v516 = vsel %vm514, %v515, %v513
          %v517 = vclz %v516
          %v518 = vsub.s32 %v517, 2
          %vm519 = vcmp.gt.s32.totalorder 0, %v518
          %v520 = vsel %vm519, 0, %v518
          %v521 = vsub.s32 32, %v520
          %v522 = vshll.u32 %v513, %v520
          %v523 = vshrl.u32 %v505, %v521
          %v524 = vor.u32 %v522, %v523
          %v525 = vsub.s32 4294967266, %v520
          %v526 = vadd.s32 %v525, 127
          %v527 = vshll.u32 %v526, 23
          %v528 = vor.u32 4788187, %v527
          %v529 = vand.u32 2147483647, %v528
          %v531 = vcvt.s32.f32 %v524
          %v532 = vmul.f32 %v531, %v529
          %v533 = vxor.u32 %v532, 2147483648
          %v534 = vsel %vm451, %v533, %v532
          %v535 = vsub.s32 4, %v511
          %v536 = vsel %vm451, %v535, %v511
          %v537 = vsel %vm450, %v239, %v534
          %v538 = vsel %vm450, 0, %v536
          %v539 = vcosq.f32.pop %v537
          %v540 = vsinq.f32.pop %v537
          %vm541 = vweird.f32 %v239
          %v542 = vadd.s32 %v538, 3
          %v543 = vand.u32 %v542, 3
          %vm544 = vcmp.lt.s32.totalorder %v543, 2
          %vm545 = vcmp.eq.s32.totalorder %v543, 0
          %v546 = vxor.u32 %v540, 2147483648
          %v547 = vsel %vm545, %v539, %v546
          %vm548 = vcmp.eq.s32.totalorder %v543, 2
          %v549 = vxor.u32 %v539, 2147483648
          %v550 = vsel %vm548, %v549, %v540
          %v551 = vsel %vm544, %v547, %v550
          %v552 = vsel %vm541, nan, %v551
          %v553 = vand.u32 2147483647, %v240
          %vm554 = vcmp.le.f32.partialorder %v553, 0.7853982
          %vm555 = vcmp.lt.s32.totalorder %v240, 0
          %v556 = vand.u32 %v240, 2139095040
          %v557 = vshrl.u32 %v556, 23
          %v558 = vsub.s32 %v557, 127
          %v559 = vand.u32 2147483647, %v240
          %v560 = vand.u32 %v559, 8388607
          %v561 = vor.u32 %v560, 8388608
          %v562 = vsub.s32 0, %v561
          %v563 = vadd.s32 %v558, 1
          %vm564 = vcmp.gt.s32.totalorder %v563, 0
          %v565 = vsel %vm564, %v563, 0
          %v566 = vshrl.u32 %v565, 5
          %v567 = vand.u32 %v565, 31
          %v568 = vsub.s32 32, %v567
          %v569 = vshrl.u32 683565275, %v568
          %v570 = vshll.u32 683565275, %v567
          %v571 = vshrl.u32 2475754826, %v568
          %v572 = vor.u32 %v570, %v571
          %v573 = vshll.u32 2475754826, %v567
          %v574 = vshrl.u32 2131351028, %v568
          %v575 = vor.u32 %v573, %v574
          %v576 = vshll.u32 2131351028, %v567
          %v577 = vshrl.u32 2102212464, %v568
          %v578 = vor.u32 %v576, %v577
          %v579 = vshll.u32 2102212464, %v567
          %v580 = vshrl.u32 920167782, %v568
          %v581 = vor.u32 %v579, %v580
          %v582 = vshll.u32 920167782, %v567
          %v583 = vshrl.u32 1326507024, %v568
          %v584 = vor.u32 %v582, %v583
          %vm585 = vcmp.lt.s32.totalorder %v566, 1
          %vm586 = vcmp.lt.s32.totalorder %v566, 2
          %vm587 = vcmp.lt.s32.totalorder %v566, 3
          %vm588 = vcmp.lt.s32.totalorder %v566, 4
          %v589 = vsel %vm585, %v569, %v572
          %v590 = vsel %vm588, %v578, 2102212464
          %v591 = vsel %vm587, %v575, %v590
          %v592 = vsel %vm586, %v589, %v591
          %v593 = vsel %vm585, %v572, %v575
          %v594 = vsel %vm588, %v581, 920167782
          %v595 = vsel %vm587, %v578, %v594
          %v596 = vsel %vm586, %v593, %v595
          %v597 = vsel %vm585, %v575, %v578
          %v598 = vsel %vm588, %v584, 1326507024
          %v599 = vsel %vm587, %v581, %v598
          %v600 = vsel %vm586, %v597, %v599
          %v601 = vshll.u32 %v561, 8
          %v602 = vmul.u32.u64.compose %v601, %v600
          %v603 = vextract.low.u32 %v602
          %v604 = vextract.high.u32 %v602
          %v605 = vmul.u32.u64.compose %v601, %v596
          %v606 = vextract.low.u32 %v605
          %v607 = vextract.high.u32 %v605
          %v608 = vmul.u32 %v601, %v592
          %v609 = vadd.s32 %v604, %v606
          %vm610 = vc.u32 %v604, %v606
          %v611 = vadd.s32 %v607, 1
          %v612 = vsel %vm610, %v611, %v607
          %v613 = vadd.s32 %v608, %v612
          %v614 = vadd.s32 %v613, 536870912
          %v615 = vshrl.u32 %v614, 30
          %v616 = vshll.u32 %v615, 30
          %v617 = vsub.s32 %v613, %v616
          %vm618 = vcmp.lt.s32.totalorder %v617, 0
          %v619 = vsub.s32 0, %v617
          %v620 = vsel %vm618, %v619, %v617
          %v621 = vclz %v620
          %v622 = vsub.s32 %v621, 2
          %vm623 = vcmp.gt.s32.totalorder 0, %v622
          %v624 = vsel %vm623, 0, %v622
          %v625 = vsub.s32 32, %v624
          %v626 = vshll.u32 %v617, %v624
          %v627 = vshrl.u32 %v609, %v625
          %v628 = vor.u32 %v626, %v627
          %v629 = vsub.s32 4294967266, %v624
          %v630 = vadd.s32 %v629, 127
          %v631 = vshll.u32 %v630, 23
          %v632 = vor.u32 4788187, %v631
          %v633 = vand.u32 2147483647, %v632
          %v635 = vcvt.s32.f32 %v628
          %v636 = vmul.f32 %v635, %v633
          %v637 = vxor.u32 %v636, 2147483648
          %v638 = vsel %vm555, %v637, %v636
          %v639 = vsub.s32 4, %v615
          %v640 = vsel %vm555, %v639, %v615
          %v641 = vsel %vm554, %v240, %v638
          %v642 = vsel %vm554, 0, %v640
          %v643 = vcosq.f32.pop %v641
          %v644 = vsinq.f32.pop %v641
          %vm645 = vweird.f32 %v240
          %v646 = vadd.s32 %v642, 3
          %v647 = vand.u32 %v646, 3
          %vm648 = vcmp.lt.s32.totalorder %v647, 2
          %vm649 = vcmp.eq.s32.totalorder %v647, 0
          %v650 = vxor.u32 %v644, 2147483648
          %v651 = vsel %vm649, %v643, %v650
          %vm652 = vcmp.eq.s32.totalorder %v647, 2
          %v653 = vxor.u32 %v643, 2147483648
          %v654 = vsel %vm652, %v653, %v644
          %v655 = vsel %vm648, %v651, %v654
          %v656 = vsel %vm645, nan, %v655
          %v657 = vand.u32 2147483647, %v237
          %vm658 = vcmp.le.f32.partialorder %v657, 0.7853982
          %vm659 = vcmp.lt.s32.totalorder %v237, 0
          %v660 = vand.u32 %v237, 2139095040
          %v661 = vshrl.u32 %v660, 23
          %v662 = vsub.s32 %v661, 127
          %v663 = vand.u32 2147483647, %v237
          %v664 = vand.u32 %v663, 8388607
          %v665 = vor.u32 %v664, 8388608
          %v666 = vsub.s32 0, %v665
          %v667 = vadd.s32 %v662, 1
          %vm668 = vcmp.gt.s32.totalorder %v667, 0
          %v669 = vsel %vm668, %v667, 0
          %v670 = vshrl.u32 %v669, 5
          %v671 = vand.u32 %v669, 31
          %v672 = vsub.s32 32, %v671
          %v673 = vshrl.u32 683565275, %v672
          %v674 = vshll.u32 683565275, %v671
          %v675 = vshrl.u32 2475754826, %v672
          %v676 = vor.u32 %v674, %v675
          %v677 = vshll.u32 2475754826, %v671
          %v678 = vshrl.u32 2131351028, %v672
          %v679 = vor.u32 %v677, %v678
          %v680 = vshll.u32 2131351028, %v671
          %v681 = vshrl.u32 2102212464, %v672
          %v682 = vor.u32 %v680, %v681
          %v683 = vshll.u32 2102212464, %v671
          %v684 = vshrl.u32 920167782, %v672
          %v685 = vor.u32 %v683, %v684
          %v686 = vshll.u32 920167782, %v671
          %v687 = vshrl.u32 1326507024, %v672
          %v688 = vor.u32 %v686, %v687
          %vm689 = vcmp.lt.s32.totalorder %v670, 1
          %vm690 = vcmp.lt.s32.totalorder %v670, 2
          %vm691 = vcmp.lt.s32.totalorder %v670, 3
          %vm692 = vcmp.lt.s32.totalorder %v670, 4
          %v693 = vsel %vm689, %v673, %v676
          %v694 = vsel %vm692, %v682, 2102212464
          %v695 = vsel %vm691, %v679, %v694
          %v696 = vsel %vm690, %v693, %v695
          %v697 = vsel %vm689, %v676, %v679
          %v698 = vsel %vm692, %v685, 920167782
          %v699 = vsel %vm691, %v682, %v698
          %v700 = vsel %vm690, %v697, %v699
          %v701 = vsel %vm689, %v679, %v682
          %v702 = vsel %vm692, %v688, 1326507024
          %v703 = vsel %vm691, %v685, %v702
          %v704 = vsel %vm690, %v701, %v703
          %v705 = vshll.u32 %v665, 8
          %v706 = vmul.u32.u64.compose %v705, %v704
          %v707 = vextract.low.u32 %v706
          %v708 = vextract.high.u32 %v706
          %v709 = vmul.u32.u64.compose %v705, %v700
          %v710 = vextract.low.u32 %v709
          %v711 = vextract.high.u32 %v709
          %v712 = vmul.u32 %v705, %v696
          %v713 = vadd.s32 %v708, %v710
          %vm714 = vc.u32 %v708, %v710
          %v715 = vadd.s32 %v711, 1
          %v716 = vsel %vm714, %v715, %v711
          %v717 = vadd.s32 %v712, %v716
          %v718 = vadd.s32 %v717, 536870912
          %v719 = vshrl.u32 %v718, 30
          %v720 = vshll.u32 %v719, 30
          %v721 = vsub.s32 %v717, %v720
          %vm722 = vcmp.lt.s32.totalorder %v721, 0
          %v723 = vsub.s32 0, %v721
          %v724 = vsel %vm722, %v723, %v721
          %v725 = vclz %v724
          %v726 = vsub.s32 %v725, 2
          %vm727 = vcmp.gt.s32.totalorder 0, %v726
          %v728 = vsel %vm727, 0, %v726
          %v729 = vsub.s32 32, %v728
          %v730 = vshll.u32 %v721, %v728
          %v731 = vshrl.u32 %v713, %v729
          %v732 = vor.u32 %v730, %v731
          %v733 = vsub.s32 4294967266, %v728
          %v734 = vadd.s32 %v733, 127
          %v735 = vshll.u32 %v734, 23
          %v736 = vor.u32 4788187, %v735
          %v737 = vand.u32 2147483647, %v736
          %v739 = vcvt.s32.f32 %v732
          %v740 = vmul.f32 %v739, %v737
          %v741 = vxor.u32 %v740, 2147483648
          %v742 = vsel %vm659, %v741, %v740
          %v743 = vsub.s32 4, %v719
          %v744 = vsel %vm659, %v743, %v719
          %v745 = vsel %vm658, %v237, %v742
          %v746 = vsel %vm658, 0, %v744
          %v747 = vcosq.f32.pop %v745
          %v748 = vsinq.f32.pop %v745
          %vm749 = vweird.f32 %v237
          %v750 = vand.u32 %v746, 3
          %vm751 = vcmp.lt.s32.totalorder %v750, 2
          %vm752 = vcmp.eq.s32.totalorder %v750, 0
          %v753 = vxor.u32 %v748, 2147483648
          %v754 = vsel %vm752, %v747, %v753
          %vm755 = vcmp.eq.s32.totalorder %v750, 2
          %v756 = vxor.u32 %v747, 2147483648
          %v757 = vsel %vm755, %v756, %v748
          %v758 = vsel %vm751, %v754, %v757
          %v759 = vsel %vm749, nan, %v758
          %v760 = vand.u32 2147483647, %v238
          %vm761 = vcmp.le.f32.partialorder %v760, 0.7853982
          %vm762 = vcmp.lt.s32.totalorder %v238, 0
          %v763 = vand.u32 %v238, 2139095040
          %v764 = vshrl.u32 %v763, 23
          %v765 = vsub.s32 %v764, 127
          %v766 = vand.u32 2147483647, %v238
          %v767 = vand.u32 %v766, 8388607
          %v768 = vor.u32 %v767, 8388608
          %v769 = vsub.s32 0, %v768
          %v770 = vadd.s32 %v765, 1
          %vm771 = vcmp.gt.s32.totalorder %v770, 0
          %v772 = vsel %vm771, %v770, 0
          %v773 = vshrl.u32 %v772, 5
          %v774 = vand.u32 %v772, 31
          %v775 = vsub.s32 32, %v774
          %v776 = vshrl.u32 683565275, %v775
          %v777 = vshll.u32 683565275, %v774
          %v778 = vshrl.u32 2475754826, %v775
          %v779 = vor.u32 %v777, %v778
          %v780 = vshll.u32 2475754826, %v774
          %v781 = vshrl.u32 2131351028, %v775
          %v782 = vor.u32 %v780, %v781
          %v783 = vshll.u32 2131351028, %v774
          %v784 = vshrl.u32 2102212464, %v775
          %v785 = vor.u32 %v783, %v784
          %v786 = vshll.u32 2102212464, %v774
          %v787 = vshrl.u32 920167782, %v775
          %v788 = vor.u32 %v786, %v787
          %v789 = vshll.u32 920167782, %v774
          %v790 = vshrl.u32 1326507024, %v775
          %v791 = vor.u32 %v789, %v790
          %vm792 = vcmp.lt.s32.totalorder %v773, 1
          %vm793 = vcmp.lt.s32.totalorder %v773, 2
          %vm794 = vcmp.lt.s32.totalorder %v773, 3
          %vm795 = vcmp.lt.s32.totalorder %v773, 4
          %v796 = vsel %vm792, %v776, %v779
          %v797 = vsel %vm795, %v785, 2102212464
          %v798 = vsel %vm794, %v782, %v797
          %v799 = vsel %vm793, %v796, %v798
          %v800 = vsel %vm792, %v779, %v782
          %v801 = vsel %vm795, %v788, 920167782
          %v802 = vsel %vm794, %v785, %v801
          %v803 = vsel %vm793, %v800, %v802
          %v804 = vsel %vm792, %v782, %v785
          %v805 = vsel %vm795, %v791, 1326507024
          %v806 = vsel %vm794, %v788, %v805
          %v807 = vsel %vm793, %v804, %v806
          %v808 = vshll.u32 %v768, 8
          %v809 = vmul.u32.u64.compose %v808, %v807
          %v810 = vextract.low.u32 %v809
          %v811 = vextract.high.u32 %v809
          %v812 = vmul.u32.u64.compose %v808, %v803
          %v813 = vextract.low.u32 %v812
          %v814 = vextract.high.u32 %v812
          %v815 = vmul.u32 %v808, %v799
          %v816 = vadd.s32 %v811, %v813
          %vm817 = vc.u32 %v811, %v813
          %v818 = vadd.s32 %v814, 1
          %v819 = vsel %vm817, %v818, %v814
          %v820 = vadd.s32 %v815, %v819
          %v821 = vadd.s32 %v820, 536870912
          %v822 = vshrl.u32 %v821, 30
          %v823 = vshll.u32 %v822, 30
          %v824 = vsub.s32 %v820, %v823
          %vm825 = vcmp.lt.s32.totalorder %v824, 0
          %v826 = vsub.s32 0, %v824
          %v827 = vsel %vm825, %v826, %v824
          %v828 = vclz %v827
          %v829 = vsub.s32 %v828, 2
          %vm830 = vcmp.gt.s32.totalorder 0, %v829
          %v831 = vsel %vm830, 0, %v829
          %v832 = vsub.s32 32, %v831
          %v833 = vshll.u32 %v824, %v831
          %v834 = vshrl.u32 %v816, %v832
          %v835 = vor.u32 %v833, %v834
          %v836 = vsub.s32 4294967266, %v831
          %v837 = vadd.s32 %v836, 127
          %v838 = vshll.u32 %v837, 23
          %v839 = vor.u32 4788187, %v838
          %v840 = vand.u32 2147483647, %v839
          %v842 = vcvt.s32.f32 %v835
          %v843 = vmul.f32 %v842, %v840
          %v844 = vxor.u32 %v843, 2147483648
          %v845 = vsel %vm762, %v844, %v843
          %v846 = vsub.s32 4, %v822
          %v847 = vsel %vm762, %v846, %v822
          %v848 = vsel %vm761, %v238, %v845
          %v849 = vsel %vm761, 0, %v847
          %v850 = vcosq.f32.pop %v848
          %v851 = vsinq.f32.pop %v848
          %vm852 = vweird.f32 %v238
          %v853 = vand.u32 %v849, 3
          %vm854 = vcmp.lt.s32.totalorder %v853, 2
          %vm855 = vcmp.eq.s32.totalorder %v853, 0
          %v856 = vxor.u32 %v851, 2147483648
          %v857 = vsel %vm855, %v850, %v856
          %vm858 = vcmp.eq.s32.totalorder %v853, 2
          %v859 = vxor.u32 %v850, 2147483648
          %v860 = vsel %vm858, %v859, %v851
          %v861 = vsel %vm854, %v857, %v860
          %v862 = vsel %vm852, nan, %v861
          %v863 = vand.u32 2147483647, %v239
          %vm864 = vcmp.le.f32.partialorder %v863, 0.7853982
          %vm865 = vcmp.lt.s32.totalorder %v239, 0
          %v866 = vand.u32 %v239, 2139095040
          %v867 = vshrl.u32 %v866, 23
          %v868 = vsub.s32 %v867, 127
          %v869 = vand.u32 2147483647, %v239
          %v870 = vand.u32 %v869, 8388607
          %v871 = vor.u32 %v870, 8388608
          %v872 = vsub.s32 0, %v871
          %v873 = vadd.s32 %v868, 1
          %vm874 = vcmp.gt.s32.totalorder %v873, 0
          %v875 = vsel %vm874, %v873, 0
          %v876 = vshrl.u32 %v875, 5
          %v877 = vand.u32 %v875, 31
          %v878 = vsub.s32 32, %v877
          %v879 = vshrl.u32 683565275, %v878
          %v880 = vshll.u32 683565275, %v877
          %v881 = vshrl.u32 2475754826, %v878
          %v882 = vor.u32 %v880, %v881
          %v883 = vshll.u32 2475754826, %v877
          %v884 = vshrl.u32 2131351028, %v878
          %v885 = vor.u32 %v883, %v884
          %v886 = vshll.u32 2131351028, %v877
          %v887 = vshrl.u32 2102212464, %v878
          %v888 = vor.u32 %v886, %v887
          %v889 = vshll.u32 2102212464, %v877
          %v890 = vshrl.u32 920167782, %v878
          %v891 = vor.u32 %v889, %v890
          %v892 = vshll.u32 920167782, %v877
          %v893 = vshrl.u32 1326507024, %v878
          %v894 = vor.u32 %v892, %v893
          %vm895 = vcmp.lt.s32.totalorder %v876, 1
          %vm896 = vcmp.lt.s32.totalorder %v876, 2
          %vm897 = vcmp.lt.s32.totalorder %v876, 3
          %vm898 = vcmp.lt.s32.totalorder %v876, 4
          %v899 = vsel %vm895, %v879, %v882
          %v900 = vsel %vm898, %v888, 2102212464
          %v901 = vsel %vm897, %v885, %v900
          %v902 = vsel %vm896, %v899, %v901
          %v903 = vsel %vm895, %v882, %v885
          %v904 = vsel %vm898, %v891, 920167782
          %v905 = vsel %vm897, %v888, %v904
          %v906 = vsel %vm896, %v903, %v905
          %v907 = vsel %vm895, %v885, %v888
          %v908 = vsel %vm898, %v894, 1326507024
          %v909 = vsel %vm897, %v891, %v908
          %v910 = vsel %vm896, %v907, %v909
          %v911 = vshll.u32 %v871, 8
          %v912 = vmul.u32.u64.compose %v911, %v910
          %v913 = vextract.low.u32 %v912
          %v914 = vextract.high.u32 %v912
          %v915 = vmul.u32.u64.compose %v911, %v906
          %v916 = vextract.low.u32 %v915
          %v917 = vextract.high.u32 %v915
          %v918 = vmul.u32 %v911, %v902
          %v919 = vadd.s32 %v914, %v916
          %vm920 = vc.u32 %v914, %v916
          %v921 = vadd.s32 %v917, 1
          %v922 = vsel %vm920, %v921, %v917
          %v923 = vadd.s32 %v918, %v922
          %v924 = vadd.s32 %v923, 536870912
          %v925 = vshrl.u32 %v924, 30
          %v926 = vshll.u32 %v925, 30
          %v927 = vsub.s32 %v923, %v926
          %vm928 = vcmp.lt.s32.totalorder %v927, 0
          %v929 = vsub.s32 0, %v927
          %v930 = vsel %vm928, %v929, %v927
          %v931 = vclz %v930
          %v932 = vsub.s32 %v931, 2
          %vm933 = vcmp.gt.s32.totalorder 0, %v932
          %v934 = vsel %vm933, 0, %v932
          %v935 = vsub.s32 32, %v934
          %v936 = vshll.u32 %v927, %v934
          %v937 = vshrl.u32 %v919, %v935
          %v938 = vor.u32 %v936, %v937
          %v939 = vsub.s32 4294967266, %v934
          %v940 = vadd.s32 %v939, 127
          %v941 = vshll.u32 %v940, 23
          %v942 = vor.u32 4788187, %v941
          %v943 = vand.u32 2147483647, %v942
          %v945 = vcvt.s32.f32 %v938
          %v946 = vmul.f32 %v945, %v943
          %v947 = vxor.u32 %v946, 2147483648
          %v948 = vsel %vm865, %v947, %v946
          %v949 = vsub.s32 4, %v925
          %v950 = vsel %vm865, %v949, %v925
          %v951 = vsel %vm864, %v239, %v948
          %v952 = vsel %vm864, 0, %v950
          %v953 = vcosq.f32.pop %v951
          %v954 = vsinq.f32.pop %v951
          %vm955 = vweird.f32 %v239
          %v956 = vand.u32 %v952, 3
          %vm957 = vcmp.lt.s32.totalorder %v956, 2
          %vm958 = vcmp.eq.s32.totalorder %v956, 0
          %v959 = vxor.u32 %v954, 2147483648
          %v960 = vsel %vm958, %v953, %v959
          %vm961 = vcmp.eq.s32.totalorder %v956, 2
          %v962 = vxor.u32 %v953, 2147483648
          %v963 = vsel %vm961, %v962, %v954
          %v964 = vsel %vm957, %v960, %v963
          %v965 = vsel %vm955, nan, %v964
          %v966 = vand.u32 2147483647, %v240
          %vm967 = vcmp.le.f32.partialorder %v966, 0.7853982
          %vm968 = vcmp.lt.s32.totalorder %v240, 0
          %v969 = vand.u32 %v240, 2139095040
          %v970 = vshrl.u32 %v969, 23
          %v971 = vsub.s32 %v970, 127
          %v972 = vand.u32 2147483647, %v240
          %v973 = vand.u32 %v972, 8388607
          %v974 = vor.u32 %v973, 8388608
          %v975 = vsub.s32 0, %v974
          %v976 = vadd.s32 %v971, 1
          %vm977 = vcmp.gt.s32.totalorder %v976, 0
          %v978 = vsel %vm977, %v976, 0
          %v979 = vshrl.u32 %v978, 5
          %v980 = vand.u32 %v978, 31
          %v981 = vsub.s32 32, %v980
          %v982 = vshrl.u32 683565275, %v981
          %v983 = vshll.u32 683565275, %v980
          %v984 = vshrl.u32 2475754826, %v981
          %v985 = vor.u32 %v983, %v984
          %v986 = vshll.u32 2475754826, %v980
          %v987 = vshrl.u32 2131351028, %v981
          %v988 = vor.u32 %v986, %v987
          %v989 = vshll.u32 2131351028, %v980
          %v990 = vshrl.u32 2102212464, %v981
          %v991 = vor.u32 %v989, %v990
          %v992 = vshll.u32 2102212464, %v980
          %v993 = vshrl.u32 920167782, %v981
          %v994 = vor.u32 %v992, %v993
          %v995 = vshll.u32 920167782, %v980
          %v996 = vshrl.u32 1326507024, %v981
          %v997 = vor.u32 %v995, %v996
          %vm998 = vcmp.lt.s32.totalorder %v979, 1
          %vm999 = vcmp.lt.s32.totalorder %v979, 2
          %vm1000 = vcmp.lt.s32.totalorder %v979, 3
          %vm1001 = vcmp.lt.s32.totalorder %v979, 4
          %v1002 = vsel %vm998, %v982, %v985
          %v1003 = vsel %vm1001, %v991, 2102212464
          %v1004 = vsel %vm1000, %v988, %v1003
          %v1005 = vsel %vm999, %v1002, %v1004
          %v1006 = vsel %vm998, %v985, %v988
          %v1007 = vsel %vm1001, %v994, 920167782
          %v1008 = vsel %vm1000, %v991, %v1007
          %v1009 = vsel %vm999, %v1006, %v1008
          %v1010 = vsel %vm998, %v988, %v991
          %v1011 = vsel %vm1001, %v997, 1326507024
          %v1012 = vsel %vm1000, %v994, %v1011
          %v1013 = vsel %vm999, %v1010, %v1012
          %v1014 = vshll.u32 %v974, 8
          %v1015 = vmul.u32.u64.compose %v1014, %v1013
          %v1016 = vextract.low.u32 %v1015
          %v1017 = vextract.high.u32 %v1015
          %v1018 = vmul.u32.u64.compose %v1014, %v1009
          %v1019 = vextract.low.u32 %v1018
          %v1020 = vextract.high.u32 %v1018
          %v1021 = vmul.u32 %v1014, %v1005
          %v1022 = vadd.s32 %v1017, %v1019
          %vm1023 = vc.u32 %v1017, %v1019
          %v1024 = vadd.s32 %v1020, 1
          %v1025 = vsel %vm1023, %v1024, %v1020
          %v1026 = vadd.s32 %v1021, %v1025
          %v1027 = vadd.s32 %v1026, 536870912
          %v1028 = vshrl.u32 %v1027, 30
          %v1029 = vshll.u32 %v1028, 30
          %v1030 = vsub.s32 %v1026, %v1029
          %vm1031 = vcmp.lt.s32.totalorder %v1030, 0
          %v1032 = vsub.s32 0, %v1030
          %v1033 = vsel %vm1031, %v1032, %v1030
          %v1034 = vclz %v1033
          %v1035 = vsub.s32 %v1034, 2
          %vm1036 = vcmp.gt.s32.totalorder 0, %v1035
          %v1037 = vsel %vm1036, 0, %v1035
          %v1038 = vsub.s32 32, %v1037
          %v1039 = vshll.u32 %v1030, %v1037
          %v1040 = vshrl.u32 %v1022, %v1038
          %v1041 = vor.u32 %v1039, %v1040
          %v1042 = vsub.s32 4294967266, %v1037
          %v1043 = vadd.s32 %v1042, 127
          %v1044 = vshll.u32 %v1043, 23
          %v1045 = vor.u32 4788187, %v1044
          %v1046 = vand.u32 2147483647, %v1045
          %v1048 = vcvt.s32.f32 %v1041
          %v1049 = vmul.f32 %v1048, %v1046
          %v1050 = vxor.u32 %v1049, 2147483648
          %v1051 = vsel %vm968, %v1050, %v1049
          %v1052 = vsub.s32 4, %v1028
          %v1053 = vsel %vm968, %v1052, %v1028
          %v1054 = vsel %vm967, %v240, %v1051
          %v1055 = vsel %vm967, 0, %v1053
          %v1056 = vcosq.f32.pop %v1054
          %v1057 = vsinq.f32.pop %v1054
          %vm1058 = vweird.f32 %v240
          %v1059 = vand.u32 %v1055, 3
          %vm1060 = vcmp.lt.s32.totalorder %v1059, 2
          %vm1061 = vcmp.eq.s32.totalorder %v1059, 0
          %v1062 = vxor.u32 %v1057, 2147483648
          %v1063 = vsel %vm1061, %v1056, %v1062
          %vm1064 = vcmp.eq.s32.totalorder %v1059, 2
          %v1065 = vxor.u32 %v1056, 2147483648
          %v1066 = vsel %vm1064, %v1065, %v1057
          %v1067 = vsel %vm1060, %v1063, %v1066
          %v1068 = vsel %vm1058, nan, %v1067
          %s1069 = sld [smem:[#allocation2]]
          %s1070 = sld [smem:[#allocation2 + $0x51]]
          %v1071 = vstv %s1069
          %v1072 = vmul.f32 %v1071, %v344
          %v1073 = vmul.f32 %v1071, %v448
          %v1074 = vmul.f32 %v1071, %v552
          %v1075 = vmul.f32 %v1071, %v656
          %v1076 = vadd.f32 %v1072, 0.0
          %v1077 = vadd.f32 %v1073, 0.0
          %v1078 = vadd.f32 %v1074, 0.0
          %v1079 = vadd.f32 %v1075, 0.0
          %v1080 = vstv %s1070
          %v1081 = vmul.f32 %v1080, %v759
          %v1082 = vmul.f32 %v1080, %v862
          %v1083 = vmul.f32 %v1080, %v965
          %v1084 = vmul.f32 %v1080, %v1068
          %v1085 = vadd.f32 %v1076, %v1081
          %v1086 = vadd.f32 %v1077, %v1082
          %v1087 = vadd.f32 %v1078, %v1083
          %v1088 = vadd.f32 %v1079, %v1084
          %s1089 = sld [smem:[#allocation2 + $0x3]]
          %s1090 = sld [smem:[#allocation2 + $0x54]]
          %v1091 = vstv %s1089
          %v1092 = vmul.f32 %v1091, %v344
          %v1093 = vmul.f32 %v1091, %v448
          %v1094 = vmul.f32 %v1091, %v552
          %v1095 = vmul.f32 %v1091, %v656
          %v1096 = vadd.f32 %v1092, 0.0
          %v1097 = vadd.f32 %v1093, 0.0
          %v1098 = vadd.f32 %v1094, 0.0
          %v1099 = vadd.f32 %v1095, 0.0
          %v1100 = vstv %s1090
          %v1101 = vmul.f32 %v1100, %v759
          %v1102 = vmul.f32 %v1100, %v862
          %v1103 = vmul.f32 %v1100, %v965
          %v1104 = vmul.f32 %v1100, %v1068
          %v1105 = vadd.f32 %v1096, %v1101
          %v1106 = vadd.f32 %v1097, %v1102
          %v1107 = vadd.f32 %v1098, %v1103
          %v1108 = vadd.f32 %v1099, %v1104
          %s1109 = sld [smem:[#allocation2 + $0x6]]
          %s1110 = sld [smem:[#allocation2 + $0x57]]
          %v1111 = vstv %s1109
          %v1112 = vmul.f32 %v1111, %v344
          %v1113 = vmul.f32 %v1111, %v448
          %v1114 = vmul.f32 %v1111, %v552
          %v1115 = vmul.f32 %v1111, %v656
          %v1116 = vadd.f32 %v1112, 0.0
          %v1117 = vadd.f32 %v1113, 0.0
          %v1118 = vadd.f32 %v1114, 0.0
          %v1119 = vadd.f32 %v1115, 0.0
          %v1120 = vstv %s1110
          %v1121 = vmul.f32 %v1120, %v759
          %v1122 = vmul.f32 %v1120, %v862
          %v1123 = vmul.f32 %v1120, %v965
          %v1124 = vmul.f32 %v1120, %v1068
          %v1125 = vadd.f32 %v1116, %v1121
          %v1126 = vadd.f32 %v1117, %v1122
          %v1127 = vadd.f32 %v1118, %v1123
          %v1128 = vadd.f32 %v1119, %v1124
          %v1129 = vmul.f32 %v344, %v759
          %v1130 = vmul.f32 %v448, %v862
          %v1131 = vmul.f32 %v552, %v965
          %v1132 = vmul.f32 %v656, %v1068
          %v1133 = vmul.f32 %v1129, 2.0
          %v1134 = vmul.f32 %v1130, 2.0
          %v1135 = vmul.f32 %v1131, 2.0
          %v1136 = vmul.f32 %v1132, 2.0
          %v1137 = vmul.f32 %v344, %v344
          %v1138 = vmul.f32 %v448, %v448
          %v1139 = vmul.f32 %v552, %v552
          %v1140 = vmul.f32 %v656, %v656
          %v1141 = vmul.f32 %v1137, 2.0
          %v1142 = vmul.f32 %v1138, 2.0
          %v1143 = vmul.f32 %v1139, 2.0
          %v1144 = vmul.f32 %v1140, 2.0
          %v1145 = vsub.f32 1.0, %v1141
          %v1146 = vsub.f32 1.0, %v1142
          %v1147 = vsub.f32 1.0, %v1143
          %v1148 = vsub.f32 1.0, %v1144
          %s1149 = sld [smem:[#allocation2 + $0x9]]
          %s1150 = sld [smem:[#allocation2 + $0x5a]]
          %v1151 = vstv %s1149
          %v1152 = vmul.f32 %v1151, %v1133
          %v1153 = vmul.f32 %v1151, %v1134
          %v1154 = vmul.f32 %v1151, %v1135
          %v1155 = vmul.f32 %v1151, %v1136
          %v1156 = vadd.f32 %v1085, %v1152
          %v1157 = vadd.f32 %v1086, %v1153
          %v1158 = vadd.f32 %v1087, %v1154
          %v1159 = vadd.f32 %v1088, %v1155
          %v1160 = vstv %s1150
          %v1161 = vmul.f32 %v1160, %v1145
          %v1162 = vmul.f32 %v1160, %v1146
          %v1163 = vmul.f32 %v1160, %v1147
          %v1164 = vmul.f32 %v1160, %v1148
          %v1165 = vadd.f32 %v1156, %v1161
          %v1166 = vadd.f32 %v1157, %v1162
          %v1167 = vadd.f32 %v1158, %v1163
          %v1168 = vadd.f32 %v1159, %v1164
          %s1169 = sld [smem:[#allocation2 + $0xc]]
          %s1170 = sld [smem:[#allocation2 + $0x5d]]
          %v1171 = vstv %s1169
          %v1172 = vmul.f32 %v1171, %v1133
          %v1173 = vmul.f32 %v1171, %v1134
          %v1174 = vmul.f32 %v1171, %v1135
          %v1175 = vmul.f32 %v1171, %v1136
          %v1176 = vadd.f32 %v1105, %v1172
          %v1177 = vadd.f32 %v1106, %v1173
          %v1178 = vadd.f32 %v1107, %v1174
          %v1179 = vadd.f32 %v1108, %v1175
          %v1180 = vstv %s1170
          %v1181 = vmul.f32 %v1180, %v1145
          %v1182 = vmul.f32 %v1180, %v1146
          %v1183 = vmul.f32 %v1180, %v1147
          %v1184 = vmul.f32 %v1180, %v1148
          %v1185 = vadd.f32 %v1176, %v1181
          %v1186 = vadd.f32 %v1177, %v1182
          %v1187 = vadd.f32 %v1178, %v1183
          %v1188 = vadd.f32 %v1179, %v1184
          %s1189 = sld [smem:[#allocation2 + $0xf]]
          %s1190 = sld [smem:[#allocation2 + $0x60]]
          %v1191 = vstv %s1189
          %v1192 = vmul.f32 %v1191, %v1133
          %v1193 = vmul.f32 %v1191, %v1134
          %v1194 = vmul.f32 %v1191, %v1135
          %v1195 = vmul.f32 %v1191, %v1136
          %v1196 = vadd.f32 %v1125, %v1192
          %v1197 = vadd.f32 %v1126, %v1193
          %v1198 = vadd.f32 %v1127, %v1194
          %v1199 = vadd.f32 %v1128, %v1195
          %v1200 = vstv %s1190
          %v1201 = vmul.f32 %v1200, %v1145
          %v1202 = vmul.f32 %v1200, %v1146
          %v1203 = vmul.f32 %v1200, %v1147
          %v1204 = vmul.f32 %v1200, %v1148
          %v1205 = vadd.f32 %v1196, %v1201
          %v1206 = vadd.f32 %v1197, %v1202
          %v1207 = vadd.f32 %v1198, %v1203
          %v1208 = vadd.f32 %v1199, %v1204
          %v1209 = vmul.f32 %v1133, %v1145
          %v1210 = vmul.f32 %v1134, %v1146
          %v1211 = vmul.f32 %v1135, %v1147
          %v1212 = vmul.f32 %v1136, %v1148
          %v1213 = vmul.f32 %v1209, 2.0
          %v1214 = vmul.f32 %v1210, 2.0
          %v1215 = vmul.f32 %v1211, 2.0
          %v1216 = vmul.f32 %v1212, 2.0
          %v1217 = vmul.f32 %v1133, %v1133
          %v1218 = vmul.f32 %v1134, %v1134
          %v1219 = vmul.f32 %v1135, %v1135
          %v1220 = vmul.f32 %v1136, %v1136
          %v1221 = vmul.f32 %v1217, 2.0
          %v1222 = vmul.f32 %v1218, 2.0
          %v1223 = vmul.f32 %v1219, 2.0
          %v1224 = vmul.f32 %v1220, 2.0
          %v1225 = vsub.f32 1.0, %v1221
          %v1226 = vsub.f32 1.0, %v1222
          %v1227 = vsub.f32 1.0, %v1223
          %v1228 = vsub.f32 1.0, %v1224
          %s1229 = sld [smem:[#allocation2 + $0x12]]
          %s1230 = sld [smem:[#allocation2 + $0x63]]
          %v1231 = vstv %s1229
          %v1232 = vmul.f32 %v1231, %v1213
          %v1233 = vmul.f32 %v1231, %v1214
          %v1234 = vmul.f32 %v1231, %v1215
          %v1235 = vmul.f32 %v1231, %v1216
          %v1236 = vadd.f32 %v1165, %v1232
          %v1237 = vadd.f32 %v1166, %v1233
          %v1238 = vadd.f32 %v1167, %v1234
          %v1239 = vadd.f32 %v1168, %v1235
          %v1240 = vstv %s1230
          %v1241 = vmul.f32 %v1240, %v1225
          %v1242 = vmul.f32 %v1240, %v1226
          %v1243 = vmul.f32 %v1240, %v1227
          %v1244 = vmul.f32 %v1240, %v1228
          %v1245 = vadd.f32 %v1236, %v1241
          %v1246 = vadd.f32 %v1237, %v1242
          %v1247 = vadd.f32 %v1238, %v1243
          %v1248 = vadd.f32 %v1239, %v1244
          %s1249 = sld [smem:[#allocation2 + $0x15]]
          %s1250 = sld [smem:[#allocation2 + $0x66]]
          %v1251 = vstv %s1249
          %v1252 = vmul.f32 %v1251, %v1213
          %v1253 = vmul.f32 %v1251, %v1214
          %v1254 = vmul.f32 %v1251, %v1215
          %v1255 = vmul.f32 %v1251, %v1216
          %v1256 = vadd.f32 %v1185, %v1252
          %v1257 = vadd.f32 %v1186, %v1253
          %v1258 = vadd.f32 %v1187, %v1254
          %v1259 = vadd.f32 %v1188, %v1255
          %v1260 = vstv %s1250
          %v1261 = vmul.f32 %v1260, %v1225
          %v1262 = vmul.f32 %v1260, %v1226
          %v1263 = vmul.f32 %v1260, %v1227
          %v1264 = vmul.f32 %v1260, %v1228
          %v1265 = vadd.f32 %v1256, %v1261
          %v1266 = vadd.f32 %v1257, %v1262
          %v1267 = vadd.f32 %v1258, %v1263
          %v1268 = vadd.f32 %v1259, %v1264
          %s1269 = sld [smem:[#allocation2 + $0x18]]
          %s1270 = sld [smem:[#allocation2 + $0x69]]
          %v1271 = vstv %s1269
          %v1272 = vmul.f32 %v1271, %v1213
          %v1273 = vmul.f32 %v1271, %v1214
          %v1274 = vmul.f32 %v1271, %v1215
          %v1275 = vmul.f32 %v1271, %v1216
          %v1276 = vadd.f32 %v1205, %v1272
          %v1277 = vadd.f32 %v1206, %v1273
          %v1278 = vadd.f32 %v1207, %v1274
          %v1279 = vadd.f32 %v1208, %v1275
          %v1280 = vstv %s1270
          %v1281 = vmul.f32 %v1280, %v1225
          %v1282 = vmul.f32 %v1280, %v1226
          %v1283 = vmul.f32 %v1280, %v1227
          %v1284 = vmul.f32 %v1280, %v1228
          %v1285 = vadd.f32 %v1276, %v1281
          %v1286 = vadd.f32 %v1277, %v1282
          %v1287 = vadd.f32 %v1278, %v1283
          %v1288 = vadd.f32 %v1279, %v1284
          %v1289 = vmul.f32 %v1213, %v1225
          %v1290 = vmul.f32 %v1214, %v1226
          %v1291 = vmul.f32 %v1215, %v1227
          %v1292 = vmul.f32 %v1216, %v1228
          %v1293 = vmul.f32 %v1289, 2.0
          %v1294 = vmul.f32 %v1290, 2.0
          %v1295 = vmul.f32 %v1291, 2.0
          %v1296 = vmul.f32 %v1292, 2.0
          %v1297 = vmul.f32 %v1213, %v1213
          %v1298 = vmul.f32 %v1214, %v1214
          %v1299 = vmul.f32 %v1215, %v1215
          %v1300 = vmul.f32 %v1216, %v1216
          %v1301 = vmul.f32 %v1297, 2.0
          %v1302 = vmul.f32 %v1298, 2.0
          %v1303 = vmul.f32 %v1299, 2.0
          %v1304 = vmul.f32 %v1300, 2.0
          %v1305 = vsub.f32 1.0, %v1301
          %v1306 = vsub.f32 1.0, %v1302
          %v1307 = vsub.f32 1.0, %v1303
          %v1308 = vsub.f32 1.0, %v1304
          %s1309 = sld [smem:[#allocation2 + $0x1b]]
          %s1310 = sld [smem:[#allocation2 + $0x6c]]
          %v1311 = vstv %s1309
          %v1312 = vmul.f32 %v1311, %v1293
          %v1313 = vmul.f32 %v1311, %v1294
          %v1314 = vmul.f32 %v1311, %v1295
          %v1315 = vmul.f32 %v1311, %v1296
          %v1316 = vadd.f32 %v1245, %v1312
          %v1317 = vadd.f32 %v1246, %v1313
          %v1318 = vadd.f32 %v1247, %v1314
          %v1319 = vadd.f32 %v1248, %v1315
          %v1320 = vstv %s1310
          %v1321 = vmul.f32 %v1320, %v1305
          %v1322 = vmul.f32 %v1320, %v1306
          %v1323 = vmul.f32 %v1320, %v1307
          %v1324 = vmul.f32 %v1320, %v1308
          %v1325 = vadd.f32 %v1316, %v1321
          %v1326 = vadd.f32 %v1317, %v1322
          %v1327 = vadd.f32 %v1318, %v1323
          %v1328 = vadd.f32 %v1319, %v1324
          %s1329 = sld [smem:[#allocation2 + $0x1e]]
          %s1330 = sld [smem:[#allocation2 + $0x6f]]
          %v1331 = vstv %s1329
          %v1332 = vmul.f32 %v1331, %v1293
          %v1333 = vmul.f32 %v1331, %v1294
          %v1334 = vmul.f32 %v1331, %v1295
          %v1335 = vmul.f32 %v1331, %v1296
          %v1336 = vadd.f32 %v1265, %v1332
          %v1337 = vadd.f32 %v1266, %v1333
          %v1338 = vadd.f32 %v1267, %v1334
          %v1339 = vadd.f32 %v1268, %v1335
          %v1340 = vstv %s1330
          %v1341 = vmul.f32 %v1340, %v1305
          %v1342 = vmul.f32 %v1340, %v1306
          %v1343 = vmul.f32 %v1340, %v1307
          %v1344 = vmul.f32 %v1340, %v1308
          %v1345 = vadd.f32 %v1336, %v1341
          %v1346 = vadd.f32 %v1337, %v1342
          %v1347 = vadd.f32 %v1338, %v1343
          %v1348 = vadd.f32 %v1339, %v1344
          %s1349 = sld [smem:[#allocation2 + $0x21]]
          %s1350 = sld [smem:[#allocation2 + $0x72]]
          %v1351 = vstv %s1349
          %v1352 = vmul.f32 %v1351, %v1293
          %v1353 = vmul.f32 %v1351, %v1294
          %v1354 = vmul.f32 %v1351, %v1295
          %v1355 = vmul.f32 %v1351, %v1296
          %v1356 = vadd.f32 %v1285, %v1352
          %v1357 = vadd.f32 %v1286, %v1353
          %v1358 = vadd.f32 %v1287, %v1354
          %v1359 = vadd.f32 %v1288, %v1355
          %v1360 = vstv %s1350
          %v1361 = vmul.f32 %v1360, %v1305
          %v1362 = vmul.f32 %v1360, %v1306
          %v1363 = vmul.f32 %v1360, %v1307
          %v1364 = vmul.f32 %v1360, %v1308
          %v1365 = vadd.f32 %v1356, %v1361
          %v1366 = vadd.f32 %v1357, %v1362
          %v1367 = vadd.f32 %v1358, %v1363
          %v1368 = vadd.f32 %v1359, %v1364
          %v1369 = vmul.f32 %v1293, %v1305
          %v1370 = vmul.f32 %v1294, %v1306
          %v1371 = vmul.f32 %v1295, %v1307
          %v1372 = vmul.f32 %v1296, %v1308
          %v1373 = vmul.f32 %v1369, 2.0
          %v1374 = vmul.f32 %v1370, 2.0
          %v1375 = vmul.f32 %v1371, 2.0
          %v1376 = vmul.f32 %v1372, 2.0
          %v1377 = vmul.f32 %v1293, %v1293
          %v1378 = vmul.f32 %v1294, %v1294
          %v1379 = vmul.f32 %v1295, %v1295
          %v1380 = vmul.f32 %v1296, %v1296
          %v1381 = vmul.f32 %v1377, 2.0
          %v1382 = vmul.f32 %v1378, 2.0
          %v1383 = vmul.f32 %v1379, 2.0
          %v1384 = vmul.f32 %v1380, 2.0
          %v1385 = vsub.f32 1.0, %v1381
          %v1386 = vsub.f32 1.0, %v1382
          %v1387 = vsub.f32 1.0, %v1383
          %v1388 = vsub.f32 1.0, %v1384
          %s1389 = sld [smem:[#allocation2 + $0x24]]
          %s1390 = sld [smem:[#allocation2 + $0x75]]
          %v1391 = vstv %s1389
          %v1392 = vmul.f32 %v1391, %v1373
          %v1393 = vmul.f32 %v1391, %v1374
          %v1394 = vmul.f32 %v1391, %v1375
          %v1395 = vmul.f32 %v1391, %v1376
          %v1396 = vadd.f32 %v1325, %v1392
          %v1397 = vadd.f32 %v1326, %v1393
          %v1398 = vadd.f32 %v1327, %v1394
          %v1399 = vadd.f32 %v1328, %v1395
          %v1400 = vstv %s1390
          %v1401 = vmul.f32 %v1400, %v1385
          %v1402 = vmul.f32 %v1400, %v1386
          %v1403 = vmul.f32 %v1400, %v1387
          %v1404 = vmul.f32 %v1400, %v1388
          %v1405 = vadd.f32 %v1396, %v1401
          %v1406 = vadd.f32 %v1397, %v1402
          %v1407 = vadd.f32 %v1398, %v1403
          %v1408 = vadd.f32 %v1399, %v1404
          %s1409 = sld [smem:[#allocation2 + $0x27]]
          %s1410 = sld [smem:[#allocation2 + $0x78]]
          %v1411 = vstv %s1409
          %v1412 = vmul.f32 %v1411, %v1373
          %v1413 = vmul.f32 %v1411, %v1374
          %v1414 = vmul.f32 %v1411, %v1375
          %v1415 = vmul.f32 %v1411, %v1376
          %v1416 = vadd.f32 %v1345, %v1412
          %v1417 = vadd.f32 %v1346, %v1413
          %v1418 = vadd.f32 %v1347, %v1414
          %v1419 = vadd.f32 %v1348, %v1415
          %v1420 = vstv %s1410
          %v1421 = vmul.f32 %v1420, %v1385
          %v1422 = vmul.f32 %v1420, %v1386
          %v1423 = vmul.f32 %v1420, %v1387
          %v1424 = vmul.f32 %v1420, %v1388
          %v1425 = vadd.f32 %v1416, %v1421
          %v1426 = vadd.f32 %v1417, %v1422
          %v1427 = vadd.f32 %v1418, %v1423
          %v1428 = vadd.f32 %v1419, %v1424
          %s1429 = sld [smem:[#allocation2 + $0x2a]]
          %s1430 = sld [smem:[#allocation2 + $0x7b]]
          %v1431 = vstv %s1429
          %v1432 = vmul.f32 %v1431, %v1373
          %v1433 = vmul.f32 %v1431, %v1374
          %v1434 = vmul.f32 %v1431, %v1375
          %v1435 = vmul.f32 %v1431, %v1376
          %v1436 = vadd.f32 %v1365, %v1432
          %v1437 = vadd.f32 %v1366, %v1433
          %v1438 = vadd.f32 %v1367, %v1434
          %v1439 = vadd.f32 %v1368, %v1435
          %v1440 = vstv %s1430
          %v1441 = vmul.f32 %v1440, %v1385
          %v1442 = vmul.f32 %v1440, %v1386
          %v1443 = vmul.f32 %v1440, %v1387
          %v1444 = vmul.f32 %v1440, %v1388
          %v1445 = vadd.f32 %v1436, %v1441
          %v1446 = vadd.f32 %v1437, %v1442
          %v1447 = vadd.f32 %v1438, %v1443
          %v1448 = vadd.f32 %v1439, %v1444
          %v1449 = vmul.f32 %v1373, %v1385
          %v1450 = vmul.f32 %v1374, %v1386
          %v1451 = vmul.f32 %v1375, %v1387
          %v1452 = vmul.f32 %v1376, %v1388
          %v1453 = vmul.f32 %v1449, 2.0
          %v1454 = vmul.f32 %v1450, 2.0
          %v1455 = vmul.f32 %v1451, 2.0
          %v1456 = vmul.f32 %v1452, 2.0
          %v1457 = vmul.f32 %v1373, %v1373
          %v1458 = vmul.f32 %v1374, %v1374
          %v1459 = vmul.f32 %v1375, %v1375
          %v1460 = vmul.f32 %v1376, %v1376
          %v1461 = vmul.f32 %v1457, 2.0
          %v1462 = vmul.f32 %v1458, 2.0
          %v1463 = vmul.f32 %v1459, 2.0
          %v1464 = vmul.f32 %v1460, 2.0
          %v1465 = vsub.f32 1.0, %v1461
          %v1466 = vsub.f32 1.0, %v1462
          %v1467 = vsub.f32 1.0, %v1463
          %v1468 = vsub.f32 1.0, %v1464
          %s1469 = sld [smem:[#allocation2 + $0x2d]]
          %s1470 = sld [smem:[#allocation2 + $0x7e]]
          %v1471 = vstv %s1469
          %v1472 = vmul.f32 %v1471, %v1453
          %v1473 = vmul.f32 %v1471, %v1454
          %v1474 = vmul.f32 %v1471, %v1455
          %v1475 = vmul.f32 %v1471, %v1456
          %v1476 = vadd.f32 %v1405, %v1472
          %v1477 = vadd.f32 %v1406, %v1473
          %v1478 = vadd.f32 %v1407, %v1474
          %v1479 = vadd.f32 %v1408, %v1475
          %v1480 = vstv %s1470
          %v1481 = vmul.f32 %v1480, %v1465
          %v1482 = vmul.f32 %v1480, %v1466
          %v1483 = vmul.f32 %v1480, %v1467
          %v1484 = vmul.f32 %v1480, %v1468
          %v1485 = vadd.f32 %v1476, %v1481
          %v1486 = vadd.f32 %v1477, %v1482
          %v1487 = vadd.f32 %v1478, %v1483
          %v1488 = vadd.f32 %v1479, %v1484
          %s1489 = sld [smem:[#allocation2 + $0x30]]
          %s1490 = sld [smem:[#allocation2 + $0x81]]
          %v1491 = vstv %s1489
          %v1492 = vmul.f32 %v1491, %v1453
          %v1493 = vmul.f32 %v1491, %v1454
          %v1494 = vmul.f32 %v1491, %v1455
          %v1495 = vmul.f32 %v1491, %v1456
          %v1496 = vadd.f32 %v1425, %v1492
          %v1497 = vadd.f32 %v1426, %v1493
          %v1498 = vadd.f32 %v1427, %v1494
          %v1499 = vadd.f32 %v1428, %v1495
          %v1500 = vstv %s1490
          %v1501 = vmul.f32 %v1500, %v1465
          %v1502 = vmul.f32 %v1500, %v1466
          %v1503 = vmul.f32 %v1500, %v1467
          %v1504 = vmul.f32 %v1500, %v1468
          %v1505 = vadd.f32 %v1496, %v1501
          %v1506 = vadd.f32 %v1497, %v1502
          %v1507 = vadd.f32 %v1498, %v1503
          %v1508 = vadd.f32 %v1499, %v1504
          %s1509 = sld [smem:[#allocation2 + $0x33]]
          %s1510 = sld [smem:[#allocation2 + $0x84]]
          %v1511 = vstv %s1509
          %v1512 = vmul.f32 %v1511, %v1453
          %v1513 = vmul.f32 %v1511, %v1454
          %v1514 = vmul.f32 %v1511, %v1455
          %v1515 = vmul.f32 %v1511, %v1456
          %v1516 = vadd.f32 %v1445, %v1512
          %v1517 = vadd.f32 %v1446, %v1513
          %v1518 = vadd.f32 %v1447, %v1514
          %v1519 = vadd.f32 %v1448, %v1515
          %v1520 = vstv %s1510
          %v1521 = vmul.f32 %v1520, %v1465
          %v1522 = vmul.f32 %v1520, %v1466
          %v1523 = vmul.f32 %v1520, %v1467
          %v1524 = vmul.f32 %v1520, %v1468
          %v1525 = vadd.f32 %v1516, %v1521
          %v1526 = vadd.f32 %v1517, %v1522
          %v1527 = vadd.f32 %v1518, %v1523
          %v1528 = vadd.f32 %v1519, %v1524
          %v1529 = vmul.f32 %v1453, %v1465
          %v1530 = vmul.f32 %v1454, %v1466
          %v1531 = vmul.f32 %v1455, %v1467
          %v1532 = vmul.f32 %v1456, %v1468
          %v1533 = vmul.f32 %v1529, 2.0
          %v1534 = vmul.f32 %v1530, 2.0
          %v1535 = vmul.f32 %v1531, 2.0
          %v1536 = vmul.f32 %v1532, 2.0
          %v1537 = vmul.f32 %v1453, %v1453
          %v1538 = vmul.f32 %v1454, %v1454
          %v1539 = vmul.f32 %v1455, %v1455
          %v1540 = vmul.f32 %v1456, %v1456
          %v1541 = vmul.f32 %v1537, 2.0
          %v1542 = vmul.f32 %v1538, 2.0
          %v1543 = vmul.f32 %v1539, 2.0
          %v1544 = vmul.f32 %v1540, 2.0
          %v1545 = vsub.f32 1.0, %v1541
          %v1546 = vsub.f32 1.0, %v1542
          %v1547 = vsub.f32 1.0, %v1543
          %v1548 = vsub.f32 1.0, %v1544
          %s1549 = sld [smem:[#allocation2 + $0x36]]
          %s1550 = sld [smem:[#allocation2 + $0x87]]
          %v1551 = vstv %s1549
          %v1552 = vmul.f32 %v1551, %v1533
          %v1553 = vmul.f32 %v1551, %v1534
          %v1554 = vmul.f32 %v1551, %v1535
          %v1555 = vmul.f32 %v1551, %v1536
          %v1556 = vadd.f32 %v1485, %v1552
          %v1557 = vadd.f32 %v1486, %v1553
          %v1558 = vadd.f32 %v1487, %v1554
          %v1559 = vadd.f32 %v1488, %v1555
          %v1560 = vstv %s1550
          %v1561 = vmul.f32 %v1560, %v1545
          %v1562 = vmul.f32 %v1560, %v1546
          %v1563 = vmul.f32 %v1560, %v1547
          %v1564 = vmul.f32 %v1560, %v1548
          %v1565 = vadd.f32 %v1556, %v1561
          %v1566 = vadd.f32 %v1557, %v1562
          %v1567 = vadd.f32 %v1558, %v1563
          %v1568 = vadd.f32 %v1559, %v1564
          %s1569 = sld [smem:[#allocation2 + $0x39]]
          %s1570 = sld [smem:[#allocation2 + $0x8a]]
          %v1571 = vstv %s1569
          %v1572 = vmul.f32 %v1571, %v1533
          %v1573 = vmul.f32 %v1571, %v1534
          %v1574 = vmul.f32 %v1571, %v1535
          %v1575 = vmul.f32 %v1571, %v1536
          %v1576 = vadd.f32 %v1505, %v1572
          %v1577 = vadd.f32 %v1506, %v1573
          %v1578 = vadd.f32 %v1507, %v1574
          %v1579 = vadd.f32 %v1508, %v1575
          %v1580 = vstv %s1570
          %v1581 = vmul.f32 %v1580, %v1545
          %v1582 = vmul.f32 %v1580, %v1546
          %v1583 = vmul.f32 %v1580, %v1547
          %v1584 = vmul.f32 %v1580, %v1548
          %v1585 = vadd.f32 %v1576, %v1581
          %v1586 = vadd.f32 %v1577, %v1582
          %v1587 = vadd.f32 %v1578, %v1583
          %v1588 = vadd.f32 %v1579, %v1584
          %s1589 = sld [smem:[#allocation2 + $0x3c]]
          %s1590 = sld [smem:[#allocation2 + $0x8d]]
          %v1591 = vstv %s1589
          %v1592 = vmul.f32 %v1591, %v1533
          %v1593 = vmul.f32 %v1591, %v1534
          %v1594 = vmul.f32 %v1591, %v1535
          %v1595 = vmul.f32 %v1591, %v1536
          %v1596 = vadd.f32 %v1525, %v1592
          %v1597 = vadd.f32 %v1526, %v1593
          %v1598 = vadd.f32 %v1527, %v1594
          %v1599 = vadd.f32 %v1528, %v1595
          %v1600 = vstv %s1590
          %v1601 = vmul.f32 %v1600, %v1545
          %v1602 = vmul.f32 %v1600, %v1546
          %v1603 = vmul.f32 %v1600, %v1547
          %v1604 = vmul.f32 %v1600, %v1548
          %v1605 = vadd.f32 %v1596, %v1601
          %v1606 = vadd.f32 %v1597, %v1602
          %v1607 = vadd.f32 %v1598, %v1603
          %v1608 = vadd.f32 %v1599, %v1604
          %v1609 = vmul.f32 %v1533, %v1545
          %v1610 = vmul.f32 %v1534, %v1546
          %v1611 = vmul.f32 %v1535, %v1547
          %v1612 = vmul.f32 %v1536, %v1548
          %v1613 = vmul.f32 %v1609, 2.0
          %v1614 = vmul.f32 %v1610, 2.0
          %v1615 = vmul.f32 %v1611, 2.0
          %v1616 = vmul.f32 %v1612, 2.0
          %v1617 = vmul.f32 %v1533, %v1533
          %v1618 = vmul.f32 %v1534, %v1534
          %v1619 = vmul.f32 %v1535, %v1535
          %v1620 = vmul.f32 %v1536, %v1536
          %v1621 = vmul.f32 %v1617, 2.0
          %v1622 = vmul.f32 %v1618, 2.0
          %v1623 = vmul.f32 %v1619, 2.0
          %v1624 = vmul.f32 %v1620, 2.0
          %v1625 = vsub.f32 1.0, %v1621
          %v1626 = vsub.f32 1.0, %v1622
          %v1627 = vsub.f32 1.0, %v1623
          %v1628 = vsub.f32 1.0, %v1624
          %s1629 = sld [smem:[#allocation2 + $0x3f]]
          %s1630 = sld [smem:[#allocation2 + $0x90]]
          %v1631 = vstv %s1629
          %v1632 = vmul.f32 %v1631, %v1613
          %v1633 = vmul.f32 %v1631, %v1614
          %v1634 = vmul.f32 %v1631, %v1615
          %v1635 = vmul.f32 %v1631, %v1616
          %v1636 = vadd.f32 %v1565, %v1632
          %v1637 = vadd.f32 %v1566, %v1633
          %v1638 = vadd.f32 %v1567, %v1634
          %v1639 = vadd.f32 %v1568, %v1635
          %v1640 = vstv %s1630
          %v1641 = vmul.f32 %v1640, %v1625
          %v1642 = vmul.f32 %v1640, %v1626
          %v1643 = vmul.f32 %v1640, %v1627
          %v1644 = vmul.f32 %v1640, %v1628
          %v1645 = vadd.f32 %v1636, %v1641
          %v1646 = vadd.f32 %v1637, %v1642
          %v1647 = vadd.f32 %v1638, %v1643
          %v1648 = vadd.f32 %v1639, %v1644
          %s1649 = sld [smem:[#allocation2 + $0x42]]
          %s1650 = sld [smem:[#allocation2 + $0x93]]
          %v1651 = vstv %s1649
          %v1652 = vmul.f32 %v1651, %v1613
          %v1653 = vmul.f32 %v1651, %v1614
          %v1654 = vmul.f32 %v1651, %v1615
          %v1655 = vmul.f32 %v1651, %v1616
          %v1656 = vadd.f32 %v1585, %v1652
          %v1657 = vadd.f32 %v1586, %v1653
          %v1658 = vadd.f32 %v1587, %v1654
          %v1659 = vadd.f32 %v1588, %v1655
          %v1660 = vstv %s1650
          %v1661 = vmul.f32 %v1660, %v1625
          %v1662 = vmul.f32 %v1660, %v1626
          %v1663 = vmul.f32 %v1660, %v1627
          %v1664 = vmul.f32 %v1660, %v1628
          %v1665 = vadd.f32 %v1656, %v1661
          %v1666 = vadd.f32 %v1657, %v1662
          %v1667 = vadd.f32 %v1658, %v1663
          %v1668 = vadd.f32 %v1659, %v1664
          %s1669 = sld [smem:[#allocation2 + $0x45]]
          %s1670 = sld [smem:[#allocation2 + $0x96]]
          %v1671 = vstv %s1669
          %v1672 = vmul.f32 %v1671, %v1613
          %v1673 = vmul.f32 %v1671, %v1614
          %v1674 = vmul.f32 %v1671, %v1615
          %v1675 = vmul.f32 %v1671, %v1616
          %v1676 = vadd.f32 %v1605, %v1672
          %v1677 = vadd.f32 %v1606, %v1673
          %v1678 = vadd.f32 %v1607, %v1674
          %v1679 = vadd.f32 %v1608, %v1675
          %v1680 = vstv %s1670
          %v1681 = vmul.f32 %v1680, %v1625
          %v1682 = vmul.f32 %v1680, %v1626
          %v1683 = vmul.f32 %v1680, %v1627
          %v1684 = vmul.f32 %v1680, %v1628
          %v1685 = vadd.f32 %v1676, %v1681
          %v1686 = vadd.f32 %v1677, %v1682
          %v1687 = vadd.f32 %v1678, %v1683
          %v1688 = vadd.f32 %v1679, %v1684
          %v1689 = vmul.f32 %v1613, %v1625
          %v1690 = vmul.f32 %v1614, %v1626
          %v1691 = vmul.f32 %v1615, %v1627
          %v1692 = vmul.f32 %v1616, %v1628
          %v1693 = vmul.f32 %v1689, 2.0
          %v1694 = vmul.f32 %v1690, 2.0
          %v1695 = vmul.f32 %v1691, 2.0
          %v1696 = vmul.f32 %v1692, 2.0
          %v1697 = vmul.f32 %v1613, %v1613
          %v1698 = vmul.f32 %v1614, %v1614
          %v1699 = vmul.f32 %v1615, %v1615
          %v1700 = vmul.f32 %v1616, %v1616
          %v1701 = vmul.f32 %v1697, 2.0
          %v1702 = vmul.f32 %v1698, 2.0
          %v1703 = vmul.f32 %v1699, 2.0
          %v1704 = vmul.f32 %v1700, 2.0
          %v1705 = vsub.f32 1.0, %v1701
          %v1706 = vsub.f32 1.0, %v1702
          %v1707 = vsub.f32 1.0, %v1703
          %v1708 = vsub.f32 1.0, %v1704
          %s1709 = sld [smem:[#allocation2 + $0x48]]
          %s1710 = sld [smem:[#allocation2 + $0x99]]
          %v1711 = vstv %s1709
          %v1712 = vmul.f32 %v1711, %v1693
          %v1713 = vmul.f32 %v1711, %v1694
          %v1714 = vmul.f32 %v1711, %v1695
          %v1715 = vmul.f32 %v1711, %v1696
          %v1716 = vadd.f32 %v1645, %v1712
          %v1717 = vadd.f32 %v1646, %v1713
          %v1718 = vadd.f32 %v1647, %v1714
          %v1719 = vadd.f32 %v1648, %v1715
          %v1720 = vstv %s1710
          %v1721 = vmul.f32 %v1720, %v1705
          %v1722 = vmul.f32 %v1720, %v1706
          %v1723 = vmul.f32 %v1720, %v1707
          %v1724 = vmul.f32 %v1720, %v1708
          %v1725 = vadd.f32 %v1716, %v1721
          %v1726 = vadd.f32 %v1717, %v1722
          %v1727 = vadd.f32 %v1718, %v1723
          %v1728 = vadd.f32 %v1719, %v1724
          %s1729 = sld [smem:[#allocation2 + $0x4b]]
          %s1730 = sld [smem:[#allocation2 + $0x9c]]
          %v1731 = vstv %s1729
          %v1732 = vmul.f32 %v1731, %v1693
          %v1733 = vmul.f32 %v1731, %v1694
          %v1734 = vmul.f32 %v1731, %v1695
          %v1735 = vmul.f32 %v1731, %v1696
          %v1736 = vadd.f32 %v1665, %v1732
          %v1737 = vadd.f32 %v1666, %v1733
          %v1738 = vadd.f32 %v1667, %v1734
          %v1739 = vadd.f32 %v1668, %v1735
          %v1740 = vstv %s1730
          %v1741 = vmul.f32 %v1740, %v1705
          %v1742 = vmul.f32 %v1740, %v1706
          %v1743 = vmul.f32 %v1740, %v1707
          %v1744 = vmul.f32 %v1740, %v1708
          %v1745 = vadd.f32 %v1736, %v1741
          %v1746 = vadd.f32 %v1737, %v1742
          %v1747 = vadd.f32 %v1738, %v1743
          %v1748 = vadd.f32 %v1739, %v1744
          %s1749 = sld [smem:[#allocation2 + $0x4e]]
          %s1750 = sld [smem:[#allocation2 + $0x9f]]
          %v1751 = vstv %s1749
          %v1752 = vmul.f32 %v1751, %v1693
          %v1753 = vmul.f32 %v1751, %v1694
          %v1754 = vmul.f32 %v1751, %v1695
          %v1755 = vmul.f32 %v1751, %v1696
          %v1756 = vadd.f32 %v1685, %v1752
          %v1757 = vadd.f32 %v1686, %v1753
          %v1758 = vadd.f32 %v1687, %v1754
          %v1759 = vadd.f32 %v1688, %v1755
          %v1760 = vstv %s1750
          %v1761 = vmul.f32 %v1760, %v1705
          %v1762 = vmul.f32 %v1760, %v1706
          %v1763 = vmul.f32 %v1760, %v1707
          %v1764 = vmul.f32 %v1760, %v1708
          %v1765 = vadd.f32 %v1756, %v1761
          %v1766 = vadd.f32 %v1757, %v1762
          %v1767 = vadd.f32 %v1758, %v1763
          %v1768 = vadd.f32 %v1759, %v1764
          %s1769 = sadd.s32 %s230, 8
          %s1770 = smul.addr %s1769, 8
          %s1771 = scalar_lea.vmem %s200, %s1770 [#allocation4]
          %v1772 = vld [vmem:[%s1771] sm:$0xff]
          %v1773 = vld [vmem:[%s1771 + $0x8] sm:$0xff]
          %v1774 = vld [vmem:[%s1771 + $0x10] sm:$0xff]
          %v1775 = vld [vmem:[%s1771 + $0x18] sm:$0xff]
          %v1776 = vmul.f32 %v1772, 3.1415927
          %v1777 = vmul.f32 %v1773, 3.1415927
          %v1778 = vmul.f32 %v1774, 3.1415927
          %v1779 = vmul.f32 %v1775, 3.1415927
          %v1780 = vand.u32 2147483647, %v1776
          %vm1781 = vcmp.le.f32.partialorder %v1780, 0.7853982
          %vm1782 = vcmp.lt.s32.totalorder %v1776, 0
          %v1783 = vand.u32 %v1776, 2139095040
          %v1784 = vshrl.u32 %v1783, 23
          %v1785 = vsub.s32 %v1784, 127
          %v1786 = vand.u32 2147483647, %v1776
          %v1787 = vand.u32 %v1786, 8388607
          %v1788 = vor.u32 %v1787, 8388608
          %v1789 = vsub.s32 0, %v1788
          %v1790 = vadd.s32 %v1785, 1
          %vm1791 = vcmp.gt.s32.totalorder %v1790, 0
          %v1792 = vsel %vm1791, %v1790, 0
          %v1793 = vshrl.u32 %v1792, 5
          %v1794 = vand.u32 %v1792, 31
          %v1795 = vsub.s32 32, %v1794
          %v1796 = vshrl.u32 683565275, %v1795
          %v1797 = vshll.u32 683565275, %v1794
          %v1798 = vshrl.u32 2475754826, %v1795
          %v1799 = vor.u32 %v1797, %v1798
          %v1800 = vshll.u32 2475754826, %v1794
          %v1801 = vshrl.u32 2131351028, %v1795
          %v1802 = vor.u32 %v1800, %v1801
          %v1803 = vshll.u32 2131351028, %v1794
          %v1804 = vshrl.u32 2102212464, %v1795
          %v1805 = vor.u32 %v1803, %v1804
          %v1806 = vshll.u32 2102212464, %v1794
          %v1807 = vshrl.u32 920167782, %v1795
          %v1808 = vor.u32 %v1806, %v1807
          %v1809 = vshll.u32 920167782, %v1794
          %v1810 = vshrl.u32 1326507024, %v1795
          %v1811 = vor.u32 %v1809, %v1810
          %vm1812 = vcmp.lt.s32.totalorder %v1793, 1
          %vm1813 = vcmp.lt.s32.totalorder %v1793, 2
          %vm1814 = vcmp.lt.s32.totalorder %v1793, 3
          %vm1815 = vcmp.lt.s32.totalorder %v1793, 4
          %v1816 = vsel %vm1812, %v1796, %v1799
          %v1817 = vsel %vm1815, %v1805, 2102212464
          %v1818 = vsel %vm1814, %v1802, %v1817
          %v1819 = vsel %vm1813, %v1816, %v1818
          %v1820 = vsel %vm1812, %v1799, %v1802
          %v1821 = vsel %vm1815, %v1808, 920167782
          %v1822 = vsel %vm1814, %v1805, %v1821
          %v1823 = vsel %vm1813, %v1820, %v1822
          %v1824 = vsel %vm1812, %v1802, %v1805
          %v1825 = vsel %vm1815, %v1811, 1326507024
          %v1826 = vsel %vm1814, %v1808, %v1825
          %v1827 = vsel %vm1813, %v1824, %v1826
          %v1828 = vshll.u32 %v1788, 8
          %v1829 = vmul.u32.u64.compose %v1828, %v1827
          %v1830 = vextract.low.u32 %v1829
          %v1831 = vextract.high.u32 %v1829
          %v1832 = vmul.u32.u64.compose %v1828, %v1823
          %v1833 = vextract.low.u32 %v1832
          %v1834 = vextract.high.u32 %v1832
          %v1835 = vmul.u32 %v1828, %v1819
          %v1836 = vadd.s32 %v1831, %v1833
          %vm1837 = vc.u32 %v1831, %v1833
          %v1838 = vadd.s32 %v1834, 1
          %v1839 = vsel %vm1837, %v1838, %v1834
          %v1840 = vadd.s32 %v1835, %v1839
          %v1841 = vadd.s32 %v1840, 536870912
          %v1842 = vshrl.u32 %v1841, 30
          %v1843 = vshll.u32 %v1842, 30
          %v1844 = vsub.s32 %v1840, %v1843
          %vm1845 = vcmp.lt.s32.totalorder %v1844, 0
          %v1846 = vsub.s32 0, %v1844
          %v1847 = vsel %vm1845, %v1846, %v1844
          %v1848 = vclz %v1847
          %v1849 = vsub.s32 %v1848, 2
          %vm1850 = vcmp.gt.s32.totalorder 0, %v1849
          %v1851 = vsel %vm1850, 0, %v1849
          %v1852 = vsub.s32 32, %v1851
          %v1853 = vshll.u32 %v1844, %v1851
          %v1854 = vshrl.u32 %v1836, %v1852
          %v1855 = vor.u32 %v1853, %v1854
          %v1856 = vsub.s32 4294967266, %v1851
          %v1857 = vadd.s32 %v1856, 127
          %v1858 = vshll.u32 %v1857, 23
          %v1859 = vor.u32 4788187, %v1858
          %v1860 = vand.u32 2147483647, %v1859
          %v1862 = vcvt.s32.f32 %v1855
          %v1863 = vmul.f32 %v1862, %v1860
          %v1864 = vxor.u32 %v1863, 2147483648
          %v1865 = vsel %vm1782, %v1864, %v1863
          %v1866 = vsub.s32 4, %v1842
          %v1867 = vsel %vm1782, %v1866, %v1842
          %v1868 = vsel %vm1781, %v1776, %v1865
          %v1869 = vsel %vm1781, 0, %v1867
          %v1870 = vcosq.f32.pop %v1868
          %v1871 = vsinq.f32.pop %v1868
          %vm1872 = vweird.f32 %v1776
          %v1873 = vadd.s32 %v1869, 3
          %v1874 = vand.u32 %v1873, 3
          %vm1875 = vcmp.lt.s32.totalorder %v1874, 2
          %vm1876 = vcmp.eq.s32.totalorder %v1874, 0
          %v1877 = vxor.u32 %v1871, 2147483648
          %v1878 = vsel %vm1876, %v1870, %v1877
          %vm1879 = vcmp.eq.s32.totalorder %v1874, 2
          %v1880 = vxor.u32 %v1870, 2147483648
          %v1881 = vsel %vm1879, %v1880, %v1871
          %v1882 = vsel %vm1875, %v1878, %v1881
          %v1883 = vsel %vm1872, nan, %v1882
          %v1884 = vand.u32 2147483647, %v1777
          %vm1885 = vcmp.le.f32.partialorder %v1884, 0.7853982
          %vm1886 = vcmp.lt.s32.totalorder %v1777, 0
          %v1887 = vand.u32 %v1777, 2139095040
          %v1888 = vshrl.u32 %v1887, 23
          %v1889 = vsub.s32 %v1888, 127
          %v1890 = vand.u32 2147483647, %v1777
          %v1891 = vand.u32 %v1890, 8388607
          %v1892 = vor.u32 %v1891, 8388608
          %v1893 = vsub.s32 0, %v1892
          %v1894 = vadd.s32 %v1889, 1
          %vm1895 = vcmp.gt.s32.totalorder %v1894, 0
          %v1896 = vsel %vm1895, %v1894, 0
          %v1897 = vshrl.u32 %v1896, 5
          %v1898 = vand.u32 %v1896, 31
          %v1899 = vsub.s32 32, %v1898
          %v1900 = vshrl.u32 683565275, %v1899
          %v1901 = vshll.u32 683565275, %v1898
          %v1902 = vshrl.u32 2475754826, %v1899
          %v1903 = vor.u32 %v1901, %v1902
          %v1904 = vshll.u32 2475754826, %v1898
          %v1905 = vshrl.u32 2131351028, %v1899
          %v1906 = vor.u32 %v1904, %v1905
          %v1907 = vshll.u32 2131351028, %v1898
          %v1908 = vshrl.u32 2102212464, %v1899
          %v1909 = vor.u32 %v1907, %v1908
          %v1910 = vshll.u32 2102212464, %v1898
          %v1911 = vshrl.u32 920167782, %v1899
          %v1912 = vor.u32 %v1910, %v1911
          %v1913 = vshll.u32 920167782, %v1898
          %v1914 = vshrl.u32 1326507024, %v1899
          %v1915 = vor.u32 %v1913, %v1914
          %vm1916 = vcmp.lt.s32.totalorder %v1897, 1
          %vm1917 = vcmp.lt.s32.totalorder %v1897, 2
          %vm1918 = vcmp.lt.s32.totalorder %v1897, 3
          %vm1919 = vcmp.lt.s32.totalorder %v1897, 4
          %v1920 = vsel %vm1916, %v1900, %v1903
          %v1921 = vsel %vm1919, %v1909, 2102212464
          %v1922 = vsel %vm1918, %v1906, %v1921
          %v1923 = vsel %vm1917, %v1920, %v1922
          %v1924 = vsel %vm1916, %v1903, %v1906
          %v1925 = vsel %vm1919, %v1912, 920167782
          %v1926 = vsel %vm1918, %v1909, %v1925
          %v1927 = vsel %vm1917, %v1924, %v1926
          %v1928 = vsel %vm1916, %v1906, %v1909
          %v1929 = vsel %vm1919, %v1915, 1326507024
          %v1930 = vsel %vm1918, %v1912, %v1929
          %v1931 = vsel %vm1917, %v1928, %v1930
          %v1932 = vshll.u32 %v1892, 8
          %v1933 = vmul.u32.u64.compose %v1932, %v1931
          %v1934 = vextract.low.u32 %v1933
          %v1935 = vextract.high.u32 %v1933
          %v1936 = vmul.u32.u64.compose %v1932, %v1927
          %v1937 = vextract.low.u32 %v1936
          %v1938 = vextract.high.u32 %v1936
          %v1939 = vmul.u32 %v1932, %v1923
          %v1940 = vadd.s32 %v1935, %v1937
          %vm1941 = vc.u32 %v1935, %v1937
          %v1942 = vadd.s32 %v1938, 1
          %v1943 = vsel %vm1941, %v1942, %v1938
          %v1944 = vadd.s32 %v1939, %v1943
          %v1945 = vadd.s32 %v1944, 536870912
          %v1946 = vshrl.u32 %v1945, 30
          %v1947 = vshll.u32 %v1946, 30
          %v1948 = vsub.s32 %v1944, %v1947
          %vm1949 = vcmp.lt.s32.totalorder %v1948, 0
          %v1950 = vsub.s32 0, %v1948
          %v1951 = vsel %vm1949, %v1950, %v1948
          %v1952 = vclz %v1951
          %v1953 = vsub.s32 %v1952, 2
          %vm1954 = vcmp.gt.s32.totalorder 0, %v1953
          %v1955 = vsel %vm1954, 0, %v1953
          %v1956 = vsub.s32 32, %v1955
          %v1957 = vshll.u32 %v1948, %v1955
          %v1958 = vshrl.u32 %v1940, %v1956
          %v1959 = vor.u32 %v1957, %v1958
          %v1960 = vsub.s32 4294967266, %v1955
          %v1961 = vadd.s32 %v1960, 127
          %v1962 = vshll.u32 %v1961, 23
          %v1963 = vor.u32 4788187, %v1962
          %v1964 = vand.u32 2147483647, %v1963
          %v1966 = vcvt.s32.f32 %v1959
          %v1967 = vmul.f32 %v1966, %v1964
          %v1968 = vxor.u32 %v1967, 2147483648
          %v1969 = vsel %vm1886, %v1968, %v1967
          %v1970 = vsub.s32 4, %v1946
          %v1971 = vsel %vm1886, %v1970, %v1946
          %v1972 = vsel %vm1885, %v1777, %v1969
          %v1973 = vsel %vm1885, 0, %v1971
          %v1974 = vcosq.f32.pop %v1972
          %v1975 = vsinq.f32.pop %v1972
          %vm1976 = vweird.f32 %v1777
          %v1977 = vadd.s32 %v1973, 3
          %v1978 = vand.u32 %v1977, 3
          %vm1979 = vcmp.lt.s32.totalorder %v1978, 2
          %vm1980 = vcmp.eq.s32.totalorder %v1978, 0
          %v1981 = vxor.u32 %v1975, 2147483648
          %v1982 = vsel %vm1980, %v1974, %v1981
          %vm1983 = vcmp.eq.s32.totalorder %v1978, 2
          %v1984 = vxor.u32 %v1974, 2147483648
          %v1985 = vsel %vm1983, %v1984, %v1975
          %v1986 = vsel %vm1979, %v1982, %v1985
          %v1987 = vsel %vm1976, nan, %v1986
          %v1988 = vand.u32 2147483647, %v1778
          %vm1989 = vcmp.le.f32.partialorder %v1988, 0.7853982
          %vm1990 = vcmp.lt.s32.totalorder %v1778, 0
          %v1991 = vand.u32 %v1778, 2139095040
          %v1992 = vshrl.u32 %v1991, 23
          %v1993 = vsub.s32 %v1992, 127
          %v1994 = vand.u32 2147483647, %v1778
          %v1995 = vand.u32 %v1994, 8388607
          %v1996 = vor.u32 %v1995, 8388608
          %v1997 = vsub.s32 0, %v1996
          %v1998 = vadd.s32 %v1993, 1
          %vm1999 = vcmp.gt.s32.totalorder %v1998, 0
          %v2000 = vsel %vm1999, %v1998, 0
          %v2001 = vshrl.u32 %v2000, 5
          %v2002 = vand.u32 %v2000, 31
          %v2003 = vsub.s32 32, %v2002
          %v2004 = vshrl.u32 683565275, %v2003
          %v2005 = vshll.u32 683565275, %v2002
          %v2006 = vshrl.u32 2475754826, %v2003
          %v2007 = vor.u32 %v2005, %v2006
          %v2008 = vshll.u32 2475754826, %v2002
          %v2009 = vshrl.u32 2131351028, %v2003
          %v2010 = vor.u32 %v2008, %v2009
          %v2011 = vshll.u32 2131351028, %v2002
          %v2012 = vshrl.u32 2102212464, %v2003
          %v2013 = vor.u32 %v2011, %v2012
          %v2014 = vshll.u32 2102212464, %v2002
          %v2015 = vshrl.u32 920167782, %v2003
          %v2016 = vor.u32 %v2014, %v2015
          %v2017 = vshll.u32 920167782, %v2002
          %v2018 = vshrl.u32 1326507024, %v2003
          %v2019 = vor.u32 %v2017, %v2018
          %vm2020 = vcmp.lt.s32.totalorder %v2001, 1
          %vm2021 = vcmp.lt.s32.totalorder %v2001, 2
          %vm2022 = vcmp.lt.s32.totalorder %v2001, 3
          %vm2023 = vcmp.lt.s32.totalorder %v2001, 4
          %v2024 = vsel %vm2020, %v2004, %v2007
          %v2025 = vsel %vm2023, %v2013, 2102212464
          %v2026 = vsel %vm2022, %v2010, %v2025
          %v2027 = vsel %vm2021, %v2024, %v2026
          %v2028 = vsel %vm2020, %v2007, %v2010
          %v2029 = vsel %vm2023, %v2016, 920167782
          %v2030 = vsel %vm2022, %v2013, %v2029
          %v2031 = vsel %vm2021, %v2028, %v2030
          %v2032 = vsel %vm2020, %v2010, %v2013
          %v2033 = vsel %vm2023, %v2019, 1326507024
          %v2034 = vsel %vm2022, %v2016, %v2033
          %v2035 = vsel %vm2021, %v2032, %v2034
          %v2036 = vshll.u32 %v1996, 8
          %v2037 = vmul.u32.u64.compose %v2036, %v2035
          %v2038 = vextract.low.u32 %v2037
          %v2039 = vextract.high.u32 %v2037
          %v2040 = vmul.u32.u64.compose %v2036, %v2031
          %v2041 = vextract.low.u32 %v2040
          %v2042 = vextract.high.u32 %v2040
          %v2043 = vmul.u32 %v2036, %v2027
          %v2044 = vadd.s32 %v2039, %v2041
          %vm2045 = vc.u32 %v2039, %v2041
          %v2046 = vadd.s32 %v2042, 1
          %v2047 = vsel %vm2045, %v2046, %v2042
          %v2048 = vadd.s32 %v2043, %v2047
          %v2049 = vadd.s32 %v2048, 536870912
          %v2050 = vshrl.u32 %v2049, 30
          %v2051 = vshll.u32 %v2050, 30
          %v2052 = vsub.s32 %v2048, %v2051
          %vm2053 = vcmp.lt.s32.totalorder %v2052, 0
          %v2054 = vsub.s32 0, %v2052
          %v2055 = vsel %vm2053, %v2054, %v2052
          %v2056 = vclz %v2055
          %v2057 = vsub.s32 %v2056, 2
          %vm2058 = vcmp.gt.s32.totalorder 0, %v2057
          %v2059 = vsel %vm2058, 0, %v2057
          %v2060 = vsub.s32 32, %v2059
          %v2061 = vshll.u32 %v2052, %v2059
          %v2062 = vshrl.u32 %v2044, %v2060
          %v2063 = vor.u32 %v2061, %v2062
          %v2064 = vsub.s32 4294967266, %v2059
          %v2065 = vadd.s32 %v2064, 127
          %v2066 = vshll.u32 %v2065, 23
          %v2067 = vor.u32 4788187, %v2066
          %v2068 = vand.u32 2147483647, %v2067
          %v2070 = vcvt.s32.f32 %v2063
          %v2071 = vmul.f32 %v2070, %v2068
          %v2072 = vxor.u32 %v2071, 2147483648
          %v2073 = vsel %vm1990, %v2072, %v2071
          %v2074 = vsub.s32 4, %v2050
          %v2075 = vsel %vm1990, %v2074, %v2050
          %v2076 = vsel %vm1989, %v1778, %v2073
          %v2077 = vsel %vm1989, 0, %v2075
          %v2078 = vcosq.f32.pop %v2076
          %v2079 = vsinq.f32.pop %v2076
          %vm2080 = vweird.f32 %v1778
          %v2081 = vadd.s32 %v2077, 3
          %v2082 = vand.u32 %v2081, 3
          %vm2083 = vcmp.lt.s32.totalorder %v2082, 2
          %vm2084 = vcmp.eq.s32.totalorder %v2082, 0
          %v2085 = vxor.u32 %v2079, 2147483648
          %v2086 = vsel %vm2084, %v2078, %v2085
          %vm2087 = vcmp.eq.s32.totalorder %v2082, 2
          %v2088 = vxor.u32 %v2078, 2147483648
          %v2089 = vsel %vm2087, %v2088, %v2079
          %v2090 = vsel %vm2083, %v2086, %v2089
          %v2091 = vsel %vm2080, nan, %v2090
          %v2092 = vand.u32 2147483647, %v1779
          %vm2093 = vcmp.le.f32.partialorder %v2092, 0.7853982
          %vm2094 = vcmp.lt.s32.totalorder %v1779, 0
          %v2095 = vand.u32 %v1779, 2139095040
          %v2096 = vshrl.u32 %v2095, 23
          %v2097 = vsub.s32 %v2096, 127
          %v2098 = vand.u32 2147483647, %v1779
          %v2099 = vand.u32 %v2098, 8388607
          %v2100 = vor.u32 %v2099, 8388608
          %v2101 = vsub.s32 0, %v2100
          %v2102 = vadd.s32 %v2097, 1
          %vm2103 = vcmp.gt.s32.totalorder %v2102, 0
          %v2104 = vsel %vm2103, %v2102, 0
          %v2105 = vshrl.u32 %v2104, 5
          %v2106 = vand.u32 %v2104, 31
          %v2107 = vsub.s32 32, %v2106
          %v2108 = vshrl.u32 683565275, %v2107
          %v2109 = vshll.u32 683565275, %v2106
          %v2110 = vshrl.u32 2475754826, %v2107
          %v2111 = vor.u32 %v2109, %v2110
          %v2112 = vshll.u32 2475754826, %v2106
          %v2113 = vshrl.u32 2131351028, %v2107
          %v2114 = vor.u32 %v2112, %v2113
          %v2115 = vshll.u32 2131351028, %v2106
          %v2116 = vshrl.u32 2102212464, %v2107
          %v2117 = vor.u32 %v2115, %v2116
          %v2118 = vshll.u32 2102212464, %v2106
          %v2119 = vshrl.u32 920167782, %v2107
          %v2120 = vor.u32 %v2118, %v2119
          %v2121 = vshll.u32 920167782, %v2106
          %v2122 = vshrl.u32 1326507024, %v2107
          %v2123 = vor.u32 %v2121, %v2122
          %vm2124 = vcmp.lt.s32.totalorder %v2105, 1
          %vm2125 = vcmp.lt.s32.totalorder %v2105, 2
          %vm2126 = vcmp.lt.s32.totalorder %v2105, 3
          %vm2127 = vcmp.lt.s32.totalorder %v2105, 4
          %v2128 = vsel %vm2124, %v2108, %v2111
          %v2129 = vsel %vm2127, %v2117, 2102212464
          %v2130 = vsel %vm2126, %v2114, %v2129
          %v2131 = vsel %vm2125, %v2128, %v2130
          %v2132 = vsel %vm2124, %v2111, %v2114
          %v2133 = vsel %vm2127, %v2120, 920167782
          %v2134 = vsel %vm2126, %v2117, %v2133
          %v2135 = vsel %vm2125, %v2132, %v2134
          %v2136 = vsel %vm2124, %v2114, %v2117
          %v2137 = vsel %vm2127, %v2123, 1326507024
          %v2138 = vsel %vm2126, %v2120, %v2137
          %v2139 = vsel %vm2125, %v2136, %v2138
          %v2140 = vshll.u32 %v2100, 8
          %v2141 = vmul.u32.u64.compose %v2140, %v2139
          %v2142 = vextract.low.u32 %v2141
          %v2143 = vextract.high.u32 %v2141
          %v2144 = vmul.u32.u64.compose %v2140, %v2135
          %v2145 = vextract.low.u32 %v2144
          %v2146 = vextract.high.u32 %v2144
          %v2147 = vmul.u32 %v2140, %v2131
          %v2148 = vadd.s32 %v2143, %v2145
          %vm2149 = vc.u32 %v2143, %v2145
          %v2150 = vadd.s32 %v2146, 1
          %v2151 = vsel %vm2149, %v2150, %v2146
          %v2152 = vadd.s32 %v2147, %v2151
          %v2153 = vadd.s32 %v2152, 536870912
          %v2154 = vshrl.u32 %v2153, 30
          %v2155 = vshll.u32 %v2154, 30
          %v2156 = vsub.s32 %v2152, %v2155
          %vm2157 = vcmp.lt.s32.totalorder %v2156, 0
          %v2158 = vsub.s32 0, %v2156
          %v2159 = vsel %vm2157, %v2158, %v2156
          %v2160 = vclz %v2159
          %v2161 = vsub.s32 %v2160, 2
          %vm2162 = vcmp.gt.s32.totalorder 0, %v2161
          %v2163 = vsel %vm2162, 0, %v2161
          %v2164 = vsub.s32 32, %v2163
          %v2165 = vshll.u32 %v2156, %v2163
          %v2166 = vshrl.u32 %v2148, %v2164
          %v2167 = vor.u32 %v2165, %v2166
          %v2168 = vsub.s32 4294967266, %v2163
          %v2169 = vadd.s32 %v2168, 127
          %v2170 = vshll.u32 %v2169, 23
          %v2171 = vor.u32 4788187, %v2170
          %v2172 = vand.u32 2147483647, %v2171
          %v2174 = vcvt.s32.f32 %v2167
          %v2175 = vmul.f32 %v2174, %v2172
          %v2176 = vxor.u32 %v2175, 2147483648
          %v2177 = vsel %vm2094, %v2176, %v2175
          %v2178 = vsub.s32 4, %v2154
          %v2179 = vsel %vm2094, %v2178, %v2154
          %v2180 = vsel %vm2093, %v1779, %v2177
          %v2181 = vsel %vm2093, 0, %v2179
          %v2182 = vcosq.f32.pop %v2180
          %v2183 = vsinq.f32.pop %v2180
          %vm2184 = vweird.f32 %v1779
          %v2185 = vadd.s32 %v2181, 3
          %v2186 = vand.u32 %v2185, 3
          %vm2187 = vcmp.lt.s32.totalorder %v2186, 2
          %vm2188 = vcmp.eq.s32.totalorder %v2186, 0
          %v2189 = vxor.u32 %v2183, 2147483648
          %v2190 = vsel %vm2188, %v2182, %v2189
          %vm2191 = vcmp.eq.s32.totalorder %v2186, 2
          %v2192 = vxor.u32 %v2182, 2147483648
          %v2193 = vsel %vm2191, %v2192, %v2183
          %v2194 = vsel %vm2187, %v2190, %v2193
          %v2195 = vsel %vm2184, nan, %v2194
          %v2196 = vand.u32 2147483647, %v1776
          %vm2197 = vcmp.le.f32.partialorder %v2196, 0.7853982
          %vm2198 = vcmp.lt.s32.totalorder %v1776, 0
          %v2199 = vand.u32 %v1776, 2139095040
          %v2200 = vshrl.u32 %v2199, 23
          %v2201 = vsub.s32 %v2200, 127
          %v2202 = vand.u32 2147483647, %v1776
          %v2203 = vand.u32 %v2202, 8388607
          %v2204 = vor.u32 %v2203, 8388608
          %v2205 = vsub.s32 0, %v2204
          %v2206 = vadd.s32 %v2201, 1
          %vm2207 = vcmp.gt.s32.totalorder %v2206, 0
          %v2208 = vsel %vm2207, %v2206, 0
          %v2209 = vshrl.u32 %v2208, 5
          %v2210 = vand.u32 %v2208, 31
          %v2211 = vsub.s32 32, %v2210
          %v2212 = vshrl.u32 683565275, %v2211
          %v2213 = vshll.u32 683565275, %v2210
          %v2214 = vshrl.u32 2475754826, %v2211
          %v2215 = vor.u32 %v2213, %v2214
          %v2216 = vshll.u32 2475754826, %v2210
          %v2217 = vshrl.u32 2131351028, %v2211
          %v2218 = vor.u32 %v2216, %v2217
          %v2219 = vshll.u32 2131351028, %v2210
          %v2220 = vshrl.u32 2102212464, %v2211
          %v2221 = vor.u32 %v2219, %v2220
          %v2222 = vshll.u32 2102212464, %v2210
          %v2223 = vshrl.u32 920167782, %v2211
          %v2224 = vor.u32 %v2222, %v2223
          %v2225 = vshll.u32 920167782, %v2210
          %v2226 = vshrl.u32 1326507024, %v2211
          %v2227 = vor.u32 %v2225, %v2226
          %vm2228 = vcmp.lt.s32.totalorder %v2209, 1
          %vm2229 = vcmp.lt.s32.totalorder %v2209, 2
          %vm2230 = vcmp.lt.s32.totalorder %v2209, 3
          %vm2231 = vcmp.lt.s32.totalorder %v2209, 4
          %v2232 = vsel %vm2228, %v2212, %v2215
          %v2233 = vsel %vm2231, %v2221, 2102212464
          %v2234 = vsel %vm2230, %v2218, %v2233
          %v2235 = vsel %vm2229, %v2232, %v2234
          %v2236 = vsel %vm2228, %v2215, %v2218
          %v2237 = vsel %vm2231, %v2224, 920167782
          %v2238 = vsel %vm2230, %v2221, %v2237
          %v2239 = vsel %vm2229, %v2236, %v2238
          %v2240 = vsel %vm2228, %v2218, %v2221
          %v2241 = vsel %vm2231, %v2227, 1326507024
          %v2242 = vsel %vm2230, %v2224, %v2241
          %v2243 = vsel %vm2229, %v2240, %v2242
          %v2244 = vshll.u32 %v2204, 8
          %v2245 = vmul.u32.u64.compose %v2244, %v2243
          %v2246 = vextract.low.u32 %v2245
          %v2247 = vextract.high.u32 %v2245
          %v2248 = vmul.u32.u64.compose %v2244, %v2239
          %v2249 = vextract.low.u32 %v2248
          %v2250 = vextract.high.u32 %v2248
          %v2251 = vmul.u32 %v2244, %v2235
          %v2252 = vadd.s32 %v2247, %v2249
          %vm2253 = vc.u32 %v2247, %v2249
          %v2254 = vadd.s32 %v2250, 1
          %v2255 = vsel %vm2253, %v2254, %v2250
          %v2256 = vadd.s32 %v2251, %v2255
          %v2257 = vadd.s32 %v2256, 536870912
          %v2258 = vshrl.u32 %v2257, 30
          %v2259 = vshll.u32 %v2258, 30
          %v2260 = vsub.s32 %v2256, %v2259
          %vm2261 = vcmp.lt.s32.totalorder %v2260, 0
          %v2262 = vsub.s32 0, %v2260
          %v2263 = vsel %vm2261, %v2262, %v2260
          %v2264 = vclz %v2263
          %v2265 = vsub.s32 %v2264, 2
          %vm2266 = vcmp.gt.s32.totalorder 0, %v2265
          %v2267 = vsel %vm2266, 0, %v2265
          %v2268 = vsub.s32 32, %v2267
          %v2269 = vshll.u32 %v2260, %v2267
          %v2270 = vshrl.u32 %v2252, %v2268
          %v2271 = vor.u32 %v2269, %v2270
          %v2272 = vsub.s32 4294967266, %v2267
          %v2273 = vadd.s32 %v2272, 127
          %v2274 = vshll.u32 %v2273, 23
          %v2275 = vor.u32 4788187, %v2274
          %v2276 = vand.u32 2147483647, %v2275
          %v2278 = vcvt.s32.f32 %v2271
          %v2279 = vmul.f32 %v2278, %v2276
          %v2280 = vxor.u32 %v2279, 2147483648
          %v2281 = vsel %vm2198, %v2280, %v2279
          %v2282 = vsub.s32 4, %v2258
          %v2283 = vsel %vm2198, %v2282, %v2258
          %v2284 = vsel %vm2197, %v1776, %v2281
          %v2285 = vsel %vm2197, 0, %v2283
          %v2286 = vcosq.f32.pop %v2284
          %v2287 = vsinq.f32.pop %v2284
          %vm2288 = vweird.f32 %v1776
          %v2289 = vand.u32 %v2285, 3
          %vm2290 = vcmp.lt.s32.totalorder %v2289, 2
          %vm2291 = vcmp.eq.s32.totalorder %v2289, 0
          %v2292 = vxor.u32 %v2287, 2147483648
          %v2293 = vsel %vm2291, %v2286, %v2292
          %vm2294 = vcmp.eq.s32.totalorder %v2289, 2
          %v2295 = vxor.u32 %v2286, 2147483648
          %v2296 = vsel %vm2294, %v2295, %v2287
          %v2297 = vsel %vm2290, %v2293, %v2296
          %v2298 = vsel %vm2288, nan, %v2297
          %v2299 = vand.u32 2147483647, %v1777
          %vm2300 = vcmp.le.f32.partialorder %v2299, 0.7853982
          %vm2301 = vcmp.lt.s32.totalorder %v1777, 0
          %v2302 = vand.u32 %v1777, 2139095040
          %v2303 = vshrl.u32 %v2302, 23
          %v2304 = vsub.s32 %v2303, 127
          %v2305 = vand.u32 2147483647, %v1777
          %v2306 = vand.u32 %v2305, 8388607
          %v2307 = vor.u32 %v2306, 8388608
          %v2308 = vsub.s32 0, %v2307
          %v2309 = vadd.s32 %v2304, 1
          %vm2310 = vcmp.gt.s32.totalorder %v2309, 0
          %v2311 = vsel %vm2310, %v2309, 0
          %v2312 = vshrl.u32 %v2311, 5
          %v2313 = vand.u32 %v2311, 31
          %v2314 = vsub.s32 32, %v2313
          %v2315 = vshrl.u32 683565275, %v2314
          %v2316 = vshll.u32 683565275, %v2313
          %v2317 = vshrl.u32 2475754826, %v2314
          %v2318 = vor.u32 %v2316, %v2317
          %v2319 = vshll.u32 2475754826, %v2313
          %v2320 = vshrl.u32 2131351028, %v2314
          %v2321 = vor.u32 %v2319, %v2320
          %v2322 = vshll.u32 2131351028, %v2313
          %v2323 = vshrl.u32 2102212464, %v2314
          %v2324 = vor.u32 %v2322, %v2323
          %v2325 = vshll.u32 2102212464, %v2313
          %v2326 = vshrl.u32 920167782, %v2314
          %v2327 = vor.u32 %v2325, %v2326
          %v2328 = vshll.u32 920167782, %v2313
          %v2329 = vshrl.u32 1326507024, %v2314
          %v2330 = vor.u32 %v2328, %v2329
          %vm2331 = vcmp.lt.s32.totalorder %v2312, 1
          %vm2332 = vcmp.lt.s32.totalorder %v2312, 2
          %vm2333 = vcmp.lt.s32.totalorder %v2312, 3
          %vm2334 = vcmp.lt.s32.totalorder %v2312, 4
          %v2335 = vsel %vm2331, %v2315, %v2318
          %v2336 = vsel %vm2334, %v2324, 2102212464
          %v2337 = vsel %vm2333, %v2321, %v2336
          %v2338 = vsel %vm2332, %v2335, %v2337
          %v2339 = vsel %vm2331, %v2318, %v2321
          %v2340 = vsel %vm2334, %v2327, 920167782
          %v2341 = vsel %vm2333, %v2324, %v2340
          %v2342 = vsel %vm2332, %v2339, %v2341
          %v2343 = vsel %vm2331, %v2321, %v2324
          %v2344 = vsel %vm2334, %v2330, 1326507024
          %v2345 = vsel %vm2333, %v2327, %v2344
          %v2346 = vsel %vm2332, %v2343, %v2345
          %v2347 = vshll.u32 %v2307, 8
          %v2348 = vmul.u32.u64.compose %v2347, %v2346
          %v2349 = vextract.low.u32 %v2348
          %v2350 = vextract.high.u32 %v2348
          %v2351 = vmul.u32.u64.compose %v2347, %v2342
          %v2352 = vextract.low.u32 %v2351
          %v2353 = vextract.high.u32 %v2351
          %v2354 = vmul.u32 %v2347, %v2338
          %v2355 = vadd.s32 %v2350, %v2352
          %vm2356 = vc.u32 %v2350, %v2352
          %v2357 = vadd.s32 %v2353, 1
          %v2358 = vsel %vm2356, %v2357, %v2353
          %v2359 = vadd.s32 %v2354, %v2358
          %v2360 = vadd.s32 %v2359, 536870912
          %v2361 = vshrl.u32 %v2360, 30
          %v2362 = vshll.u32 %v2361, 30
          %v2363 = vsub.s32 %v2359, %v2362
          %vm2364 = vcmp.lt.s32.totalorder %v2363, 0
          %v2365 = vsub.s32 0, %v2363
          %v2366 = vsel %vm2364, %v2365, %v2363
          %v2367 = vclz %v2366
          %v2368 = vsub.s32 %v2367, 2
          %vm2369 = vcmp.gt.s32.totalorder 0, %v2368
          %v2370 = vsel %vm2369, 0, %v2368
          %v2371 = vsub.s32 32, %v2370
          %v2372 = vshll.u32 %v2363, %v2370
          %v2373 = vshrl.u32 %v2355, %v2371
          %v2374 = vor.u32 %v2372, %v2373
          %v2375 = vsub.s32 4294967266, %v2370
          %v2376 = vadd.s32 %v2375, 127
          %v2377 = vshll.u32 %v2376, 23
          %v2378 = vor.u32 4788187, %v2377
          %v2379 = vand.u32 2147483647, %v2378
          %v2381 = vcvt.s32.f32 %v2374
          %v2382 = vmul.f32 %v2381, %v2379
          %v2383 = vxor.u32 %v2382, 2147483648
          %v2384 = vsel %vm2301, %v2383, %v2382
          %v2385 = vsub.s32 4, %v2361
          %v2386 = vsel %vm2301, %v2385, %v2361
          %v2387 = vsel %vm2300, %v1777, %v2384
          %v2388 = vsel %vm2300, 0, %v2386
          %v2389 = vcosq.f32.pop %v2387
          %v2390 = vsinq.f32.pop %v2387
          %vm2391 = vweird.f32 %v1777
          %v2392 = vand.u32 %v2388, 3
          %vm2393 = vcmp.lt.s32.totalorder %v2392, 2
          %vm2394 = vcmp.eq.s32.totalorder %v2392, 0
          %v2395 = vxor.u32 %v2390, 2147483648
          %v2396 = vsel %vm2394, %v2389, %v2395
          %vm2397 = vcmp.eq.s32.totalorder %v2392, 2
          %v2398 = vxor.u32 %v2389, 2147483648
          %v2399 = vsel %vm2397, %v2398, %v2390
          %v2400 = vsel %vm2393, %v2396, %v2399
          %v2401 = vsel %vm2391, nan, %v2400
          %v2402 = vand.u32 2147483647, %v1778
          %vm2403 = vcmp.le.f32.partialorder %v2402, 0.7853982
          %vm2404 = vcmp.lt.s32.totalorder %v1778, 0
          %v2405 = vand.u32 %v1778, 2139095040
          %v2406 = vshrl.u32 %v2405, 23
          %v2407 = vsub.s32 %v2406, 127
          %v2408 = vand.u32 2147483647, %v1778
          %v2409 = vand.u32 %v2408, 8388607
          %v2410 = vor.u32 %v2409, 8388608
          %v2411 = vsub.s32 0, %v2410
          %v2412 = vadd.s32 %v2407, 1
          %vm2413 = vcmp.gt.s32.totalorder %v2412, 0
          %v2414 = vsel %vm2413, %v2412, 0
          %v2415 = vshrl.u32 %v2414, 5
          %v2416 = vand.u32 %v2414, 31
          %v2417 = vsub.s32 32, %v2416
          %v2418 = vshrl.u32 683565275, %v2417
          %v2419 = vshll.u32 683565275, %v2416
          %v2420 = vshrl.u32 2475754826, %v2417
          %v2421 = vor.u32 %v2419, %v2420
          %v2422 = vshll.u32 2475754826, %v2416
          %v2423 = vshrl.u32 2131351028, %v2417
          %v2424 = vor.u32 %v2422, %v2423
          %v2425 = vshll.u32 2131351028, %v2416
          %v2426 = vshrl.u32 2102212464, %v2417
          %v2427 = vor.u32 %v2425, %v2426
          %v2428 = vshll.u32 2102212464, %v2416
          %v2429 = vshrl.u32 920167782, %v2417
          %v2430 = vor.u32 %v2428, %v2429
          %v2431 = vshll.u32 920167782, %v2416
          %v2432 = vshrl.u32 1326507024, %v2417
          %v2433 = vor.u32 %v2431, %v2432
          %vm2434 = vcmp.lt.s32.totalorder %v2415, 1
          %vm2435 = vcmp.lt.s32.totalorder %v2415, 2
          %vm2436 = vcmp.lt.s32.totalorder %v2415, 3
          %vm2437 = vcmp.lt.s32.totalorder %v2415, 4
          %v2438 = vsel %vm2434, %v2418, %v2421
          %v2439 = vsel %vm2437, %v2427, 2102212464
          %v2440 = vsel %vm2436, %v2424, %v2439
          %v2441 = vsel %vm2435, %v2438, %v2440
          %v2442 = vsel %vm2434, %v2421, %v2424
          %v2443 = vsel %vm2437, %v2430, 920167782
          %v2444 = vsel %vm2436, %v2427, %v2443
          %v2445 = vsel %vm2435, %v2442, %v2444
          %v2446 = vsel %vm2434, %v2424, %v2427
          %v2447 = vsel %vm2437, %v2433, 1326507024
          %v2448 = vsel %vm2436, %v2430, %v2447
          %v2449 = vsel %vm2435, %v2446, %v2448
          %v2450 = vshll.u32 %v2410, 8
          %v2451 = vmul.u32.u64.compose %v2450, %v2449
          %v2452 = vextract.low.u32 %v2451
          %v2453 = vextract.high.u32 %v2451
          %v2454 = vmul.u32.u64.compose %v2450, %v2445
          %v2455 = vextract.low.u32 %v2454
          %v2456 = vextract.high.u32 %v2454
          %v2457 = vmul.u32 %v2450, %v2441
          %v2458 = vadd.s32 %v2453, %v2455
          %vm2459 = vc.u32 %v2453, %v2455
          %v2460 = vadd.s32 %v2456, 1
          %v2461 = vsel %vm2459, %v2460, %v2456
          %v2462 = vadd.s32 %v2457, %v2461
          %v2463 = vadd.s32 %v2462, 536870912
          %v2464 = vshrl.u32 %v2463, 30
          %v2465 = vshll.u32 %v2464, 30
          %v2466 = vsub.s32 %v2462, %v2465
          %vm2467 = vcmp.lt.s32.totalorder %v2466, 0
          %v2468 = vsub.s32 0, %v2466
          %v2469 = vsel %vm2467, %v2468, %v2466
          %v2470 = vclz %v2469
          %v2471 = vsub.s32 %v2470, 2
          %vm2472 = vcmp.gt.s32.totalorder 0, %v2471
          %v2473 = vsel %vm2472, 0, %v2471
          %v2474 = vsub.s32 32, %v2473
          %v2475 = vshll.u32 %v2466, %v2473
          %v2476 = vshrl.u32 %v2458, %v2474
          %v2477 = vor.u32 %v2475, %v2476
          %v2478 = vsub.s32 4294967266, %v2473
          %v2479 = vadd.s32 %v2478, 127
          %v2480 = vshll.u32 %v2479, 23
          %v2481 = vor.u32 4788187, %v2480
          %v2482 = vand.u32 2147483647, %v2481
          %v2484 = vcvt.s32.f32 %v2477
          %v2485 = vmul.f32 %v2484, %v2482
          %v2486 = vxor.u32 %v2485, 2147483648
          %v2487 = vsel %vm2404, %v2486, %v2485
          %v2488 = vsub.s32 4, %v2464
          %v2489 = vsel %vm2404, %v2488, %v2464
          %v2490 = vsel %vm2403, %v1778, %v2487
          %v2491 = vsel %vm2403, 0, %v2489
          %v2492 = vcosq.f32.pop %v2490
          %v2493 = vsinq.f32.pop %v2490
          %vm2494 = vweird.f32 %v1778
          %v2495 = vand.u32 %v2491, 3
          %vm2496 = vcmp.lt.s32.totalorder %v2495, 2
          %vm2497 = vcmp.eq.s32.totalorder %v2495, 0
          %v2498 = vxor.u32 %v2493, 2147483648
          %v2499 = vsel %vm2497, %v2492, %v2498
          %vm2500 = vcmp.eq.s32.totalorder %v2495, 2
          %v2501 = vxor.u32 %v2492, 2147483648
          %v2502 = vsel %vm2500, %v2501, %v2493
          %v2503 = vsel %vm2496, %v2499, %v2502
          %v2504 = vsel %vm2494, nan, %v2503
          %v2505 = vand.u32 2147483647, %v1779
          %vm2506 = vcmp.le.f32.partialorder %v2505, 0.7853982
          %vm2507 = vcmp.lt.s32.totalorder %v1779, 0
          %v2508 = vand.u32 %v1779, 2139095040
          %v2509 = vshrl.u32 %v2508, 23
          %v2510 = vsub.s32 %v2509, 127
          %v2511 = vand.u32 2147483647, %v1779
          %v2512 = vand.u32 %v2511, 8388607
          %v2513 = vor.u32 %v2512, 8388608
          %v2514 = vsub.s32 0, %v2513
          %v2515 = vadd.s32 %v2510, 1
          %vm2516 = vcmp.gt.s32.totalorder %v2515, 0
          %v2517 = vsel %vm2516, %v2515, 0
          %v2518 = vshrl.u32 %v2517, 5
          %v2519 = vand.u32 %v2517, 31
          %v2520 = vsub.s32 32, %v2519
          %v2521 = vshrl.u32 683565275, %v2520
          %v2522 = vshll.u32 683565275, %v2519
          %v2523 = vshrl.u32 2475754826, %v2520
          %v2524 = vor.u32 %v2522, %v2523
          %v2525 = vshll.u32 2475754826, %v2519
          %v2526 = vshrl.u32 2131351028, %v2520
          %v2527 = vor.u32 %v2525, %v2526
          %v2528 = vshll.u32 2131351028, %v2519
          %v2529 = vshrl.u32 2102212464, %v2520
          %v2530 = vor.u32 %v2528, %v2529
          %v2531 = vshll.u32 2102212464, %v2519
          %v2532 = vshrl.u32 920167782, %v2520
          %v2533 = vor.u32 %v2531, %v2532
          %v2534 = vshll.u32 920167782, %v2519
          %v2535 = vshrl.u32 1326507024, %v2520
          %v2536 = vor.u32 %v2534, %v2535
          %vm2537 = vcmp.lt.s32.totalorder %v2518, 1
          %vm2538 = vcmp.lt.s32.totalorder %v2518, 2
          %vm2539 = vcmp.lt.s32.totalorder %v2518, 3
          %vm2540 = vcmp.lt.s32.totalorder %v2518, 4
          %v2541 = vsel %vm2537, %v2521, %v2524
          %v2542 = vsel %vm2540, %v2530, 2102212464
          %v2543 = vsel %vm2539, %v2527, %v2542
          %v2544 = vsel %vm2538, %v2541, %v2543
          %v2545 = vsel %vm2537, %v2524, %v2527
          %v2546 = vsel %vm2540, %v2533, 920167782
          %v2547 = vsel %vm2539, %v2530, %v2546
          %v2548 = vsel %vm2538, %v2545, %v2547
          %v2549 = vsel %vm2537, %v2527, %v2530
          %v2550 = vsel %vm2540, %v2536, 1326507024
          %v2551 = vsel %vm2539, %v2533, %v2550
          %v2552 = vsel %vm2538, %v2549, %v2551
          %v2553 = vshll.u32 %v2513, 8
          %v2554 = vmul.u32.u64.compose %v2553, %v2552
          %v2555 = vextract.low.u32 %v2554
          %v2556 = vextract.high.u32 %v2554
          %v2557 = vmul.u32.u64.compose %v2553, %v2548
          %v2558 = vextract.low.u32 %v2557
          %v2559 = vextract.high.u32 %v2557
          %v2560 = vmul.u32 %v2553, %v2544
          %v2561 = vadd.s32 %v2556, %v2558
          %vm2562 = vc.u32 %v2556, %v2558
          %v2563 = vadd.s32 %v2559, 1
          %v2564 = vsel %vm2562, %v2563, %v2559
          %v2565 = vadd.s32 %v2560, %v2564
          %v2566 = vadd.s32 %v2565, 536870912
          %v2567 = vshrl.u32 %v2566, 30
          %v2568 = vshll.u32 %v2567, 30
          %v2569 = vsub.s32 %v2565, %v2568
          %vm2570 = vcmp.lt.s32.totalorder %v2569, 0
          %v2571 = vsub.s32 0, %v2569
          %v2572 = vsel %vm2570, %v2571, %v2569
          %v2573 = vclz %v2572
          %v2574 = vsub.s32 %v2573, 2
          %vm2575 = vcmp.gt.s32.totalorder 0, %v2574
          %v2576 = vsel %vm2575, 0, %v2574
          %v2577 = vsub.s32 32, %v2576
          %v2578 = vshll.u32 %v2569, %v2576
          %v2579 = vshrl.u32 %v2561, %v2577
          %v2580 = vor.u32 %v2578, %v2579
          %v2581 = vsub.s32 4294967266, %v2576
          %v2582 = vadd.s32 %v2581, 127
          %v2583 = vshll.u32 %v2582, 23
          %v2584 = vor.u32 4788187, %v2583
          %v2585 = vand.u32 2147483647, %v2584
          %v2587 = vcvt.s32.f32 %v2580
          %v2588 = vmul.f32 %v2587, %v2585
          %v2589 = vxor.u32 %v2588, 2147483648
          %v2590 = vsel %vm2507, %v2589, %v2588
          %v2591 = vsub.s32 4, %v2567
          %v2592 = vsel %vm2507, %v2591, %v2567
          %v2593 = vsel %vm2506, %v1779, %v2590
          %v2594 = vsel %vm2506, 0, %v2592
          %v2595 = vcosq.f32.pop %v2593
          %v2596 = vsinq.f32.pop %v2593
          %vm2597 = vweird.f32 %v1779
          %v2598 = vand.u32 %v2594, 3
          %vm2599 = vcmp.lt.s32.totalorder %v2598, 2
          %vm2600 = vcmp.eq.s32.totalorder %v2598, 0
          %v2601 = vxor.u32 %v2596, 2147483648
          %v2602 = vsel %vm2600, %v2595, %v2601
          %vm2603 = vcmp.eq.s32.totalorder %v2598, 2
          %v2604 = vxor.u32 %v2595, 2147483648
          %v2605 = vsel %vm2603, %v2604, %v2596
          %v2606 = vsel %vm2599, %v2602, %v2605
          %v2607 = vsel %vm2597, nan, %v2606
          %s2608 = sld [smem:[#allocation2 + $0x1]]
          %s2609 = sld [smem:[#allocation2 + $0x52]]
          %v2610 = vstv %s2608
          %v2611 = vmul.f32 %v2610, %v1883
          %v2612 = vmul.f32 %v2610, %v1987
          %v2613 = vmul.f32 %v2610, %v2091
          %v2614 = vmul.f32 %v2610, %v2195
          %v2615 = vadd.f32 %v1725, %v2611
          %v2616 = vadd.f32 %v1726, %v2612
          %v2617 = vadd.f32 %v1727, %v2613
          %v2618 = vadd.f32 %v1728, %v2614
          %v2619 = vstv %s2609
          %v2620 = vmul.f32 %v2619, %v2298
          %v2621 = vmul.f32 %v2619, %v2401
          %v2622 = vmul.f32 %v2619, %v2504
          %v2623 = vmul.f32 %v2619, %v2607
          %v2624 = vadd.f32 %v2615, %v2620
          %v2625 = vadd.f32 %v2616, %v2621
          %v2626 = vadd.f32 %v2617, %v2622
          %v2627 = vadd.f32 %v2618, %v2623
          %s2628 = sld [smem:[#allocation2 + $0x4]]
          %s2629 = sld [smem:[#allocation2 + $0x55]]
          %v2630 = vstv %s2628
          %v2631 = vmul.f32 %v2630, %v1883
          %v2632 = vmul.f32 %v2630, %v1987
          %v2633 = vmul.f32 %v2630, %v2091
          %v2634 = vmul.f32 %v2630, %v2195
          %v2635 = vadd.f32 %v1745, %v2631
          %v2636 = vadd.f32 %v1746, %v2632
          %v2637 = vadd.f32 %v1747, %v2633
          %v2638 = vadd.f32 %v1748, %v2634
          %v2639 = vstv %s2629
          %v2640 = vmul.f32 %v2639, %v2298
          %v2641 = vmul.f32 %v2639, %v2401
          %v2642 = vmul.f32 %v2639, %v2504
          %v2643 = vmul.f32 %v2639, %v2607
          %v2644 = vadd.f32 %v2635, %v2640
          %v2645 = vadd.f32 %v2636, %v2641
          %v2646 = vadd.f32 %v2637, %v2642
          %v2647 = vadd.f32 %v2638, %v2643
          %s2648 = sld [smem:[#allocation2 + $0x7]]
          %s2649 = sld [smem:[#allocation2 + $0x58]]
          %v2650 = vstv %s2648
          %v2651 = vmul.f32 %v2650, %v1883
          %v2652 = vmul.f32 %v2650, %v1987
          %v2653 = vmul.f32 %v2650, %v2091
          %v2654 = vmul.f32 %v2650, %v2195
          %v2655 = vadd.f32 %v1765, %v2651
          %v2656 = vadd.f32 %v1766, %v2652
          %v2657 = vadd.f32 %v1767, %v2653
          %v2658 = vadd.f32 %v1768, %v2654
          %v2659 = vstv %s2649
          %v2660 = vmul.f32 %v2659, %v2298
          %v2661 = vmul.f32 %v2659, %v2401
          %v2662 = vmul.f32 %v2659, %v2504
          %v2663 = vmul.f32 %v2659, %v2607
          %v2664 = vadd.f32 %v2655, %v2660
          %v2665 = vadd.f32 %v2656, %v2661
          %v2666 = vadd.f32 %v2657, %v2662
          %v2667 = vadd.f32 %v2658, %v2663
          %v2668 = vmul.f32 %v1883, %v2298
          %v2669 = vmul.f32 %v1987, %v2401
          %v2670 = vmul.f32 %v2091, %v2504
          %v2671 = vmul.f32 %v2195, %v2607
          %v2672 = vmul.f32 %v2668, 2.0
          %v2673 = vmul.f32 %v2669, 2.0
          %v2674 = vmul.f32 %v2670, 2.0
          %v2675 = vmul.f32 %v2671, 2.0
          %v2676 = vmul.f32 %v1883, %v1883
          %v2677 = vmul.f32 %v1987, %v1987
          %v2678 = vmul.f32 %v2091, %v2091
          %v2679 = vmul.f32 %v2195, %v2195
          %v2680 = vmul.f32 %v2676, 2.0
          %v2681 = vmul.f32 %v2677, 2.0
          %v2682 = vmul.f32 %v2678, 2.0
          %v2683 = vmul.f32 %v2679, 2.0
          %v2684 = vsub.f32 1.0, %v2680
          %v2685 = vsub.f32 1.0, %v2681
          %v2686 = vsub.f32 1.0, %v2682
          %v2687 = vsub.f32 1.0, %v2683
          %s2688 = sld [smem:[#allocation2 + $0xa]]
          %s2689 = sld [smem:[#allocation2 + $0x5b]]
          %v2690 = vstv %s2688
          %v2691 = vmul.f32 %v2690, %v2672
          %v2692 = vmul.f32 %v2690, %v2673
          %v2693 = vmul.f32 %v2690, %v2674
          %v2694 = vmul.f32 %v2690, %v2675
          %v2695 = vadd.f32 %v2624, %v2691
          %v2696 = vadd.f32 %v2625, %v2692
          %v2697 = vadd.f32 %v2626, %v2693
          %v2698 = vadd.f32 %v2627, %v2694
          %v2699 = vstv %s2689
          %v2700 = vmul.f32 %v2699, %v2684
          %v2701 = vmul.f32 %v2699, %v2685
          %v2702 = vmul.f32 %v2699, %v2686
          %v2703 = vmul.f32 %v2699, %v2687
          %v2704 = vadd.f32 %v2695, %v2700
          %v2705 = vadd.f32 %v2696, %v2701
          %v2706 = vadd.f32 %v2697, %v2702
          %v2707 = vadd.f32 %v2698, %v2703
          %s2708 = sld [smem:[#allocation2 + $0xd]]
          %s2709 = sld [smem:[#allocation2 + $0x5e]]
          %v2710 = vstv %s2708
          %v2711 = vmul.f32 %v2710, %v2672
          %v2712 = vmul.f32 %v2710, %v2673
          %v2713 = vmul.f32 %v2710, %v2674
          %v2714 = vmul.f32 %v2710, %v2675
          %v2715 = vadd.f32 %v2644, %v2711
          %v2716 = vadd.f32 %v2645, %v2712
          %v2717 = vadd.f32 %v2646, %v2713
          %v2718 = vadd.f32 %v2647, %v2714
          %v2719 = vstv %s2709
          %v2720 = vmul.f32 %v2719, %v2684
          %v2721 = vmul.f32 %v2719, %v2685
          %v2722 = vmul.f32 %v2719, %v2686
          %v2723 = vmul.f32 %v2719, %v2687
          %v2724 = vadd.f32 %v2715, %v2720
          %v2725 = vadd.f32 %v2716, %v2721
          %v2726 = vadd.f32 %v2717, %v2722
          %v2727 = vadd.f32 %v2718, %v2723
          %s2728 = sld [smem:[#allocation2 + $0x10]]
          %s2729 = sld [smem:[#allocation2 + $0x61]]
          %v2730 = vstv %s2728
          %v2731 = vmul.f32 %v2730, %v2672
          %v2732 = vmul.f32 %v2730, %v2673
          %v2733 = vmul.f32 %v2730, %v2674
          %v2734 = vmul.f32 %v2730, %v2675
          %v2735 = vadd.f32 %v2664, %v2731
          %v2736 = vadd.f32 %v2665, %v2732
          %v2737 = vadd.f32 %v2666, %v2733
          %v2738 = vadd.f32 %v2667, %v2734
          %v2739 = vstv %s2729
          %v2740 = vmul.f32 %v2739, %v2684
          %v2741 = vmul.f32 %v2739, %v2685
          %v2742 = vmul.f32 %v2739, %v2686
          %v2743 = vmul.f32 %v2739, %v2687
          %v2744 = vadd.f32 %v2735, %v2740
          %v2745 = vadd.f32 %v2736, %v2741
          %v2746 = vadd.f32 %v2737, %v2742
          %v2747 = vadd.f32 %v2738, %v2743
          %v2748 = vmul.f32 %v2672, %v2684
          %v2749 = vmul.f32 %v2673, %v2685
          %v2750 = vmul.f32 %v2674, %v2686
          %v2751 = vmul.f32 %v2675, %v2687
          %v2752 = vmul.f32 %v2748, 2.0
          %v2753 = vmul.f32 %v2749, 2.0
          %v2754 = vmul.f32 %v2750, 2.0
          %v2755 = vmul.f32 %v2751, 2.0
          %v2756 = vmul.f32 %v2672, %v2672
          %v2757 = vmul.f32 %v2673, %v2673
          %v2758 = vmul.f32 %v2674, %v2674
          %v2759 = vmul.f32 %v2675, %v2675
          %v2760 = vmul.f32 %v2756, 2.0
          %v2761 = vmul.f32 %v2757, 2.0
          %v2762 = vmul.f32 %v2758, 2.0
          %v2763 = vmul.f32 %v2759, 2.0
          %v2764 = vsub.f32 1.0, %v2760
          %v2765 = vsub.f32 1.0, %v2761
          %v2766 = vsub.f32 1.0, %v2762
          %v2767 = vsub.f32 1.0, %v2763
          %s2768 = sld [smem:[#allocation2 + $0x13]]
          %s2769 = sld [smem:[#allocation2 + $0x64]]
          %v2770 = vstv %s2768
          %v2771 = vmul.f32 %v2770, %v2752
          %v2772 = vmul.f32 %v2770, %v2753
          %v2773 = vmul.f32 %v2770, %v2754
          %v2774 = vmul.f32 %v2770, %v2755
          %v2775 = vadd.f32 %v2704, %v2771
          %v2776 = vadd.f32 %v2705, %v2772
          %v2777 = vadd.f32 %v2706, %v2773
          %v2778 = vadd.f32 %v2707, %v2774
          %v2779 = vstv %s2769
          %v2780 = vmul.f32 %v2779, %v2764
          %v2781 = vmul.f32 %v2779, %v2765
          %v2782 = vmul.f32 %v2779, %v2766
          %v2783 = vmul.f32 %v2779, %v2767
          %v2784 = vadd.f32 %v2775, %v2780
          %v2785 = vadd.f32 %v2776, %v2781
          %v2786 = vadd.f32 %v2777, %v2782
          %v2787 = vadd.f32 %v2778, %v2783
          %s2788 = sld [smem:[#allocation2 + $0x16]]
          %s2789 = sld [smem:[#allocation2 + $0x67]]
          %v2790 = vstv %s2788
          %v2791 = vmul.f32 %v2790, %v2752
          %v2792 = vmul.f32 %v2790, %v2753
          %v2793 = vmul.f32 %v2790, %v2754
          %v2794 = vmul.f32 %v2790, %v2755
          %v2795 = vadd.f32 %v2724, %v2791
          %v2796 = vadd.f32 %v2725, %v2792
          %v2797 = vadd.f32 %v2726, %v2793
          %v2798 = vadd.f32 %v2727, %v2794
          %v2799 = vstv %s2789
          %v2800 = vmul.f32 %v2799, %v2764
          %v2801 = vmul.f32 %v2799, %v2765
          %v2802 = vmul.f32 %v2799, %v2766
          %v2803 = vmul.f32 %v2799, %v2767
          %v2804 = vadd.f32 %v2795, %v2800
          %v2805 = vadd.f32 %v2796, %v2801
          %v2806 = vadd.f32 %v2797, %v2802
          %v2807 = vadd.f32 %v2798, %v2803
          %s2808 = sld [smem:[#allocation2 + $0x19]]
          %s2809 = sld [smem:[#allocation2 + $0x6a]]
          %v2810 = vstv %s2808
          %v2811 = vmul.f32 %v2810, %v2752
          %v2812 = vmul.f32 %v2810, %v2753
          %v2813 = vmul.f32 %v2810, %v2754
          %v2814 = vmul.f32 %v2810, %v2755
          %v2815 = vadd.f32 %v2744, %v2811
          %v2816 = vadd.f32 %v2745, %v2812
          %v2817 = vadd.f32 %v2746, %v2813
          %v2818 = vadd.f32 %v2747, %v2814
          %v2819 = vstv %s2809
          %v2820 = vmul.f32 %v2819, %v2764
          %v2821 = vmul.f32 %v2819, %v2765
          %v2822 = vmul.f32 %v2819, %v2766
          %v2823 = vmul.f32 %v2819, %v2767
          %v2824 = vadd.f32 %v2815, %v2820
          %v2825 = vadd.f32 %v2816, %v2821
          %v2826 = vadd.f32 %v2817, %v2822
          %v2827 = vadd.f32 %v2818, %v2823
          %v2828 = vmul.f32 %v2752, %v2764
          %v2829 = vmul.f32 %v2753, %v2765
          %v2830 = vmul.f32 %v2754, %v2766
          %v2831 = vmul.f32 %v2755, %v2767
          %v2832 = vmul.f32 %v2828, 2.0
          %v2833 = vmul.f32 %v2829, 2.0
          %v2834 = vmul.f32 %v2830, 2.0
          %v2835 = vmul.f32 %v2831, 2.0
          %v2836 = vmul.f32 %v2752, %v2752
          %v2837 = vmul.f32 %v2753, %v2753
          %v2838 = vmul.f32 %v2754, %v2754
          %v2839 = vmul.f32 %v2755, %v2755
          %v2840 = vmul.f32 %v2836, 2.0
          %v2841 = vmul.f32 %v2837, 2.0
          %v2842 = vmul.f32 %v2838, 2.0
          %v2843 = vmul.f32 %v2839, 2.0
          %v2844 = vsub.f32 1.0, %v2840
          %v2845 = vsub.f32 1.0, %v2841
          %v2846 = vsub.f32 1.0, %v2842
          %v2847 = vsub.f32 1.0, %v2843
          %s2848 = sld [smem:[#allocation2 + $0x1c]]
          %s2849 = sld [smem:[#allocation2 + $0x6d]]
          %v2850 = vstv %s2848
          %v2851 = vmul.f32 %v2850, %v2832
          %v2852 = vmul.f32 %v2850, %v2833
          %v2853 = vmul.f32 %v2850, %v2834
          %v2854 = vmul.f32 %v2850, %v2835
          %v2855 = vadd.f32 %v2784, %v2851
          %v2856 = vadd.f32 %v2785, %v2852
          %v2857 = vadd.f32 %v2786, %v2853
          %v2858 = vadd.f32 %v2787, %v2854
          %v2859 = vstv %s2849
          %v2860 = vmul.f32 %v2859, %v2844
          %v2861 = vmul.f32 %v2859, %v2845
          %v2862 = vmul.f32 %v2859, %v2846
          %v2863 = vmul.f32 %v2859, %v2847
          %v2864 = vadd.f32 %v2855, %v2860
          %v2865 = vadd.f32 %v2856, %v2861
          %v2866 = vadd.f32 %v2857, %v2862
          %v2867 = vadd.f32 %v2858, %v2863
          %s2868 = sld [smem:[#allocation2 + $0x1f]]
          %s2869 = sld [smem:[#allocation2 + $0x70]]
          %v2870 = vstv %s2868
          %v2871 = vmul.f32 %v2870, %v2832
          %v2872 = vmul.f32 %v2870, %v2833
          %v2873 = vmul.f32 %v2870, %v2834
          %v2874 = vmul.f32 %v2870, %v2835
          %v2875 = vadd.f32 %v2804, %v2871
          %v2876 = vadd.f32 %v2805, %v2872
          %v2877 = vadd.f32 %v2806, %v2873
          %v2878 = vadd.f32 %v2807, %v2874
          %v2879 = vstv %s2869
          %v2880 = vmul.f32 %v2879, %v2844
          %v2881 = vmul.f32 %v2879, %v2845
          %v2882 = vmul.f32 %v2879, %v2846
          %v2883 = vmul.f32 %v2879, %v2847
          %v2884 = vadd.f32 %v2875, %v2880
          %v2885 = vadd.f32 %v2876, %v2881
          %v2886 = vadd.f32 %v2877, %v2882
          %v2887 = vadd.f32 %v2878, %v2883
          %s2888 = sld [smem:[#allocation2 + $0x22]]
          %s2889 = sld [smem:[#allocation2 + $0x73]]
          %v2890 = vstv %s2888
          %v2891 = vmul.f32 %v2890, %v2832
          %v2892 = vmul.f32 %v2890, %v2833
          %v2893 = vmul.f32 %v2890, %v2834
          %v2894 = vmul.f32 %v2890, %v2835
          %v2895 = vadd.f32 %v2824, %v2891
          %v2896 = vadd.f32 %v2825, %v2892
          %v2897 = vadd.f32 %v2826, %v2893
          %v2898 = vadd.f32 %v2827, %v2894
          %v2899 = vstv %s2889
          %v2900 = vmul.f32 %v2899, %v2844
          %v2901 = vmul.f32 %v2899, %v2845
          %v2902 = vmul.f32 %v2899, %v2846
          %v2903 = vmul.f32 %v2899, %v2847
          %v2904 = vadd.f32 %v2895, %v2900
          %v2905 = vadd.f32 %v2896, %v2901
          %v2906 = vadd.f32 %v2897, %v2902
          %v2907 = vadd.f32 %v2898, %v2903
          %v2908 = vmul.f32 %v2832, %v2844
          %v2909 = vmul.f32 %v2833, %v2845
          %v2910 = vmul.f32 %v2834, %v2846
          %v2911 = vmul.f32 %v2835, %v2847
          %v2912 = vmul.f32 %v2908, 2.0
          %v2913 = vmul.f32 %v2909, 2.0
          %v2914 = vmul.f32 %v2910, 2.0
          %v2915 = vmul.f32 %v2911, 2.0
          %v2916 = vmul.f32 %v2832, %v2832
          %v2917 = vmul.f32 %v2833, %v2833
          %v2918 = vmul.f32 %v2834, %v2834
          %v2919 = vmul.f32 %v2835, %v2835
          %v2920 = vmul.f32 %v2916, 2.0
          %v2921 = vmul.f32 %v2917, 2.0
          %v2922 = vmul.f32 %v2918, 2.0
          %v2923 = vmul.f32 %v2919, 2.0
          %v2924 = vsub.f32 1.0, %v2920
          %v2925 = vsub.f32 1.0, %v2921
          %v2926 = vsub.f32 1.0, %v2922
          %v2927 = vsub.f32 1.0, %v2923
          %s2928 = sld [smem:[#allocation2 + $0x25]]
          %s2929 = sld [smem:[#allocation2 + $0x76]]
          %v2930 = vstv %s2928
          %v2931 = vmul.f32 %v2930, %v2912
          %v2932 = vmul.f32 %v2930, %v2913
          %v2933 = vmul.f32 %v2930, %v2914
          %v2934 = vmul.f32 %v2930, %v2915
          %v2935 = vadd.f32 %v2864, %v2931
          %v2936 = vadd.f32 %v2865, %v2932
          %v2937 = vadd.f32 %v2866, %v2933
          %v2938 = vadd.f32 %v2867, %v2934
          %v2939 = vstv %s2929
          %v2940 = vmul.f32 %v2939, %v2924
          %v2941 = vmul.f32 %v2939, %v2925
          %v2942 = vmul.f32 %v2939, %v2926
          %v2943 = vmul.f32 %v2939, %v2927
          %v2944 = vadd.f32 %v2935, %v2940
          %v2945 = vadd.f32 %v2936, %v2941
          %v2946 = vadd.f32 %v2937, %v2942
          %v2947 = vadd.f32 %v2938, %v2943
          %s2948 = sld [smem:[#allocation2 + $0x28]]
          %s2949 = sld [smem:[#allocation2 + $0x79]]
          %v2950 = vstv %s2948
          %v2951 = vmul.f32 %v2950, %v2912
          %v2952 = vmul.f32 %v2950, %v2913
          %v2953 = vmul.f32 %v2950, %v2914
          %v2954 = vmul.f32 %v2950, %v2915
          %v2955 = vadd.f32 %v2884, %v2951
          %v2956 = vadd.f32 %v2885, %v2952
          %v2957 = vadd.f32 %v2886, %v2953
          %v2958 = vadd.f32 %v2887, %v2954
          %v2959 = vstv %s2949
          %v2960 = vmul.f32 %v2959, %v2924
          %v2961 = vmul.f32 %v2959, %v2925
          %v2962 = vmul.f32 %v2959, %v2926
          %v2963 = vmul.f32 %v2959, %v2927
          %v2964 = vadd.f32 %v2955, %v2960
          %v2965 = vadd.f32 %v2956, %v2961
          %v2966 = vadd.f32 %v2957, %v2962
          %v2967 = vadd.f32 %v2958, %v2963
          %s2968 = sld [smem:[#allocation2 + $0x2b]]
          %s2969 = sld [smem:[#allocation2 + $0x7c]]
          %v2970 = vstv %s2968
          %v2971 = vmul.f32 %v2970, %v2912
          %v2972 = vmul.f32 %v2970, %v2913
          %v2973 = vmul.f32 %v2970, %v2914
          %v2974 = vmul.f32 %v2970, %v2915
          %v2975 = vadd.f32 %v2904, %v2971
          %v2976 = vadd.f32 %v2905, %v2972
          %v2977 = vadd.f32 %v2906, %v2973
          %v2978 = vadd.f32 %v2907, %v2974
          %v2979 = vstv %s2969
          %v2980 = vmul.f32 %v2979, %v2924
          %v2981 = vmul.f32 %v2979, %v2925
          %v2982 = vmul.f32 %v2979, %v2926
          %v2983 = vmul.f32 %v2979, %v2927
          %v2984 = vadd.f32 %v2975, %v2980
          %v2985 = vadd.f32 %v2976, %v2981
          %v2986 = vadd.f32 %v2977, %v2982
          %v2987 = vadd.f32 %v2978, %v2983
          %v2988 = vmul.f32 %v2912, %v2924
          %v2989 = vmul.f32 %v2913, %v2925
          %v2990 = vmul.f32 %v2914, %v2926
          %v2991 = vmul.f32 %v2915, %v2927
          %v2992 = vmul.f32 %v2988, 2.0
          %v2993 = vmul.f32 %v2989, 2.0
          %v2994 = vmul.f32 %v2990, 2.0
          %v2995 = vmul.f32 %v2991, 2.0
          %v2996 = vmul.f32 %v2912, %v2912
          %v2997 = vmul.f32 %v2913, %v2913
          %v2998 = vmul.f32 %v2914, %v2914
          %v2999 = vmul.f32 %v2915, %v2915
          %v3000 = vmul.f32 %v2996, 2.0
          %v3001 = vmul.f32 %v2997, 2.0
          %v3002 = vmul.f32 %v2998, 2.0
          %v3003 = vmul.f32 %v2999, 2.0
          %v3004 = vsub.f32 1.0, %v3000
          %v3005 = vsub.f32 1.0, %v3001
          %v3006 = vsub.f32 1.0, %v3002
          %v3007 = vsub.f32 1.0, %v3003
          %s3008 = sld [smem:[#allocation2 + $0x2e]]
          %s3009 = sld [smem:[#allocation2 + $0x7f]]
          %v3010 = vstv %s3008
          %v3011 = vmul.f32 %v3010, %v2992
          %v3012 = vmul.f32 %v3010, %v2993
          %v3013 = vmul.f32 %v3010, %v2994
          %v3014 = vmul.f32 %v3010, %v2995
          %v3015 = vadd.f32 %v2944, %v3011
          %v3016 = vadd.f32 %v2945, %v3012
          %v3017 = vadd.f32 %v2946, %v3013
          %v3018 = vadd.f32 %v2947, %v3014
          %v3019 = vstv %s3009
          %v3020 = vmul.f32 %v3019, %v3004
          %v3021 = vmul.f32 %v3019, %v3005
          %v3022 = vmul.f32 %v3019, %v3006
          %v3023 = vmul.f32 %v3019, %v3007
          %v3024 = vadd.f32 %v3015, %v3020
          %v3025 = vadd.f32 %v3016, %v3021
          %v3026 = vadd.f32 %v3017, %v3022
          %v3027 = vadd.f32 %v3018, %v3023
          %s3028 = sld [smem:[#allocation2 + $0x31]]
          %s3029 = sld [smem:[#allocation2 + $0x82]]
          %v3030 = vstv %s3028
          %v3031 = vmul.f32 %v3030, %v2992
          %v3032 = vmul.f32 %v3030, %v2993
          %v3033 = vmul.f32 %v3030, %v2994
          %v3034 = vmul.f32 %v3030, %v2995
          %v3035 = vadd.f32 %v2964, %v3031
          %v3036 = vadd.f32 %v2965, %v3032
          %v3037 = vadd.f32 %v2966, %v3033
          %v3038 = vadd.f32 %v2967, %v3034
          %v3039 = vstv %s3029
          %v3040 = vmul.f32 %v3039, %v3004
          %v3041 = vmul.f32 %v3039, %v3005
          %v3042 = vmul.f32 %v3039, %v3006
          %v3043 = vmul.f32 %v3039, %v3007
          %v3044 = vadd.f32 %v3035, %v3040
          %v3045 = vadd.f32 %v3036, %v3041
          %v3046 = vadd.f32 %v3037, %v3042
          %v3047 = vadd.f32 %v3038, %v3043
          %s3048 = sld [smem:[#allocation2 + $0x34]]
          %s3049 = sld [smem:[#allocation2 + $0x85]]
          %v3050 = vstv %s3048
          %v3051 = vmul.f32 %v3050, %v2992
          %v3052 = vmul.f32 %v3050, %v2993
          %v3053 = vmul.f32 %v3050, %v2994
          %v3054 = vmul.f32 %v3050, %v2995
          %v3055 = vadd.f32 %v2984, %v3051
          %v3056 = vadd.f32 %v2985, %v3052
          %v3057 = vadd.f32 %v2986, %v3053
          %v3058 = vadd.f32 %v2987, %v3054
          %v3059 = vstv %s3049
          %v3060 = vmul.f32 %v3059, %v3004
          %v3061 = vmul.f32 %v3059, %v3005
          %v3062 = vmul.f32 %v3059, %v3006
          %v3063 = vmul.f32 %v3059, %v3007
          %v3064 = vadd.f32 %v3055, %v3060
          %v3065 = vadd.f32 %v3056, %v3061
          %v3066 = vadd.f32 %v3057, %v3062
          %v3067 = vadd.f32 %v3058, %v3063
          %v3068 = vmul.f32 %v2992, %v3004
          %v3069 = vmul.f32 %v2993, %v3005
          %v3070 = vmul.f32 %v2994, %v3006
          %v3071 = vmul.f32 %v2995, %v3007
          %v3072 = vmul.f32 %v3068, 2.0
          %v3073 = vmul.f32 %v3069, 2.0
          %v3074 = vmul.f32 %v3070, 2.0
          %v3075 = vmul.f32 %v3071, 2.0
          %v3076 = vmul.f32 %v2992, %v2992
          %v3077 = vmul.f32 %v2993, %v2993
          %v3078 = vmul.f32 %v2994, %v2994
          %v3079 = vmul.f32 %v2995, %v2995
          %v3080 = vmul.f32 %v3076, 2.0
          %v3081 = vmul.f32 %v3077, 2.0
          %v3082 = vmul.f32 %v3078, 2.0
          %v3083 = vmul.f32 %v3079, 2.0
          %v3084 = vsub.f32 1.0, %v3080
          %v3085 = vsub.f32 1.0, %v3081
          %v3086 = vsub.f32 1.0, %v3082
          %v3087 = vsub.f32 1.0, %v3083
          %s3088 = sld [smem:[#allocation2 + $0x37]]
          %s3089 = sld [smem:[#allocation2 + $0x88]]
          %v3090 = vstv %s3088
          %v3091 = vmul.f32 %v3090, %v3072
          %v3092 = vmul.f32 %v3090, %v3073
          %v3093 = vmul.f32 %v3090, %v3074
          %v3094 = vmul.f32 %v3090, %v3075
          %v3095 = vadd.f32 %v3024, %v3091
          %v3096 = vadd.f32 %v3025, %v3092
          %v3097 = vadd.f32 %v3026, %v3093
          %v3098 = vadd.f32 %v3027, %v3094
          %v3099 = vstv %s3089
          %v3100 = vmul.f32 %v3099, %v3084
          %v3101 = vmul.f32 %v3099, %v3085
          %v3102 = vmul.f32 %v3099, %v3086
          %v3103 = vmul.f32 %v3099, %v3087
          %v3104 = vadd.f32 %v3095, %v3100
          %v3105 = vadd.f32 %v3096, %v3101
          %v3106 = vadd.f32 %v3097, %v3102
          %v3107 = vadd.f32 %v3098, %v3103
          %s3108 = sld [smem:[#allocation2 + $0x3a]]
          %s3109 = sld [smem:[#allocation2 + $0x8b]]
          %v3110 = vstv %s3108
          %v3111 = vmul.f32 %v3110, %v3072
          %v3112 = vmul.f32 %v3110, %v3073
          %v3113 = vmul.f32 %v3110, %v3074
          %v3114 = vmul.f32 %v3110, %v3075
          %v3115 = vadd.f32 %v3044, %v3111
          %v3116 = vadd.f32 %v3045, %v3112
          %v3117 = vadd.f32 %v3046, %v3113
          %v3118 = vadd.f32 %v3047, %v3114
          %v3119 = vstv %s3109
          %v3120 = vmul.f32 %v3119, %v3084
          %v3121 = vmul.f32 %v3119, %v3085
          %v3122 = vmul.f32 %v3119, %v3086
          %v3123 = vmul.f32 %v3119, %v3087
          %v3124 = vadd.f32 %v3115, %v3120
          %v3125 = vadd.f32 %v3116, %v3121
          %v3126 = vadd.f32 %v3117, %v3122
          %v3127 = vadd.f32 %v3118, %v3123
          %s3128 = sld [smem:[#allocation2 + $0x3d]]
          %s3129 = sld [smem:[#allocation2 + $0x8e]]
          %v3130 = vstv %s3128
          %v3131 = vmul.f32 %v3130, %v3072
          %v3132 = vmul.f32 %v3130, %v3073
          %v3133 = vmul.f32 %v3130, %v3074
          %v3134 = vmul.f32 %v3130, %v3075
          %v3135 = vadd.f32 %v3064, %v3131
          %v3136 = vadd.f32 %v3065, %v3132
          %v3137 = vadd.f32 %v3066, %v3133
          %v3138 = vadd.f32 %v3067, %v3134
          %v3139 = vstv %s3129
          %v3140 = vmul.f32 %v3139, %v3084
          %v3141 = vmul.f32 %v3139, %v3085
          %v3142 = vmul.f32 %v3139, %v3086
          %v3143 = vmul.f32 %v3139, %v3087
          %v3144 = vadd.f32 %v3135, %v3140
          %v3145 = vadd.f32 %v3136, %v3141
          %v3146 = vadd.f32 %v3137, %v3142
          %v3147 = vadd.f32 %v3138, %v3143
          %v3148 = vmul.f32 %v3072, %v3084
          %v3149 = vmul.f32 %v3073, %v3085
          %v3150 = vmul.f32 %v3074, %v3086
          %v3151 = vmul.f32 %v3075, %v3087
          %v3152 = vmul.f32 %v3148, 2.0
          %v3153 = vmul.f32 %v3149, 2.0
          %v3154 = vmul.f32 %v3150, 2.0
          %v3155 = vmul.f32 %v3151, 2.0
          %v3156 = vmul.f32 %v3072, %v3072
          %v3157 = vmul.f32 %v3073, %v3073
          %v3158 = vmul.f32 %v3074, %v3074
          %v3159 = vmul.f32 %v3075, %v3075
          %v3160 = vmul.f32 %v3156, 2.0
          %v3161 = vmul.f32 %v3157, 2.0
          %v3162 = vmul.f32 %v3158, 2.0
          %v3163 = vmul.f32 %v3159, 2.0
          %v3164 = vsub.f32 1.0, %v3160
          %v3165 = vsub.f32 1.0, %v3161
          %v3166 = vsub.f32 1.0, %v3162
          %v3167 = vsub.f32 1.0, %v3163
          %s3168 = sld [smem:[#allocation2 + $0x40]]
          %s3169 = sld [smem:[#allocation2 + $0x91]]
          %v3170 = vstv %s3168
          %v3171 = vmul.f32 %v3170, %v3152
          %v3172 = vmul.f32 %v3170, %v3153
          %v3173 = vmul.f32 %v3170, %v3154
          %v3174 = vmul.f32 %v3170, %v3155
          %v3175 = vadd.f32 %v3104, %v3171
          %v3176 = vadd.f32 %v3105, %v3172
          %v3177 = vadd.f32 %v3106, %v3173
          %v3178 = vadd.f32 %v3107, %v3174
          %v3179 = vstv %s3169
          %v3180 = vmul.f32 %v3179, %v3164
          %v3181 = vmul.f32 %v3179, %v3165
          %v3182 = vmul.f32 %v3179, %v3166
          %v3183 = vmul.f32 %v3179, %v3167
          %v3184 = vadd.f32 %v3175, %v3180
          %v3185 = vadd.f32 %v3176, %v3181
          %v3186 = vadd.f32 %v3177, %v3182
          %v3187 = vadd.f32 %v3178, %v3183
          %s3188 = sld [smem:[#allocation2 + $0x43]]
          %s3189 = sld [smem:[#allocation2 + $0x94]]
          %v3190 = vstv %s3188
          %v3191 = vmul.f32 %v3190, %v3152
          %v3192 = vmul.f32 %v3190, %v3153
          %v3193 = vmul.f32 %v3190, %v3154
          %v3194 = vmul.f32 %v3190, %v3155
          %v3195 = vadd.f32 %v3124, %v3191
          %v3196 = vadd.f32 %v3125, %v3192
          %v3197 = vadd.f32 %v3126, %v3193
          %v3198 = vadd.f32 %v3127, %v3194
          %v3199 = vstv %s3189
          %v3200 = vmul.f32 %v3199, %v3164
          %v3201 = vmul.f32 %v3199, %v3165
          %v3202 = vmul.f32 %v3199, %v3166
          %v3203 = vmul.f32 %v3199, %v3167
          %v3204 = vadd.f32 %v3195, %v3200
          %v3205 = vadd.f32 %v3196, %v3201
          %v3206 = vadd.f32 %v3197, %v3202
          %v3207 = vadd.f32 %v3198, %v3203
          %s3208 = sld [smem:[#allocation2 + $0x46]]
          %s3209 = sld [smem:[#allocation2 + $0x97]]
          %v3210 = vstv %s3208
          %v3211 = vmul.f32 %v3210, %v3152
          %v3212 = vmul.f32 %v3210, %v3153
          %v3213 = vmul.f32 %v3210, %v3154
          %v3214 = vmul.f32 %v3210, %v3155
          %v3215 = vadd.f32 %v3144, %v3211
          %v3216 = vadd.f32 %v3145, %v3212
          %v3217 = vadd.f32 %v3146, %v3213
          %v3218 = vadd.f32 %v3147, %v3214
          %v3219 = vstv %s3209
          %v3220 = vmul.f32 %v3219, %v3164
          %v3221 = vmul.f32 %v3219, %v3165
          %v3222 = vmul.f32 %v3219, %v3166
          %v3223 = vmul.f32 %v3219, %v3167
          %v3224 = vadd.f32 %v3215, %v3220
          %v3225 = vadd.f32 %v3216, %v3221
          %v3226 = vadd.f32 %v3217, %v3222
          %v3227 = vadd.f32 %v3218, %v3223
          %v3228 = vmul.f32 %v3152, %v3164
          %v3229 = vmul.f32 %v3153, %v3165
          %v3230 = vmul.f32 %v3154, %v3166
          %v3231 = vmul.f32 %v3155, %v3167
          %v3232 = vmul.f32 %v3228, 2.0
          %v3233 = vmul.f32 %v3229, 2.0
          %v3234 = vmul.f32 %v3230, 2.0
          %v3235 = vmul.f32 %v3231, 2.0
          %v3236 = vmul.f32 %v3152, %v3152
          %v3237 = vmul.f32 %v3153, %v3153
          %v3238 = vmul.f32 %v3154, %v3154
          %v3239 = vmul.f32 %v3155, %v3155
          %v3240 = vmul.f32 %v3236, 2.0
          %v3241 = vmul.f32 %v3237, 2.0
          %v3242 = vmul.f32 %v3238, 2.0
          %v3243 = vmul.f32 %v3239, 2.0
          %v3244 = vsub.f32 1.0, %v3240
          %v3245 = vsub.f32 1.0, %v3241
          %v3246 = vsub.f32 1.0, %v3242
          %v3247 = vsub.f32 1.0, %v3243
          %s3248 = sld [smem:[#allocation2 + $0x49]]
          %s3249 = sld [smem:[#allocation2 + $0x9a]]
          %v3250 = vstv %s3248
          %v3251 = vmul.f32 %v3250, %v3232
          %v3252 = vmul.f32 %v3250, %v3233
          %v3253 = vmul.f32 %v3250, %v3234
          %v3254 = vmul.f32 %v3250, %v3235
          %v3255 = vadd.f32 %v3184, %v3251
          %v3256 = vadd.f32 %v3185, %v3252
          %v3257 = vadd.f32 %v3186, %v3253
          %v3258 = vadd.f32 %v3187, %v3254
          %v3259 = vstv %s3249
          %v3260 = vmul.f32 %v3259, %v3244
          %v3261 = vmul.f32 %v3259, %v3245
          %v3262 = vmul.f32 %v3259, %v3246
          %v3263 = vmul.f32 %v3259, %v3247
          %v3264 = vadd.f32 %v3255, %v3260
          %v3265 = vadd.f32 %v3256, %v3261
          %v3266 = vadd.f32 %v3257, %v3262
          %v3267 = vadd.f32 %v3258, %v3263
          %s3268 = sld [smem:[#allocation2 + $0x4c]]
          %s3269 = sld [smem:[#allocation2 + $0x9d]]
          %v3270 = vstv %s3268
          %v3271 = vmul.f32 %v3270, %v3232
          %v3272 = vmul.f32 %v3270, %v3233
          %v3273 = vmul.f32 %v3270, %v3234
          %v3274 = vmul.f32 %v3270, %v3235
          %v3275 = vadd.f32 %v3204, %v3271
          %v3276 = vadd.f32 %v3205, %v3272
          %v3277 = vadd.f32 %v3206, %v3273
          %v3278 = vadd.f32 %v3207, %v3274
          %v3279 = vstv %s3269
          %v3280 = vmul.f32 %v3279, %v3244
          %v3281 = vmul.f32 %v3279, %v3245
          %v3282 = vmul.f32 %v3279, %v3246
          %v3283 = vmul.f32 %v3279, %v3247
          %v3284 = vadd.f32 %v3275, %v3280
          %v3285 = vadd.f32 %v3276, %v3281
          %v3286 = vadd.f32 %v3277, %v3282
          %v3287 = vadd.f32 %v3278, %v3283
          %s3288 = sld [smem:[#allocation2 + $0x4f]]
          %s3289 = sld [smem:[#allocation2 + $0xa0]]
          %v3290 = vstv %s3288
          %v3291 = vmul.f32 %v3290, %v3232
          %v3292 = vmul.f32 %v3290, %v3233
          %v3293 = vmul.f32 %v3290, %v3234
          %v3294 = vmul.f32 %v3290, %v3235
          %v3295 = vadd.f32 %v3224, %v3291
          %v3296 = vadd.f32 %v3225, %v3292
          %v3297 = vadd.f32 %v3226, %v3293
          %v3298 = vadd.f32 %v3227, %v3294
          %v3299 = vstv %s3289
          %v3300 = vmul.f32 %v3299, %v3244
          %v3301 = vmul.f32 %v3299, %v3245
          %v3302 = vmul.f32 %v3299, %v3246
          %v3303 = vmul.f32 %v3299, %v3247
          %v3304 = vadd.f32 %v3295, %v3300
          %v3305 = vadd.f32 %v3296, %v3301
          %v3306 = vadd.f32 %v3297, %v3302
          %v3307 = vadd.f32 %v3298, %v3303
          %s3308 = sadd.s32 %s230, 16
          %s3309 = smul.addr %s3308, 8
          %s3310 = scalar_lea.vmem %s200, %s3309 [#allocation4]
          %v3311 = vld [vmem:[%s3310] sm:$0xff]
          %v3312 = vld [vmem:[%s3310 + $0x8] sm:$0xff]
          %v3313 = vld [vmem:[%s3310 + $0x10] sm:$0xff]
          %v3314 = vld [vmem:[%s3310 + $0x18] sm:$0xff]
          %v3315 = vmul.f32 %v3311, 3.1415927
          %v3316 = vmul.f32 %v3312, 3.1415927
          %v3317 = vmul.f32 %v3313, 3.1415927
          %v3318 = vmul.f32 %v3314, 3.1415927
          %v3319 = vand.u32 2147483647, %v3315
          %vm3320 = vcmp.le.f32.partialorder %v3319, 0.7853982
          %vm3321 = vcmp.lt.s32.totalorder %v3315, 0
          %v3322 = vand.u32 %v3315, 2139095040
          %v3323 = vshrl.u32 %v3322, 23
          %v3324 = vsub.s32 %v3323, 127
          %v3325 = vand.u32 2147483647, %v3315
          %v3326 = vand.u32 %v3325, 8388607
          %v3327 = vor.u32 %v3326, 8388608
          %v3328 = vsub.s32 0, %v3327
          %v3329 = vadd.s32 %v3324, 1
          %vm3330 = vcmp.gt.s32.totalorder %v3329, 0
          %v3331 = vsel %vm3330, %v3329, 0
          %v3332 = vshrl.u32 %v3331, 5
          %v3333 = vand.u32 %v3331, 31
          %v3334 = vsub.s32 32, %v3333
          %v3335 = vshrl.u32 683565275, %v3334
          %v3336 = vshll.u32 683565275, %v3333
          %v3337 = vshrl.u32 2475754826, %v3334
          %v3338 = vor.u32 %v3336, %v3337
          %v3339 = vshll.u32 2475754826, %v3333
          %v3340 = vshrl.u32 2131351028, %v3334
          %v3341 = vor.u32 %v3339, %v3340
          %v3342 = vshll.u32 2131351028, %v3333
          %v3343 = vshrl.u32 2102212464, %v3334
          %v3344 = vor.u32 %v3342, %v3343
          %v3345 = vshll.u32 2102212464, %v3333
          %v3346 = vshrl.u32 920167782, %v3334
          %v3347 = vor.u32 %v3345, %v3346
          %v3348 = vshll.u32 920167782, %v3333
          %v3349 = vshrl.u32 1326507024, %v3334
          %v3350 = vor.u32 %v3348, %v3349
          %vm3351 = vcmp.lt.s32.totalorder %v3332, 1
          %vm3352 = vcmp.lt.s32.totalorder %v3332, 2
          %vm3353 = vcmp.lt.s32.totalorder %v3332, 3
          %vm3354 = vcmp.lt.s32.totalorder %v3332, 4
          %v3355 = vsel %vm3351, %v3335, %v3338
          %v3356 = vsel %vm3354, %v3344, 2102212464
          %v3357 = vsel %vm3353, %v3341, %v3356
          %v3358 = vsel %vm3352, %v3355, %v3357
          %v3359 = vsel %vm3351, %v3338, %v3341
          %v3360 = vsel %vm3354, %v3347, 920167782
          %v3361 = vsel %vm3353, %v3344, %v3360
          %v3362 = vsel %vm3352, %v3359, %v3361
          %v3363 = vsel %vm3351, %v3341, %v3344
          %v3364 = vsel %vm3354, %v3350, 1326507024
          %v3365 = vsel %vm3353, %v3347, %v3364
          %v3366 = vsel %vm3352, %v3363, %v3365
          %v3367 = vshll.u32 %v3327, 8
          %v3368 = vmul.u32.u64.compose %v3367, %v3366
          %v3369 = vextract.low.u32 %v3368
          %v3370 = vextract.high.u32 %v3368
          %v3371 = vmul.u32.u64.compose %v3367, %v3362
          %v3372 = vextract.low.u32 %v3371
          %v3373 = vextract.high.u32 %v3371
          %v3374 = vmul.u32 %v3367, %v3358
          %v3375 = vadd.s32 %v3370, %v3372
          %vm3376 = vc.u32 %v3370, %v3372
          %v3377 = vadd.s32 %v3373, 1
          %v3378 = vsel %vm3376, %v3377, %v3373
          %v3379 = vadd.s32 %v3374, %v3378
          %v3380 = vadd.s32 %v3379, 536870912
          %v3381 = vshrl.u32 %v3380, 30
          %v3382 = vshll.u32 %v3381, 30
          %v3383 = vsub.s32 %v3379, %v3382
          %vm3384 = vcmp.lt.s32.totalorder %v3383, 0
          %v3385 = vsub.s32 0, %v3383
          %v3386 = vsel %vm3384, %v3385, %v3383
          %v3387 = vclz %v3386
          %v3388 = vsub.s32 %v3387, 2
          %vm3389 = vcmp.gt.s32.totalorder 0, %v3388
          %v3390 = vsel %vm3389, 0, %v3388
          %v3391 = vsub.s32 32, %v3390
          %v3392 = vshll.u32 %v3383, %v3390
          %v3393 = vshrl.u32 %v3375, %v3391
          %v3394 = vor.u32 %v3392, %v3393
          %v3395 = vsub.s32 4294967266, %v3390
          %v3396 = vadd.s32 %v3395, 127
          %v3397 = vshll.u32 %v3396, 23
          %v3398 = vor.u32 4788187, %v3397
          %v3399 = vand.u32 2147483647, %v3398
          %v3401 = vcvt.s32.f32 %v3394
          %v3402 = vmul.f32 %v3401, %v3399
          %v3403 = vxor.u32 %v3402, 2147483648
          %v3404 = vsel %vm3321, %v3403, %v3402
          %v3405 = vsub.s32 4, %v3381
          %v3406 = vsel %vm3321, %v3405, %v3381
          %v3407 = vsel %vm3320, %v3315, %v3404
          %v3408 = vsel %vm3320, 0, %v3406
          %v3409 = vcosq.f32.pop %v3407
          %v3410 = vsinq.f32.pop %v3407
          %vm3411 = vweird.f32 %v3315
          %v3412 = vadd.s32 %v3408, 3
          %v3413 = vand.u32 %v3412, 3
          %vm3414 = vcmp.lt.s32.totalorder %v3413, 2
          %vm3415 = vcmp.eq.s32.totalorder %v3413, 0
          %v3416 = vxor.u32 %v3410, 2147483648
          %v3417 = vsel %vm3415, %v3409, %v3416
          %vm3418 = vcmp.eq.s32.totalorder %v3413, 2
          %v3419 = vxor.u32 %v3409, 2147483648
          %v3420 = vsel %vm3418, %v3419, %v3410
          %v3421 = vsel %vm3414, %v3417, %v3420
          %v3422 = vsel %vm3411, nan, %v3421
          %v3423 = vand.u32 2147483647, %v3316
          %vm3424 = vcmp.le.f32.partialorder %v3423, 0.7853982
          %vm3425 = vcmp.lt.s32.totalorder %v3316, 0
          %v3426 = vand.u32 %v3316, 2139095040
          %v3427 = vshrl.u32 %v3426, 23
          %v3428 = vsub.s32 %v3427, 127
          %v3429 = vand.u32 2147483647, %v3316
          %v3430 = vand.u32 %v3429, 8388607
          %v3431 = vor.u32 %v3430, 8388608
          %v3432 = vsub.s32 0, %v3431
          %v3433 = vadd.s32 %v3428, 1
          %vm3434 = vcmp.gt.s32.totalorder %v3433, 0
          %v3435 = vsel %vm3434, %v3433, 0
          %v3436 = vshrl.u32 %v3435, 5
          %v3437 = vand.u32 %v3435, 31
          %v3438 = vsub.s32 32, %v3437
          %v3439 = vshrl.u32 683565275, %v3438
          %v3440 = vshll.u32 683565275, %v3437
          %v3441 = vshrl.u32 2475754826, %v3438
          %v3442 = vor.u32 %v3440, %v3441
          %v3443 = vshll.u32 2475754826, %v3437
          %v3444 = vshrl.u32 2131351028, %v3438
          %v3445 = vor.u32 %v3443, %v3444
          %v3446 = vshll.u32 2131351028, %v3437
          %v3447 = vshrl.u32 2102212464, %v3438
          %v3448 = vor.u32 %v3446, %v3447
          %v3449 = vshll.u32 2102212464, %v3437
          %v3450 = vshrl.u32 920167782, %v3438
          %v3451 = vor.u32 %v3449, %v3450
          %v3452 = vshll.u32 920167782, %v3437
          %v3453 = vshrl.u32 1326507024, %v3438
          %v3454 = vor.u32 %v3452, %v3453
          %vm3455 = vcmp.lt.s32.totalorder %v3436, 1
          %vm3456 = vcmp.lt.s32.totalorder %v3436, 2
          %vm3457 = vcmp.lt.s32.totalorder %v3436, 3
          %vm3458 = vcmp.lt.s32.totalorder %v3436, 4
          %v3459 = vsel %vm3455, %v3439, %v3442
          %v3460 = vsel %vm3458, %v3448, 2102212464
          %v3461 = vsel %vm3457, %v3445, %v3460
          %v3462 = vsel %vm3456, %v3459, %v3461
          %v3463 = vsel %vm3455, %v3442, %v3445
          %v3464 = vsel %vm3458, %v3451, 920167782
          %v3465 = vsel %vm3457, %v3448, %v3464
          %v3466 = vsel %vm3456, %v3463, %v3465
          %v3467 = vsel %vm3455, %v3445, %v3448
          %v3468 = vsel %vm3458, %v3454, 1326507024
          %v3469 = vsel %vm3457, %v3451, %v3468
          %v3470 = vsel %vm3456, %v3467, %v3469
          %v3471 = vshll.u32 %v3431, 8
          %v3472 = vmul.u32.u64.compose %v3471, %v3470
          %v3473 = vextract.low.u32 %v3472
          %v3474 = vextract.high.u32 %v3472
          %v3475 = vmul.u32.u64.compose %v3471, %v3466
          %v3476 = vextract.low.u32 %v3475
          %v3477 = vextract.high.u32 %v3475
          %v3478 = vmul.u32 %v3471, %v3462
          %v3479 = vadd.s32 %v3474, %v3476
          %vm3480 = vc.u32 %v3474, %v3476
          %v3481 = vadd.s32 %v3477, 1
          %v3482 = vsel %vm3480, %v3481, %v3477
          %v3483 = vadd.s32 %v3478, %v3482
          %v3484 = vadd.s32 %v3483, 536870912
          %v3485 = vshrl.u32 %v3484, 30
          %v3486 = vshll.u32 %v3485, 30
          %v3487 = vsub.s32 %v3483, %v3486
          %vm3488 = vcmp.lt.s32.totalorder %v3487, 0
          %v3489 = vsub.s32 0, %v3487
          %v3490 = vsel %vm3488, %v3489, %v3487
          %v3491 = vclz %v3490
          %v3492 = vsub.s32 %v3491, 2
          %vm3493 = vcmp.gt.s32.totalorder 0, %v3492
          %v3494 = vsel %vm3493, 0, %v3492
          %v3495 = vsub.s32 32, %v3494
          %v3496 = vshll.u32 %v3487, %v3494
          %v3497 = vshrl.u32 %v3479, %v3495
          %v3498 = vor.u32 %v3496, %v3497
          %v3499 = vsub.s32 4294967266, %v3494
          %v3500 = vadd.s32 %v3499, 127
          %v3501 = vshll.u32 %v3500, 23
          %v3502 = vor.u32 4788187, %v3501
          %v3503 = vand.u32 2147483647, %v3502
          %v3505 = vcvt.s32.f32 %v3498
          %v3506 = vmul.f32 %v3505, %v3503
          %v3507 = vxor.u32 %v3506, 2147483648
          %v3508 = vsel %vm3425, %v3507, %v3506
          %v3509 = vsub.s32 4, %v3485
          %v3510 = vsel %vm3425, %v3509, %v3485
          %v3511 = vsel %vm3424, %v3316, %v3508
          %v3512 = vsel %vm3424, 0, %v3510
          %v3513 = vcosq.f32.pop %v3511
          %v3514 = vsinq.f32.pop %v3511
          %vm3515 = vweird.f32 %v3316
          %v3516 = vadd.s32 %v3512, 3
          %v3517 = vand.u32 %v3516, 3
          %vm3518 = vcmp.lt.s32.totalorder %v3517, 2
          %vm3519 = vcmp.eq.s32.totalorder %v3517, 0
          %v3520 = vxor.u32 %v3514, 2147483648
          %v3521 = vsel %vm3519, %v3513, %v3520
          %vm3522 = vcmp.eq.s32.totalorder %v3517, 2
          %v3523 = vxor.u32 %v3513, 2147483648
          %v3524 = vsel %vm3522, %v3523, %v3514
          %v3525 = vsel %vm3518, %v3521, %v3524
          %v3526 = vsel %vm3515, nan, %v3525
          %v3527 = vand.u32 2147483647, %v3317
          %vm3528 = vcmp.le.f32.partialorder %v3527, 0.7853982
          %vm3529 = vcmp.lt.s32.totalorder %v3317, 0
          %v3530 = vand.u32 %v3317, 2139095040
          %v3531 = vshrl.u32 %v3530, 23
          %v3532 = vsub.s32 %v3531, 127
          %v3533 = vand.u32 2147483647, %v3317
          %v3534 = vand.u32 %v3533, 8388607
          %v3535 = vor.u32 %v3534, 8388608
          %v3536 = vsub.s32 0, %v3535
          %v3537 = vadd.s32 %v3532, 1
          %vm3538 = vcmp.gt.s32.totalorder %v3537, 0
          %v3539 = vsel %vm3538, %v3537, 0
          %v3540 = vshrl.u32 %v3539, 5
          %v3541 = vand.u32 %v3539, 31
          %v3542 = vsub.s32 32, %v3541
          %v3543 = vshrl.u32 683565275, %v3542
          %v3544 = vshll.u32 683565275, %v3541
          %v3545 = vshrl.u32 2475754826, %v3542
          %v3546 = vor.u32 %v3544, %v3545
          %v3547 = vshll.u32 2475754826, %v3541
          %v3548 = vshrl.u32 2131351028, %v3542
          %v3549 = vor.u32 %v3547, %v3548
          %v3550 = vshll.u32 2131351028, %v3541
          %v3551 = vshrl.u32 2102212464, %v3542
          %v3552 = vor.u32 %v3550, %v3551
          %v3553 = vshll.u32 2102212464, %v3541
          %v3554 = vshrl.u32 920167782, %v3542
          %v3555 = vor.u32 %v3553, %v3554
          %v3556 = vshll.u32 920167782, %v3541
          %v3557 = vshrl.u32 1326507024, %v3542
          %v3558 = vor.u32 %v3556, %v3557
          %vm3559 = vcmp.lt.s32.totalorder %v3540, 1
          %vm3560 = vcmp.lt.s32.totalorder %v3540, 2
          %vm3561 = vcmp.lt.s32.totalorder %v3540, 3
          %vm3562 = vcmp.lt.s32.totalorder %v3540, 4
          %v3563 = vsel %vm3559, %v3543, %v3546
          %v3564 = vsel %vm3562, %v3552, 2102212464
          %v3565 = vsel %vm3561, %v3549, %v3564
          %v3566 = vsel %vm3560, %v3563, %v3565
          %v3567 = vsel %vm3559, %v3546, %v3549
          %v3568 = vsel %vm3562, %v3555, 920167782
          %v3569 = vsel %vm3561, %v3552, %v3568
          %v3570 = vsel %vm3560, %v3567, %v3569
          %v3571 = vsel %vm3559, %v3549, %v3552
          %v3572 = vsel %vm3562, %v3558, 1326507024
          %v3573 = vsel %vm3561, %v3555, %v3572
          %v3574 = vsel %vm3560, %v3571, %v3573
          %v3575 = vshll.u32 %v3535, 8
          %v3576 = vmul.u32.u64.compose %v3575, %v3574
          %v3577 = vextract.low.u32 %v3576
          %v3578 = vextract.high.u32 %v3576
          %v3579 = vmul.u32.u64.compose %v3575, %v3570
          %v3580 = vextract.low.u32 %v3579
          %v3581 = vextract.high.u32 %v3579
          %v3582 = vmul.u32 %v3575, %v3566
          %v3583 = vadd.s32 %v3578, %v3580
          %vm3584 = vc.u32 %v3578, %v3580
          %v3585 = vadd.s32 %v3581, 1
          %v3586 = vsel %vm3584, %v3585, %v3581
          %v3587 = vadd.s32 %v3582, %v3586
          %v3588 = vadd.s32 %v3587, 536870912
          %v3589 = vshrl.u32 %v3588, 30
          %v3590 = vshll.u32 %v3589, 30
          %v3591 = vsub.s32 %v3587, %v3590
          %vm3592 = vcmp.lt.s32.totalorder %v3591, 0
          %v3593 = vsub.s32 0, %v3591
          %v3594 = vsel %vm3592, %v3593, %v3591
          %v3595 = vclz %v3594
          %v3596 = vsub.s32 %v3595, 2
          %vm3597 = vcmp.gt.s32.totalorder 0, %v3596
          %v3598 = vsel %vm3597, 0, %v3596
          %v3599 = vsub.s32 32, %v3598
          %v3600 = vshll.u32 %v3591, %v3598
          %v3601 = vshrl.u32 %v3583, %v3599
          %v3602 = vor.u32 %v3600, %v3601
          %v3603 = vsub.s32 4294967266, %v3598
          %v3604 = vadd.s32 %v3603, 127
          %v3605 = vshll.u32 %v3604, 23
          %v3606 = vor.u32 4788187, %v3605
          %v3607 = vand.u32 2147483647, %v3606
          %v3609 = vcvt.s32.f32 %v3602
          %v3610 = vmul.f32 %v3609, %v3607
          %v3611 = vxor.u32 %v3610, 2147483648
          %v3612 = vsel %vm3529, %v3611, %v3610
          %v3613 = vsub.s32 4, %v3589
          %v3614 = vsel %vm3529, %v3613, %v3589
          %v3615 = vsel %vm3528, %v3317, %v3612
          %v3616 = vsel %vm3528, 0, %v3614
          %v3617 = vcosq.f32.pop %v3615
          %v3618 = vsinq.f32.pop %v3615
          %vm3619 = vweird.f32 %v3317
          %v3620 = vadd.s32 %v3616, 3
          %v3621 = vand.u32 %v3620, 3
          %vm3622 = vcmp.lt.s32.totalorder %v3621, 2
          %vm3623 = vcmp.eq.s32.totalorder %v3621, 0
          %v3624 = vxor.u32 %v3618, 2147483648
          %v3625 = vsel %vm3623, %v3617, %v3624
          %vm3626 = vcmp.eq.s32.totalorder %v3621, 2
          %v3627 = vxor.u32 %v3617, 2147483648
          %v3628 = vsel %vm3626, %v3627, %v3618
          %v3629 = vsel %vm3622, %v3625, %v3628
          %v3630 = vsel %vm3619, nan, %v3629
          %v3631 = vand.u32 2147483647, %v3318
          %vm3632 = vcmp.le.f32.partialorder %v3631, 0.7853982
          %vm3633 = vcmp.lt.s32.totalorder %v3318, 0
          %v3634 = vand.u32 %v3318, 2139095040
          %v3635 = vshrl.u32 %v3634, 23
          %v3636 = vsub.s32 %v3635, 127
          %v3637 = vand.u32 2147483647, %v3318
          %v3638 = vand.u32 %v3637, 8388607
          %v3639 = vor.u32 %v3638, 8388608
          %v3640 = vsub.s32 0, %v3639
          %v3641 = vadd.s32 %v3636, 1
          %vm3642 = vcmp.gt.s32.totalorder %v3641, 0
          %v3643 = vsel %vm3642, %v3641, 0
          %v3644 = vshrl.u32 %v3643, 5
          %v3645 = vand.u32 %v3643, 31
          %v3646 = vsub.s32 32, %v3645
          %v3647 = vshrl.u32 683565275, %v3646
          %v3648 = vshll.u32 683565275, %v3645
          %v3649 = vshrl.u32 2475754826, %v3646
          %v3650 = vor.u32 %v3648, %v3649
          %v3651 = vshll.u32 2475754826, %v3645
          %v3652 = vshrl.u32 2131351028, %v3646
          %v3653 = vor.u32 %v3651, %v3652
          %v3654 = vshll.u32 2131351028, %v3645
          %v3655 = vshrl.u32 2102212464, %v3646
          %v3656 = vor.u32 %v3654, %v3655
          %v3657 = vshll.u32 2102212464, %v3645
          %v3658 = vshrl.u32 920167782, %v3646
          %v3659 = vor.u32 %v3657, %v3658
          %v3660 = vshll.u32 920167782, %v3645
          %v3661 = vshrl.u32 1326507024, %v3646
          %v3662 = vor.u32 %v3660, %v3661
          %vm3663 = vcmp.lt.s32.totalorder %v3644, 1
          %vm3664 = vcmp.lt.s32.totalorder %v3644, 2
          %vm3665 = vcmp.lt.s32.totalorder %v3644, 3
          %vm3666 = vcmp.lt.s32.totalorder %v3644, 4
          %v3667 = vsel %vm3663, %v3647, %v3650
          %v3668 = vsel %vm3666, %v3656, 2102212464
          %v3669 = vsel %vm3665, %v3653, %v3668
          %v3670 = vsel %vm3664, %v3667, %v3669
          %v3671 = vsel %vm3663, %v3650, %v3653
          %v3672 = vsel %vm3666, %v3659, 920167782
          %v3673 = vsel %vm3665, %v3656, %v3672
          %v3674 = vsel %vm3664, %v3671, %v3673
          %v3675 = vsel %vm3663, %v3653, %v3656
          %v3676 = vsel %vm3666, %v3662, 1326507024
          %v3677 = vsel %vm3665, %v3659, %v3676
          %v3678 = vsel %vm3664, %v3675, %v3677
          %v3679 = vshll.u32 %v3639, 8
          %v3680 = vmul.u32.u64.compose %v3679, %v3678
          %v3681 = vextract.low.u32 %v3680
          %v3682 = vextract.high.u32 %v3680
          %v3683 = vmul.u32.u64.compose %v3679, %v3674
          %v3684 = vextract.low.u32 %v3683
          %v3685 = vextract.high.u32 %v3683
          %v3686 = vmul.u32 %v3679, %v3670
          %v3687 = vadd.s32 %v3682, %v3684
          %vm3688 = vc.u32 %v3682, %v3684
          %v3689 = vadd.s32 %v3685, 1
          %v3690 = vsel %vm3688, %v3689, %v3685
          %v3691 = vadd.s32 %v3686, %v3690
          %v3692 = vadd.s32 %v3691, 536870912
          %v3693 = vshrl.u32 %v3692, 30
          %v3694 = vshll.u32 %v3693, 30
          %v3695 = vsub.s32 %v3691, %v3694
          %vm3696 = vcmp.lt.s32.totalorder %v3695, 0
          %v3697 = vsub.s32 0, %v3695
          %v3698 = vsel %vm3696, %v3697, %v3695
          %v3699 = vclz %v3698
          %v3700 = vsub.s32 %v3699, 2
          %vm3701 = vcmp.gt.s32.totalorder 0, %v3700
          %v3702 = vsel %vm3701, 0, %v3700
          %v3703 = vsub.s32 32, %v3702
          %v3704 = vshll.u32 %v3695, %v3702
          %v3705 = vshrl.u32 %v3687, %v3703
          %v3706 = vor.u32 %v3704, %v3705
          %v3707 = vsub.s32 4294967266, %v3702
          %v3708 = vadd.s32 %v3707, 127
          %v3709 = vshll.u32 %v3708, 23
          %v3710 = vor.u32 4788187, %v3709
          %v3711 = vand.u32 2147483647, %v3710
          %v3713 = vcvt.s32.f32 %v3706
          %v3714 = vmul.f32 %v3713, %v3711
          %v3715 = vxor.u32 %v3714, 2147483648
          %v3716 = vsel %vm3633, %v3715, %v3714
          %v3717 = vsub.s32 4, %v3693
          %v3718 = vsel %vm3633, %v3717, %v3693
          %v3719 = vsel %vm3632, %v3318, %v3716
          %v3720 = vsel %vm3632, 0, %v3718
          %v3721 = vcosq.f32.pop %v3719
          %v3722 = vsinq.f32.pop %v3719
          %vm3723 = vweird.f32 %v3318
          %v3724 = vadd.s32 %v3720, 3
          %v3725 = vand.u32 %v3724, 3
          %vm3726 = vcmp.lt.s32.totalorder %v3725, 2
          %vm3727 = vcmp.eq.s32.totalorder %v3725, 0
          %v3728 = vxor.u32 %v3722, 2147483648
          %v3729 = vsel %vm3727, %v3721, %v3728
          %vm3730 = vcmp.eq.s32.totalorder %v3725, 2
          %v3731 = vxor.u32 %v3721, 2147483648
          %v3732 = vsel %vm3730, %v3731, %v3722
          %v3733 = vsel %vm3726, %v3729, %v3732
          %v3734 = vsel %vm3723, nan, %v3733
          %v3735 = vand.u32 2147483647, %v3315
          %vm3736 = vcmp.le.f32.partialorder %v3735, 0.7853982
          %vm3737 = vcmp.lt.s32.totalorder %v3315, 0
          %v3738 = vand.u32 %v3315, 2139095040
          %v3739 = vshrl.u32 %v3738, 23
          %v3740 = vsub.s32 %v3739, 127
          %v3741 = vand.u32 2147483647, %v3315
          %v3742 = vand.u32 %v3741, 8388607
          %v3743 = vor.u32 %v3742, 8388608
          %v3744 = vsub.s32 0, %v3743
          %v3745 = vadd.s32 %v3740, 1
          %vm3746 = vcmp.gt.s32.totalorder %v3745, 0
          %v3747 = vsel %vm3746, %v3745, 0
          %v3748 = vshrl.u32 %v3747, 5
          %v3749 = vand.u32 %v3747, 31
          %v3750 = vsub.s32 32, %v3749
          %v3751 = vshrl.u32 683565275, %v3750
          %v3752 = vshll.u32 683565275, %v3749
          %v3753 = vshrl.u32 2475754826, %v3750
          %v3754 = vor.u32 %v3752, %v3753
          %v3755 = vshll.u32 2475754826, %v3749
          %v3756 = vshrl.u32 2131351028, %v3750
          %v3757 = vor.u32 %v3755, %v3756
          %v3758 = vshll.u32 2131351028, %v3749
          %v3759 = vshrl.u32 2102212464, %v3750
          %v3760 = vor.u32 %v3758, %v3759
          %v3761 = vshll.u32 2102212464, %v3749
          %v3762 = vshrl.u32 920167782, %v3750
          %v3763 = vor.u32 %v3761, %v3762
          %v3764 = vshll.u32 920167782, %v3749
          %v3765 = vshrl.u32 1326507024, %v3750
          %v3766 = vor.u32 %v3764, %v3765
          %vm3767 = vcmp.lt.s32.totalorder %v3748, 1
          %vm3768 = vcmp.lt.s32.totalorder %v3748, 2
          %vm3769 = vcmp.lt.s32.totalorder %v3748, 3
          %vm3770 = vcmp.lt.s32.totalorder %v3748, 4
          %v3771 = vsel %vm3767, %v3751, %v3754
          %v3772 = vsel %vm3770, %v3760, 2102212464
          %v3773 = vsel %vm3769, %v3757, %v3772
          %v3774 = vsel %vm3768, %v3771, %v3773
          %v3775 = vsel %vm3767, %v3754, %v3757
          %v3776 = vsel %vm3770, %v3763, 920167782
          %v3777 = vsel %vm3769, %v3760, %v3776
          %v3778 = vsel %vm3768, %v3775, %v3777
          %v3779 = vsel %vm3767, %v3757, %v3760
          %v3780 = vsel %vm3770, %v3766, 1326507024
          %v3781 = vsel %vm3769, %v3763, %v3780
          %v3782 = vsel %vm3768, %v3779, %v3781
          %v3783 = vshll.u32 %v3743, 8
          %v3784 = vmul.u32.u64.compose %v3783, %v3782
          %v3785 = vextract.low.u32 %v3784
          %v3786 = vextract.high.u32 %v3784
          %v3787 = vmul.u32.u64.compose %v3783, %v3778
          %v3788 = vextract.low.u32 %v3787
          %v3789 = vextract.high.u32 %v3787
          %v3790 = vmul.u32 %v3783, %v3774
          %v3791 = vadd.s32 %v3786, %v3788
          %vm3792 = vc.u32 %v3786, %v3788
          %v3793 = vadd.s32 %v3789, 1
          %v3794 = vsel %vm3792, %v3793, %v3789
          %v3795 = vadd.s32 %v3790, %v3794
          %v3796 = vadd.s32 %v3795, 536870912
          %v3797 = vshrl.u32 %v3796, 30
          %v3798 = vshll.u32 %v3797, 30
          %v3799 = vsub.s32 %v3795, %v3798
          %vm3800 = vcmp.lt.s32.totalorder %v3799, 0
          %v3801 = vsub.s32 0, %v3799
          %v3802 = vsel %vm3800, %v3801, %v3799
          %v3803 = vclz %v3802
          %v3804 = vsub.s32 %v3803, 2
          %vm3805 = vcmp.gt.s32.totalorder 0, %v3804
          %v3806 = vsel %vm3805, 0, %v3804
          %v3807 = vsub.s32 32, %v3806
          %v3808 = vshll.u32 %v3799, %v3806
          %v3809 = vshrl.u32 %v3791, %v3807
          %v3810 = vor.u32 %v3808, %v3809
          %v3811 = vsub.s32 4294967266, %v3806
          %v3812 = vadd.s32 %v3811, 127
          %v3813 = vshll.u32 %v3812, 23
          %v3814 = vor.u32 4788187, %v3813
          %v3815 = vand.u32 2147483647, %v3814
          %v3817 = vcvt.s32.f32 %v3810
          %v3818 = vmul.f32 %v3817, %v3815
          %v3819 = vxor.u32 %v3818, 2147483648
          %v3820 = vsel %vm3737, %v3819, %v3818
          %v3821 = vsub.s32 4, %v3797
          %v3822 = vsel %vm3737, %v3821, %v3797
          %v3823 = vsel %vm3736, %v3315, %v3820
          %v3824 = vsel %vm3736, 0, %v3822
          %v3825 = vcosq.f32.pop %v3823
          %v3826 = vsinq.f32.pop %v3823
          %vm3827 = vweird.f32 %v3315
          %v3828 = vand.u32 %v3824, 3
          %vm3829 = vcmp.lt.s32.totalorder %v3828, 2
          %vm3830 = vcmp.eq.s32.totalorder %v3828, 0
          %v3831 = vxor.u32 %v3826, 2147483648
          %v3832 = vsel %vm3830, %v3825, %v3831
          %vm3833 = vcmp.eq.s32.totalorder %v3828, 2
          %v3834 = vxor.u32 %v3825, 2147483648
          %v3835 = vsel %vm3833, %v3834, %v3826
          %v3836 = vsel %vm3829, %v3832, %v3835
          %v3837 = vsel %vm3827, nan, %v3836
          %v3838 = vand.u32 2147483647, %v3316
          %vm3839 = vcmp.le.f32.partialorder %v3838, 0.7853982
          %vm3840 = vcmp.lt.s32.totalorder %v3316, 0
          %v3841 = vand.u32 %v3316, 2139095040
          %v3842 = vshrl.u32 %v3841, 23
          %v3843 = vsub.s32 %v3842, 127
          %v3844 = vand.u32 2147483647, %v3316
          %v3845 = vand.u32 %v3844, 8388607
          %v3846 = vor.u32 %v3845, 8388608
          %v3847 = vsub.s32 0, %v3846
          %v3848 = vadd.s32 %v3843, 1
          %vm3849 = vcmp.gt.s32.totalorder %v3848, 0
          %v3850 = vsel %vm3849, %v3848, 0
          %v3851 = vshrl.u32 %v3850, 5
          %v3852 = vand.u32 %v3850, 31
          %v3853 = vsub.s32 32, %v3852
          %v3854 = vshrl.u32 683565275, %v3853
          %v3855 = vshll.u32 683565275, %v3852
          %v3856 = vshrl.u32 2475754826, %v3853
          %v3857 = vor.u32 %v3855, %v3856
          %v3858 = vshll.u32 2475754826, %v3852
          %v3859 = vshrl.u32 2131351028, %v3853
          %v3860 = vor.u32 %v3858, %v3859
          %v3861 = vshll.u32 2131351028, %v3852
          %v3862 = vshrl.u32 2102212464, %v3853
          %v3863 = vor.u32 %v3861, %v3862
          %v3864 = vshll.u32 2102212464, %v3852
          %v3865 = vshrl.u32 920167782, %v3853
          %v3866 = vor.u32 %v3864, %v3865
          %v3867 = vshll.u32 920167782, %v3852
          %v3868 = vshrl.u32 1326507024, %v3853
          %v3869 = vor.u32 %v3867, %v3868
          %vm3870 = vcmp.lt.s32.totalorder %v3851, 1
          %vm3871 = vcmp.lt.s32.totalorder %v3851, 2
          %vm3872 = vcmp.lt.s32.totalorder %v3851, 3
          %vm3873 = vcmp.lt.s32.totalorder %v3851, 4
          %v3874 = vsel %vm3870, %v3854, %v3857
          %v3875 = vsel %vm3873, %v3863, 2102212464
          %v3876 = vsel %vm3872, %v3860, %v3875
          %v3877 = vsel %vm3871, %v3874, %v3876
          %v3878 = vsel %vm3870, %v3857, %v3860
          %v3879 = vsel %vm3873, %v3866, 920167782
          %v3880 = vsel %vm3872, %v3863, %v3879
          %v3881 = vsel %vm3871, %v3878, %v3880
          %v3882 = vsel %vm3870, %v3860, %v3863
          %v3883 = vsel %vm3873, %v3869, 1326507024
          %v3884 = vsel %vm3872, %v3866, %v3883
          %v3885 = vsel %vm3871, %v3882, %v3884
          %v3886 = vshll.u32 %v3846, 8
          %v3887 = vmul.u32.u64.compose %v3886, %v3885
          %v3888 = vextract.low.u32 %v3887
          %v3889 = vextract.high.u32 %v3887
          %v3890 = vmul.u32.u64.compose %v3886, %v3881
          %v3891 = vextract.low.u32 %v3890
          %v3892 = vextract.high.u32 %v3890
          %v3893 = vmul.u32 %v3886, %v3877
          %v3894 = vadd.s32 %v3889, %v3891
          %vm3895 = vc.u32 %v3889, %v3891
          %v3896 = vadd.s32 %v3892, 1
          %v3897 = vsel %vm3895, %v3896, %v3892
          %v3898 = vadd.s32 %v3893, %v3897
          %v3899 = vadd.s32 %v3898, 536870912
          %v3900 = vshrl.u32 %v3899, 30
          %v3901 = vshll.u32 %v3900, 30
          %v3902 = vsub.s32 %v3898, %v3901
          %vm3903 = vcmp.lt.s32.totalorder %v3902, 0
          %v3904 = vsub.s32 0, %v3902
          %v3905 = vsel %vm3903, %v3904, %v3902
          %v3906 = vclz %v3905
          %v3907 = vsub.s32 %v3906, 2
          %vm3908 = vcmp.gt.s32.totalorder 0, %v3907
          %v3909 = vsel %vm3908, 0, %v3907
          %v3910 = vsub.s32 32, %v3909
          %v3911 = vshll.u32 %v3902, %v3909
          %v3912 = vshrl.u32 %v3894, %v3910
          %v3913 = vor.u32 %v3911, %v3912
          %v3914 = vsub.s32 4294967266, %v3909
          %v3915 = vadd.s32 %v3914, 127
          %v3916 = vshll.u32 %v3915, 23
          %v3917 = vor.u32 4788187, %v3916
          %v3918 = vand.u32 2147483647, %v3917
          %v3920 = vcvt.s32.f32 %v3913
          %v3921 = vmul.f32 %v3920, %v3918
          %v3922 = vxor.u32 %v3921, 2147483648
          %v3923 = vsel %vm3840, %v3922, %v3921
          %v3924 = vsub.s32 4, %v3900
          %v3925 = vsel %vm3840, %v3924, %v3900
          %v3926 = vsel %vm3839, %v3316, %v3923
          %v3927 = vsel %vm3839, 0, %v3925
          %v3928 = vcosq.f32.pop %v3926
          %v3929 = vsinq.f32.pop %v3926
          %vm3930 = vweird.f32 %v3316
          %v3931 = vand.u32 %v3927, 3
          %vm3932 = vcmp.lt.s32.totalorder %v3931, 2
          %vm3933 = vcmp.eq.s32.totalorder %v3931, 0
          %v3934 = vxor.u32 %v3929, 2147483648
          %v3935 = vsel %vm3933, %v3928, %v3934
          %vm3936 = vcmp.eq.s32.totalorder %v3931, 2
          %v3937 = vxor.u32 %v3928, 2147483648
          %v3938 = vsel %vm3936, %v3937, %v3929
          %v3939 = vsel %vm3932, %v3935, %v3938
          %v3940 = vsel %vm3930, nan, %v3939
          %v3941 = vand.u32 2147483647, %v3317
          %vm3942 = vcmp.le.f32.partialorder %v3941, 0.7853982
          %vm3943 = vcmp.lt.s32.totalorder %v3317, 0
          %v3944 = vand.u32 %v3317, 2139095040
          %v3945 = vshrl.u32 %v3944, 23
          %v3946 = vsub.s32 %v3945, 127
          %v3947 = vand.u32 2147483647, %v3317
          %v3948 = vand.u32 %v3947, 8388607
          %v3949 = vor.u32 %v3948, 8388608
          %v3950 = vsub.s32 0, %v3949
          %v3951 = vadd.s32 %v3946, 1
          %vm3952 = vcmp.gt.s32.totalorder %v3951, 0
          %v3953 = vsel %vm3952, %v3951, 0
          %v3954 = vshrl.u32 %v3953, 5
          %v3955 = vand.u32 %v3953, 31
          %v3956 = vsub.s32 32, %v3955
          %v3957 = vshrl.u32 683565275, %v3956
          %v3958 = vshll.u32 683565275, %v3955
          %v3959 = vshrl.u32 2475754826, %v3956
          %v3960 = vor.u32 %v3958, %v3959
          %v3961 = vshll.u32 2475754826, %v3955
          %v3962 = vshrl.u32 2131351028, %v3956
          %v3963 = vor.u32 %v3961, %v3962
          %v3964 = vshll.u32 2131351028, %v3955
          %v3965 = vshrl.u32 2102212464, %v3956
          %v3966 = vor.u32 %v3964, %v3965
          %v3967 = vshll.u32 2102212464, %v3955
          %v3968 = vshrl.u32 920167782, %v3956
          %v3969 = vor.u32 %v3967, %v3968
          %v3970 = vshll.u32 920167782, %v3955
          %v3971 = vshrl.u32 1326507024, %v3956
          %v3972 = vor.u32 %v3970, %v3971
          %vm3973 = vcmp.lt.s32.totalorder %v3954, 1
          %vm3974 = vcmp.lt.s32.totalorder %v3954, 2
          %vm3975 = vcmp.lt.s32.totalorder %v3954, 3
          %vm3976 = vcmp.lt.s32.totalorder %v3954, 4
          %v3977 = vsel %vm3973, %v3957, %v3960
          %v3978 = vsel %vm3976, %v3966, 2102212464
          %v3979 = vsel %vm3975, %v3963, %v3978
          %v3980 = vsel %vm3974, %v3977, %v3979
          %v3981 = vsel %vm3973, %v3960, %v3963
          %v3982 = vsel %vm3976, %v3969, 920167782
          %v3983 = vsel %vm3975, %v3966, %v3982
          %v3984 = vsel %vm3974, %v3981, %v3983
          %v3985 = vsel %vm3973, %v3963, %v3966
          %v3986 = vsel %vm3976, %v3972, 1326507024
          %v3987 = vsel %vm3975, %v3969, %v3986
          %v3988 = vsel %vm3974, %v3985, %v3987
          %v3989 = vshll.u32 %v3949, 8
          %v3990 = vmul.u32.u64.compose %v3989, %v3988
          %v3991 = vextract.low.u32 %v3990
          %v3992 = vextract.high.u32 %v3990
          %v3993 = vmul.u32.u64.compose %v3989, %v3984
          %v3994 = vextract.low.u32 %v3993
          %v3995 = vextract.high.u32 %v3993
          %v3996 = vmul.u32 %v3989, %v3980
          %v3997 = vadd.s32 %v3992, %v3994
          %vm3998 = vc.u32 %v3992, %v3994
          %v3999 = vadd.s32 %v3995, 1
          %v4000 = vsel %vm3998, %v3999, %v3995
          %v4001 = vadd.s32 %v3996, %v4000
          %v4002 = vadd.s32 %v4001, 536870912
          %v4003 = vshrl.u32 %v4002, 30
          %v4004 = vshll.u32 %v4003, 30
          %v4005 = vsub.s32 %v4001, %v4004
          %vm4006 = vcmp.lt.s32.totalorder %v4005, 0
          %v4007 = vsub.s32 0, %v4005
          %v4008 = vsel %vm4006, %v4007, %v4005
          %v4009 = vclz %v4008
          %v4010 = vsub.s32 %v4009, 2
          %vm4011 = vcmp.gt.s32.totalorder 0, %v4010
          %v4012 = vsel %vm4011, 0, %v4010
          %v4013 = vsub.s32 32, %v4012
          %v4014 = vshll.u32 %v4005, %v4012
          %v4015 = vshrl.u32 %v3997, %v4013
          %v4016 = vor.u32 %v4014, %v4015
          %v4017 = vsub.s32 4294967266, %v4012
          %v4018 = vadd.s32 %v4017, 127
          %v4019 = vshll.u32 %v4018, 23
          %v4020 = vor.u32 4788187, %v4019
          %v4021 = vand.u32 2147483647, %v4020
          %v4023 = vcvt.s32.f32 %v4016
          %v4024 = vmul.f32 %v4023, %v4021
          %v4025 = vxor.u32 %v4024, 2147483648
          %v4026 = vsel %vm3943, %v4025, %v4024
          %v4027 = vsub.s32 4, %v4003
          %v4028 = vsel %vm3943, %v4027, %v4003
          %v4029 = vsel %vm3942, %v3317, %v4026
          %v4030 = vsel %vm3942, 0, %v4028
          %v4031 = vcosq.f32.pop %v4029
          %v4032 = vsinq.f32.pop %v4029
          %vm4033 = vweird.f32 %v3317
          %v4034 = vand.u32 %v4030, 3
          %vm4035 = vcmp.lt.s32.totalorder %v4034, 2
          %vm4036 = vcmp.eq.s32.totalorder %v4034, 0
          %v4037 = vxor.u32 %v4032, 2147483648
          %v4038 = vsel %vm4036, %v4031, %v4037
          %vm4039 = vcmp.eq.s32.totalorder %v4034, 2
          %v4040 = vxor.u32 %v4031, 2147483648
          %v4041 = vsel %vm4039, %v4040, %v4032
          %v4042 = vsel %vm4035, %v4038, %v4041
          %v4043 = vsel %vm4033, nan, %v4042
          %v4044 = vand.u32 2147483647, %v3318
          %vm4045 = vcmp.le.f32.partialorder %v4044, 0.7853982
          %vm4046 = vcmp.lt.s32.totalorder %v3318, 0
          %v4047 = vand.u32 %v3318, 2139095040
          %v4048 = vshrl.u32 %v4047, 23
          %v4049 = vsub.s32 %v4048, 127
          %v4050 = vand.u32 2147483647, %v3318
          %v4051 = vand.u32 %v4050, 8388607
          %v4052 = vor.u32 %v4051, 8388608
          %v4053 = vsub.s32 0, %v4052
          %v4054 = vadd.s32 %v4049, 1
          %vm4055 = vcmp.gt.s32.totalorder %v4054, 0
          %v4056 = vsel %vm4055, %v4054, 0
          %v4057 = vshrl.u32 %v4056, 5
          %v4058 = vand.u32 %v4056, 31
          %v4059 = vsub.s32 32, %v4058
          %v4060 = vshrl.u32 683565275, %v4059
          %v4061 = vshll.u32 683565275, %v4058
          %v4062 = vshrl.u32 2475754826, %v4059
          %v4063 = vor.u32 %v4061, %v4062
          %v4064 = vshll.u32 2475754826, %v4058
          %v4065 = vshrl.u32 2131351028, %v4059
          %v4066 = vor.u32 %v4064, %v4065
          %v4067 = vshll.u32 2131351028, %v4058
          %v4068 = vshrl.u32 2102212464, %v4059
          %v4069 = vor.u32 %v4067, %v4068
          %v4070 = vshll.u32 2102212464, %v4058
          %v4071 = vshrl.u32 920167782, %v4059
          %v4072 = vor.u32 %v4070, %v4071
          %v4073 = vshll.u32 920167782, %v4058
          %v4074 = vshrl.u32 1326507024, %v4059
          %v4075 = vor.u32 %v4073, %v4074
          %vm4076 = vcmp.lt.s32.totalorder %v4057, 1
          %vm4077 = vcmp.lt.s32.totalorder %v4057, 2
          %vm4078 = vcmp.lt.s32.totalorder %v4057, 3
          %vm4079 = vcmp.lt.s32.totalorder %v4057, 4
          %v4080 = vsel %vm4076, %v4060, %v4063
          %v4081 = vsel %vm4079, %v4069, 2102212464
          %v4082 = vsel %vm4078, %v4066, %v4081
          %v4083 = vsel %vm4077, %v4080, %v4082
          %v4084 = vsel %vm4076, %v4063, %v4066
          %v4085 = vsel %vm4079, %v4072, 920167782
          %v4086 = vsel %vm4078, %v4069, %v4085
          %v4087 = vsel %vm4077, %v4084, %v4086
          %v4088 = vsel %vm4076, %v4066, %v4069
          %v4089 = vsel %vm4079, %v4075, 1326507024
          %v4090 = vsel %vm4078, %v4072, %v4089
          %v4091 = vsel %vm4077, %v4088, %v4090
          %v4092 = vshll.u32 %v4052, 8
          %v4093 = vmul.u32.u64.compose %v4092, %v4091
          %v4094 = vextract.low.u32 %v4093
          %v4095 = vextract.high.u32 %v4093
          %v4096 = vmul.u32.u64.compose %v4092, %v4087
          %v4097 = vextract.low.u32 %v4096
          %v4098 = vextract.high.u32 %v4096
          %v4099 = vmul.u32 %v4092, %v4083
          %v4100 = vadd.s32 %v4095, %v4097
          %vm4101 = vc.u32 %v4095, %v4097
          %v4102 = vadd.s32 %v4098, 1
          %v4103 = vsel %vm4101, %v4102, %v4098
          %v4104 = vadd.s32 %v4099, %v4103
          %v4105 = vadd.s32 %v4104, 536870912
          %v4106 = vshrl.u32 %v4105, 30
          %v4107 = vshll.u32 %v4106, 30
          %v4108 = vsub.s32 %v4104, %v4107
          %vm4109 = vcmp.lt.s32.totalorder %v4108, 0
          %v4110 = vsub.s32 0, %v4108
          %v4111 = vsel %vm4109, %v4110, %v4108
          %v4112 = vclz %v4111
          %v4113 = vsub.s32 %v4112, 2
          %vm4114 = vcmp.gt.s32.totalorder 0, %v4113
          %v4115 = vsel %vm4114, 0, %v4113
          %v4116 = vsub.s32 32, %v4115
          %v4117 = vshll.u32 %v4108, %v4115
          %v4118 = vshrl.u32 %v4100, %v4116
          %v4119 = vor.u32 %v4117, %v4118
          %v4120 = vsub.s32 4294967266, %v4115
          %v4121 = vadd.s32 %v4120, 127
          %v4122 = vshll.u32 %v4121, 23
          %v4123 = vor.u32 4788187, %v4122
          %v4124 = vand.u32 2147483647, %v4123
          %v4126 = vcvt.s32.f32 %v4119
          %v4127 = vmul.f32 %v4126, %v4124
          %v4128 = vxor.u32 %v4127, 2147483648
          %v4129 = vsel %vm4046, %v4128, %v4127
          %v4130 = vsub.s32 4, %v4106
          %v4131 = vsel %vm4046, %v4130, %v4106
          %v4132 = vsel %vm4045, %v3318, %v4129
          %v4133 = vsel %vm4045, 0, %v4131
          %v4134 = vcosq.f32.pop %v4132
          %v4135 = vsinq.f32.pop %v4132
          %vm4136 = vweird.f32 %v3318
          %v4137 = vand.u32 %v4133, 3
          %vm4138 = vcmp.lt.s32.totalorder %v4137, 2
          %vm4139 = vcmp.eq.s32.totalorder %v4137, 0
          %v4140 = vxor.u32 %v4135, 2147483648
          %v4141 = vsel %vm4139, %v4134, %v4140
          %vm4142 = vcmp.eq.s32.totalorder %v4137, 2
          %v4143 = vxor.u32 %v4134, 2147483648
          %v4144 = vsel %vm4142, %v4143, %v4135
          %v4145 = vsel %vm4138, %v4141, %v4144
          %v4146 = vsel %vm4136, nan, %v4145
          %s4147 = sld [smem:[#allocation2 + $0x2]]
          %s4148 = sld [smem:[#allocation2 + $0x53]]
          %v4149 = vstv %s4147
          %v4150 = vmul.f32 %v4149, %v3422
          %v4151 = vmul.f32 %v4149, %v3526
          %v4152 = vmul.f32 %v4149, %v3630
          %v4153 = vmul.f32 %v4149, %v3734
          %v4154 = vadd.f32 %v3264, %v4150
          %v4155 = vadd.f32 %v3265, %v4151
          %v4156 = vadd.f32 %v3266, %v4152
          %v4157 = vadd.f32 %v3267, %v4153
          %v4158 = vstv %s4148
          %v4159 = vmul.f32 %v4158, %v3837
          %v4160 = vmul.f32 %v4158, %v3940
          %v4161 = vmul.f32 %v4158, %v4043
          %v4162 = vmul.f32 %v4158, %v4146
          %v4163 = vadd.f32 %v4154, %v4159
          %v4164 = vadd.f32 %v4155, %v4160
          %v4165 = vadd.f32 %v4156, %v4161
          %v4166 = vadd.f32 %v4157, %v4162
          %s4167 = sld [smem:[#allocation2 + $0x5]]
          %s4168 = sld [smem:[#allocation2 + $0x56]]
          %v4169 = vstv %s4167
          %v4170 = vmul.f32 %v4169, %v3422
          %v4171 = vmul.f32 %v4169, %v3526
          %v4172 = vmul.f32 %v4169, %v3630
          %v4173 = vmul.f32 %v4169, %v3734
          %v4174 = vadd.f32 %v3284, %v4170
          %v4175 = vadd.f32 %v3285, %v4171
          %v4176 = vadd.f32 %v3286, %v4172
          %v4177 = vadd.f32 %v3287, %v4173
          %v4178 = vstv %s4168
          %v4179 = vmul.f32 %v4178, %v3837
          %v4180 = vmul.f32 %v4178, %v3940
          %v4181 = vmul.f32 %v4178, %v4043
          %v4182 = vmul.f32 %v4178, %v4146
          %v4183 = vadd.f32 %v4174, %v4179
          %v4184 = vadd.f32 %v4175, %v4180
          %v4185 = vadd.f32 %v4176, %v4181
          %v4186 = vadd.f32 %v4177, %v4182
          %s4187 = sld [smem:[#allocation2 + $0x8]]
          %s4188 = sld [smem:[#allocation2 + $0x59]]
          %v4189 = vstv %s4187
          %v4190 = vmul.f32 %v4189, %v3422
          %v4191 = vmul.f32 %v4189, %v3526
          %v4192 = vmul.f32 %v4189, %v3630
          %v4193 = vmul.f32 %v4189, %v3734
          %v4194 = vadd.f32 %v3304, %v4190
          %v4195 = vadd.f32 %v3305, %v4191
          %v4196 = vadd.f32 %v3306, %v4192
          %v4197 = vadd.f32 %v3307, %v4193
          %v4198 = vstv %s4188
          %v4199 = vmul.f32 %v4198, %v3837
          %v4200 = vmul.f32 %v4198, %v3940
          %v4201 = vmul.f32 %v4198, %v4043
          %v4202 = vmul.f32 %v4198, %v4146
          %v4203 = vadd.f32 %v4194, %v4199
          %v4204 = vadd.f32 %v4195, %v4200
          %v4205 = vadd.f32 %v4196, %v4201
          %v4206 = vadd.f32 %v4197, %v4202
          %v4207 = vmul.f32 %v3422, %v3837
          %v4208 = vmul.f32 %v3526, %v3940
          %v4209 = vmul.f32 %v3630, %v4043
          %v4210 = vmul.f32 %v3734, %v4146
          %v4211 = vmul.f32 %v4207, 2.0
          %v4212 = vmul.f32 %v4208, 2.0
          %v4213 = vmul.f32 %v4209, 2.0
          %v4214 = vmul.f32 %v4210, 2.0
          %v4215 = vmul.f32 %v3422, %v3422
          %v4216 = vmul.f32 %v3526, %v3526
          %v4217 = vmul.f32 %v3630, %v3630
          %v4218 = vmul.f32 %v3734, %v3734
          %v4219 = vmul.f32 %v4215, 2.0
          %v4220 = vmul.f32 %v4216, 2.0
          %v4221 = vmul.f32 %v4217, 2.0
          %v4222 = vmul.f32 %v4218, 2.0
          %v4223 = vsub.f32 1.0, %v4219
          %v4224 = vsub.f32 1.0, %v4220
          %v4225 = vsub.f32 1.0, %v4221
          %v4226 = vsub.f32 1.0, %v4222
          %s4227 = sld [smem:[#allocation2 + $0xb]]
          %s4228 = sld [smem:[#allocation2 + $0x5c]]
          %v4229 = vstv %s4227
          %v4230 = vmul.f32 %v4229, %v4211
          %v4231 = vmul.f32 %v4229, %v4212
          %v4232 = vmul.f32 %v4229, %v4213
          %v4233 = vmul.f32 %v4229, %v4214
          %v4234 = vadd.f32 %v4163, %v4230
          %v4235 = vadd.f32 %v4164, %v4231
          %v4236 = vadd.f32 %v4165, %v4232
          %v4237 = vadd.f32 %v4166, %v4233
          %v4238 = vstv %s4228
          %v4239 = vmul.f32 %v4238, %v4223
          %v4240 = vmul.f32 %v4238, %v4224
          %v4241 = vmul.f32 %v4238, %v4225
          %v4242 = vmul.f32 %v4238, %v4226
          %v4243 = vadd.f32 %v4234, %v4239
          %v4244 = vadd.f32 %v4235, %v4240
          %v4245 = vadd.f32 %v4236, %v4241
          %v4246 = vadd.f32 %v4237, %v4242
          %s4247 = sld [smem:[#allocation2 + $0xe]]
          %s4248 = sld [smem:[#allocation2 + $0x5f]]
          %v4249 = vstv %s4247
          %v4250 = vmul.f32 %v4249, %v4211
          %v4251 = vmul.f32 %v4249, %v4212
          %v4252 = vmul.f32 %v4249, %v4213
          %v4253 = vmul.f32 %v4249, %v4214
          %v4254 = vadd.f32 %v4183, %v4250
          %v4255 = vadd.f32 %v4184, %v4251
          %v4256 = vadd.f32 %v4185, %v4252
          %v4257 = vadd.f32 %v4186, %v4253
          %v4258 = vstv %s4248
          %v4259 = vmul.f32 %v4258, %v4223
          %v4260 = vmul.f32 %v4258, %v4224
          %v4261 = vmul.f32 %v4258, %v4225
          %v4262 = vmul.f32 %v4258, %v4226
          %v4263 = vadd.f32 %v4254, %v4259
          %v4264 = vadd.f32 %v4255, %v4260
          %v4265 = vadd.f32 %v4256, %v4261
          %v4266 = vadd.f32 %v4257, %v4262
          %s4267 = sld [smem:[#allocation2 + $0x11]]
          %s4268 = sld [smem:[#allocation2 + $0x62]]
          %v4269 = vstv %s4267
          %v4270 = vmul.f32 %v4269, %v4211
          %v4271 = vmul.f32 %v4269, %v4212
          %v4272 = vmul.f32 %v4269, %v4213
          %v4273 = vmul.f32 %v4269, %v4214
          %v4274 = vadd.f32 %v4203, %v4270
          %v4275 = vadd.f32 %v4204, %v4271
          %v4276 = vadd.f32 %v4205, %v4272
          %v4277 = vadd.f32 %v4206, %v4273
          %v4278 = vstv %s4268
          %v4279 = vmul.f32 %v4278, %v4223
          %v4280 = vmul.f32 %v4278, %v4224
          %v4281 = vmul.f32 %v4278, %v4225
          %v4282 = vmul.f32 %v4278, %v4226
          %v4283 = vadd.f32 %v4274, %v4279
          %v4284 = vadd.f32 %v4275, %v4280
          %v4285 = vadd.f32 %v4276, %v4281
          %v4286 = vadd.f32 %v4277, %v4282
          %v4287 = vmul.f32 %v4211, %v4223
          %v4288 = vmul.f32 %v4212, %v4224
          %v4289 = vmul.f32 %v4213, %v4225
          %v4290 = vmul.f32 %v4214, %v4226
          %v4291 = vmul.f32 %v4287, 2.0
          %v4292 = vmul.f32 %v4288, 2.0
          %v4293 = vmul.f32 %v4289, 2.0
          %v4294 = vmul.f32 %v4290, 2.0
          %v4295 = vmul.f32 %v4211, %v4211
          %v4296 = vmul.f32 %v4212, %v4212
          %v4297 = vmul.f32 %v4213, %v4213
          %v4298 = vmul.f32 %v4214, %v4214
          %v4299 = vmul.f32 %v4295, 2.0
          %v4300 = vmul.f32 %v4296, 2.0
          %v4301 = vmul.f32 %v4297, 2.0
          %v4302 = vmul.f32 %v4298, 2.0
          %v4303 = vsub.f32 1.0, %v4299
          %v4304 = vsub.f32 1.0, %v4300
          %v4305 = vsub.f32 1.0, %v4301
          %v4306 = vsub.f32 1.0, %v4302
          %s4307 = sld [smem:[#allocation2 + $0x14]]
          %s4308 = sld [smem:[#allocation2 + $0x65]]
          %v4309 = vstv %s4307
          %v4310 = vmul.f32 %v4309, %v4291
          %v4311 = vmul.f32 %v4309, %v4292
          %v4312 = vmul.f32 %v4309, %v4293
          %v4313 = vmul.f32 %v4309, %v4294
          %v4314 = vadd.f32 %v4243, %v4310
          %v4315 = vadd.f32 %v4244, %v4311
          %v4316 = vadd.f32 %v4245, %v4312
          %v4317 = vadd.f32 %v4246, %v4313
          %v4318 = vstv %s4308
          %v4319 = vmul.f32 %v4318, %v4303
          %v4320 = vmul.f32 %v4318, %v4304
          %v4321 = vmul.f32 %v4318, %v4305
          %v4322 = vmul.f32 %v4318, %v4306
          %v4323 = vadd.f32 %v4314, %v4319
          %v4324 = vadd.f32 %v4315, %v4320
          %v4325 = vadd.f32 %v4316, %v4321
          %v4326 = vadd.f32 %v4317, %v4322
          %s4327 = sld [smem:[#allocation2 + $0x17]]
          %s4328 = sld [smem:[#allocation2 + $0x68]]
          %v4329 = vstv %s4327
          %v4330 = vmul.f32 %v4329, %v4291
          %v4331 = vmul.f32 %v4329, %v4292
          %v4332 = vmul.f32 %v4329, %v4293
          %v4333 = vmul.f32 %v4329, %v4294
          %v4334 = vadd.f32 %v4263, %v4330
          %v4335 = vadd.f32 %v4264, %v4331
          %v4336 = vadd.f32 %v4265, %v4332
          %v4337 = vadd.f32 %v4266, %v4333
          %v4338 = vstv %s4328
          %v4339 = vmul.f32 %v4338, %v4303
          %v4340 = vmul.f32 %v4338, %v4304
          %v4341 = vmul.f32 %v4338, %v4305
          %v4342 = vmul.f32 %v4338, %v4306
          %v4343 = vadd.f32 %v4334, %v4339
          %v4344 = vadd.f32 %v4335, %v4340
          %v4345 = vadd.f32 %v4336, %v4341
          %v4346 = vadd.f32 %v4337, %v4342
          %s4347 = sld [smem:[#allocation2 + $0x1a]]
          %s4348 = sld [smem:[#allocation2 + $0x6b]]
          %v4349 = vstv %s4347
          %v4350 = vmul.f32 %v4349, %v4291
          %v4351 = vmul.f32 %v4349, %v4292
          %v4352 = vmul.f32 %v4349, %v4293
          %v4353 = vmul.f32 %v4349, %v4294
          %v4354 = vadd.f32 %v4283, %v4350
          %v4355 = vadd.f32 %v4284, %v4351
          %v4356 = vadd.f32 %v4285, %v4352
          %v4357 = vadd.f32 %v4286, %v4353
          %v4358 = vstv %s4348
          %v4359 = vmul.f32 %v4358, %v4303
          %v4360 = vmul.f32 %v4358, %v4304
          %v4361 = vmul.f32 %v4358, %v4305
          %v4362 = vmul.f32 %v4358, %v4306
          %v4363 = vadd.f32 %v4354, %v4359
          %v4364 = vadd.f32 %v4355, %v4360
          %v4365 = vadd.f32 %v4356, %v4361
          %v4366 = vadd.f32 %v4357, %v4362
          %v4367 = vmul.f32 %v4291, %v4303
          %v4368 = vmul.f32 %v4292, %v4304
          %v4369 = vmul.f32 %v4293, %v4305
          %v4370 = vmul.f32 %v4294, %v4306
          %v4371 = vmul.f32 %v4367, 2.0
          %v4372 = vmul.f32 %v4368, 2.0
          %v4373 = vmul.f32 %v4369, 2.0
          %v4374 = vmul.f32 %v4370, 2.0
          %v4375 = vmul.f32 %v4291, %v4291
          %v4376 = vmul.f32 %v4292, %v4292
          %v4377 = vmul.f32 %v4293, %v4293
          %v4378 = vmul.f32 %v4294, %v4294
          %v4379 = vmul.f32 %v4375, 2.0
          %v4380 = vmul.f32 %v4376, 2.0
          %v4381 = vmul.f32 %v4377, 2.0
          %v4382 = vmul.f32 %v4378, 2.0
          %v4383 = vsub.f32 1.0, %v4379
          %v4384 = vsub.f32 1.0, %v4380
          %v4385 = vsub.f32 1.0, %v4381
          %v4386 = vsub.f32 1.0, %v4382
          %s4387 = sld [smem:[#allocation2 + $0x1d]]
          %s4388 = sld [smem:[#allocation2 + $0x6e]]
          %v4389 = vstv %s4387
          %v4390 = vmul.f32 %v4389, %v4371
          %v4391 = vmul.f32 %v4389, %v4372
          %v4392 = vmul.f32 %v4389, %v4373
          %v4393 = vmul.f32 %v4389, %v4374
          %v4394 = vadd.f32 %v4323, %v4390
          %v4395 = vadd.f32 %v4324, %v4391
          %v4396 = vadd.f32 %v4325, %v4392
          %v4397 = vadd.f32 %v4326, %v4393
          %v4398 = vstv %s4388
          %v4399 = vmul.f32 %v4398, %v4383
          %v4400 = vmul.f32 %v4398, %v4384
          %v4401 = vmul.f32 %v4398, %v4385
          %v4402 = vmul.f32 %v4398, %v4386
          %v4403 = vadd.f32 %v4394, %v4399
          %v4404 = vadd.f32 %v4395, %v4400
          %v4405 = vadd.f32 %v4396, %v4401
          %v4406 = vadd.f32 %v4397, %v4402
          %s4407 = sld [smem:[#allocation2 + $0x20]]
          %s4408 = sld [smem:[#allocation2 + $0x71]]
          %v4409 = vstv %s4407
          %v4410 = vmul.f32 %v4409, %v4371
          %v4411 = vmul.f32 %v4409, %v4372
          %v4412 = vmul.f32 %v4409, %v4373
          %v4413 = vmul.f32 %v4409, %v4374
          %v4414 = vadd.f32 %v4343, %v4410
          %v4415 = vadd.f32 %v4344, %v4411
          %v4416 = vadd.f32 %v4345, %v4412
          %v4417 = vadd.f32 %v4346, %v4413
          %v4418 = vstv %s4408
          %v4419 = vmul.f32 %v4418, %v4383
          %v4420 = vmul.f32 %v4418, %v4384
          %v4421 = vmul.f32 %v4418, %v4385
          %v4422 = vmul.f32 %v4418, %v4386
          %v4423 = vadd.f32 %v4414, %v4419
          %v4424 = vadd.f32 %v4415, %v4420
          %v4425 = vadd.f32 %v4416, %v4421
          %v4426 = vadd.f32 %v4417, %v4422
          %s4427 = sld [smem:[#allocation2 + $0x23]]
          %s4428 = sld [smem:[#allocation2 + $0x74]]
          %v4429 = vstv %s4427
          %v4430 = vmul.f32 %v4429, %v4371
          %v4431 = vmul.f32 %v4429, %v4372
          %v4432 = vmul.f32 %v4429, %v4373
          %v4433 = vmul.f32 %v4429, %v4374
          %v4434 = vadd.f32 %v4363, %v4430
          %v4435 = vadd.f32 %v4364, %v4431
          %v4436 = vadd.f32 %v4365, %v4432
          %v4437 = vadd.f32 %v4366, %v4433
          %v4438 = vstv %s4428
          %v4439 = vmul.f32 %v4438, %v4383
          %v4440 = vmul.f32 %v4438, %v4384
          %v4441 = vmul.f32 %v4438, %v4385
          %v4442 = vmul.f32 %v4438, %v4386
          %v4443 = vadd.f32 %v4434, %v4439
          %v4444 = vadd.f32 %v4435, %v4440
          %v4445 = vadd.f32 %v4436, %v4441
          %v4446 = vadd.f32 %v4437, %v4442
          %v4447 = vmul.f32 %v4371, %v4383
          %v4448 = vmul.f32 %v4372, %v4384
          %v4449 = vmul.f32 %v4373, %v4385
          %v4450 = vmul.f32 %v4374, %v4386
          %v4451 = vmul.f32 %v4447, 2.0
          %v4452 = vmul.f32 %v4448, 2.0
          %v4453 = vmul.f32 %v4449, 2.0
          %v4454 = vmul.f32 %v4450, 2.0
          %v4455 = vmul.f32 %v4371, %v4371
          %v4456 = vmul.f32 %v4372, %v4372
          %v4457 = vmul.f32 %v4373, %v4373
          %v4458 = vmul.f32 %v4374, %v4374
          %v4459 = vmul.f32 %v4455, 2.0
          %v4460 = vmul.f32 %v4456, 2.0
          %v4461 = vmul.f32 %v4457, 2.0
          %v4462 = vmul.f32 %v4458, 2.0
          %v4463 = vsub.f32 1.0, %v4459
          %v4464 = vsub.f32 1.0, %v4460
          %v4465 = vsub.f32 1.0, %v4461
          %v4466 = vsub.f32 1.0, %v4462
          %s4467 = sld [smem:[#allocation2 + $0x26]]
          %s4468 = sld [smem:[#allocation2 + $0x77]]
          %v4469 = vstv %s4467
          %v4470 = vmul.f32 %v4469, %v4451
          %v4471 = vmul.f32 %v4469, %v4452
          %v4472 = vmul.f32 %v4469, %v4453
          %v4473 = vmul.f32 %v4469, %v4454
          %v4474 = vadd.f32 %v4403, %v4470
          %v4475 = vadd.f32 %v4404, %v4471
          %v4476 = vadd.f32 %v4405, %v4472
          %v4477 = vadd.f32 %v4406, %v4473
          %v4478 = vstv %s4468
          %v4479 = vmul.f32 %v4478, %v4463
          %v4480 = vmul.f32 %v4478, %v4464
          %v4481 = vmul.f32 %v4478, %v4465
          %v4482 = vmul.f32 %v4478, %v4466
          %v4483 = vadd.f32 %v4474, %v4479
          %v4484 = vadd.f32 %v4475, %v4480
          %v4485 = vadd.f32 %v4476, %v4481
          %v4486 = vadd.f32 %v4477, %v4482
          %s4487 = sld [smem:[#allocation2 + $0x29]]
          %s4488 = sld [smem:[#allocation2 + $0x7a]]
          %v4489 = vstv %s4487
          %v4490 = vmul.f32 %v4489, %v4451
          %v4491 = vmul.f32 %v4489, %v4452
          %v4492 = vmul.f32 %v4489, %v4453
          %v4493 = vmul.f32 %v4489, %v4454
          %v4494 = vadd.f32 %v4423, %v4490
          %v4495 = vadd.f32 %v4424, %v4491
          %v4496 = vadd.f32 %v4425, %v4492
          %v4497 = vadd.f32 %v4426, %v4493
          %v4498 = vstv %s4488
          %v4499 = vmul.f32 %v4498, %v4463
          %v4500 = vmul.f32 %v4498, %v4464
          %v4501 = vmul.f32 %v4498, %v4465
          %v4502 = vmul.f32 %v4498, %v4466
          %v4503 = vadd.f32 %v4494, %v4499
          %v4504 = vadd.f32 %v4495, %v4500
          %v4505 = vadd.f32 %v4496, %v4501
          %v4506 = vadd.f32 %v4497, %v4502
          %s4507 = sld [smem:[#allocation2 + $0x2c]]
          %s4508 = sld [smem:[#allocation2 + $0x7d]]
          %v4509 = vstv %s4507
          %v4510 = vmul.f32 %v4509, %v4451
          %v4511 = vmul.f32 %v4509, %v4452
          %v4512 = vmul.f32 %v4509, %v4453
          %v4513 = vmul.f32 %v4509, %v4454
          %v4514 = vadd.f32 %v4443, %v4510
          %v4515 = vadd.f32 %v4444, %v4511
          %v4516 = vadd.f32 %v4445, %v4512
          %v4517 = vadd.f32 %v4446, %v4513
          %v4518 = vstv %s4508
          %v4519 = vmul.f32 %v4518, %v4463
          %v4520 = vmul.f32 %v4518, %v4464
          %v4521 = vmul.f32 %v4518, %v4465
          %v4522 = vmul.f32 %v4518, %v4466
          %v4523 = vadd.f32 %v4514, %v4519
          %v4524 = vadd.f32 %v4515, %v4520
          %v4525 = vadd.f32 %v4516, %v4521
          %v4526 = vadd.f32 %v4517, %v4522
          %v4527 = vmul.f32 %v4451, %v4463
          %v4528 = vmul.f32 %v4452, %v4464
          %v4529 = vmul.f32 %v4453, %v4465
          %v4530 = vmul.f32 %v4454, %v4466
          %v4531 = vmul.f32 %v4527, 2.0
          %v4532 = vmul.f32 %v4528, 2.0
          %v4533 = vmul.f32 %v4529, 2.0
          %v4534 = vmul.f32 %v4530, 2.0
          %v4535 = vmul.f32 %v4451, %v4451
          %v4536 = vmul.f32 %v4452, %v4452
          %v4537 = vmul.f32 %v4453, %v4453
          %v4538 = vmul.f32 %v4454, %v4454
          %v4539 = vmul.f32 %v4535, 2.0
          %v4540 = vmul.f32 %v4536, 2.0
          %v4541 = vmul.f32 %v4537, 2.0
          %v4542 = vmul.f32 %v4538, 2.0
          %v4543 = vsub.f32 1.0, %v4539
          %v4544 = vsub.f32 1.0, %v4540
          %v4545 = vsub.f32 1.0, %v4541
          %v4546 = vsub.f32 1.0, %v4542
          %s4547 = sld [smem:[#allocation2 + $0x2f]]
          %s4548 = sld [smem:[#allocation2 + $0x80]]
          %v4549 = vstv %s4547
          %v4550 = vmul.f32 %v4549, %v4531
          %v4551 = vmul.f32 %v4549, %v4532
          %v4552 = vmul.f32 %v4549, %v4533
          %v4553 = vmul.f32 %v4549, %v4534
          %v4554 = vadd.f32 %v4483, %v4550
          %v4555 = vadd.f32 %v4484, %v4551
          %v4556 = vadd.f32 %v4485, %v4552
          %v4557 = vadd.f32 %v4486, %v4553
          %v4558 = vstv %s4548
          %v4559 = vmul.f32 %v4558, %v4543
          %v4560 = vmul.f32 %v4558, %v4544
          %v4561 = vmul.f32 %v4558, %v4545
          %v4562 = vmul.f32 %v4558, %v4546
          %v4563 = vadd.f32 %v4554, %v4559
          %v4564 = vadd.f32 %v4555, %v4560
          %v4565 = vadd.f32 %v4556, %v4561
          %v4566 = vadd.f32 %v4557, %v4562
          %s4567 = sld [smem:[#allocation2 + $0x32]]
          %s4568 = sld [smem:[#allocation2 + $0x83]]
          %v4569 = vstv %s4567
          %v4570 = vmul.f32 %v4569, %v4531
          %v4571 = vmul.f32 %v4569, %v4532
          %v4572 = vmul.f32 %v4569, %v4533
          %v4573 = vmul.f32 %v4569, %v4534
          %v4574 = vadd.f32 %v4503, %v4570
          %v4575 = vadd.f32 %v4504, %v4571
          %v4576 = vadd.f32 %v4505, %v4572
          %v4577 = vadd.f32 %v4506, %v4573
          %v4578 = vstv %s4568
          %v4579 = vmul.f32 %v4578, %v4543
          %v4580 = vmul.f32 %v4578, %v4544
          %v4581 = vmul.f32 %v4578, %v4545
          %v4582 = vmul.f32 %v4578, %v4546
          %v4583 = vadd.f32 %v4574, %v4579
          %v4584 = vadd.f32 %v4575, %v4580
          %v4585 = vadd.f32 %v4576, %v4581
          %v4586 = vadd.f32 %v4577, %v4582
          %s4587 = sld [smem:[#allocation2 + $0x35]]
          %s4588 = sld [smem:[#allocation2 + $0x86]]
          %v4589 = vstv %s4587
          %v4590 = vmul.f32 %v4589, %v4531
          %v4591 = vmul.f32 %v4589, %v4532
          %v4592 = vmul.f32 %v4589, %v4533
          %v4593 = vmul.f32 %v4589, %v4534
          %v4594 = vadd.f32 %v4523, %v4590
          %v4595 = vadd.f32 %v4524, %v4591
          %v4596 = vadd.f32 %v4525, %v4592
          %v4597 = vadd.f32 %v4526, %v4593
          %v4598 = vstv %s4588
          %v4599 = vmul.f32 %v4598, %v4543
          %v4600 = vmul.f32 %v4598, %v4544
          %v4601 = vmul.f32 %v4598, %v4545
          %v4602 = vmul.f32 %v4598, %v4546
          %v4603 = vadd.f32 %v4594, %v4599
          %v4604 = vadd.f32 %v4595, %v4600
          %v4605 = vadd.f32 %v4596, %v4601
          %v4606 = vadd.f32 %v4597, %v4602
          %v4607 = vmul.f32 %v4531, %v4543
          %v4608 = vmul.f32 %v4532, %v4544
          %v4609 = vmul.f32 %v4533, %v4545
          %v4610 = vmul.f32 %v4534, %v4546
          %v4611 = vmul.f32 %v4607, 2.0
          %v4612 = vmul.f32 %v4608, 2.0
          %v4613 = vmul.f32 %v4609, 2.0
          %v4614 = vmul.f32 %v4610, 2.0
          %v4615 = vmul.f32 %v4531, %v4531
          %v4616 = vmul.f32 %v4532, %v4532
          %v4617 = vmul.f32 %v4533, %v4533
          %v4618 = vmul.f32 %v4534, %v4534
          %v4619 = vmul.f32 %v4615, 2.0
          %v4620 = vmul.f32 %v4616, 2.0
          %v4621 = vmul.f32 %v4617, 2.0
          %v4622 = vmul.f32 %v4618, 2.0
          %v4623 = vsub.f32 1.0, %v4619
          %v4624 = vsub.f32 1.0, %v4620
          %v4625 = vsub.f32 1.0, %v4621
          %v4626 = vsub.f32 1.0, %v4622
          %s4627 = sld [smem:[#allocation2 + $0x38]]
          %s4628 = sld [smem:[#allocation2 + $0x89]]
          %v4629 = vstv %s4627
          %v4630 = vmul.f32 %v4629, %v4611
          %v4631 = vmul.f32 %v4629, %v4612
          %v4632 = vmul.f32 %v4629, %v4613
          %v4633 = vmul.f32 %v4629, %v4614
          %v4634 = vadd.f32 %v4563, %v4630
          %v4635 = vadd.f32 %v4564, %v4631
          %v4636 = vadd.f32 %v4565, %v4632
          %v4637 = vadd.f32 %v4566, %v4633
          %v4638 = vstv %s4628
          %v4639 = vmul.f32 %v4638, %v4623
          %v4640 = vmul.f32 %v4638, %v4624
          %v4641 = vmul.f32 %v4638, %v4625
          %v4642 = vmul.f32 %v4638, %v4626
          %v4643 = vadd.f32 %v4634, %v4639
          %v4644 = vadd.f32 %v4635, %v4640
          %v4645 = vadd.f32 %v4636, %v4641
          %v4646 = vadd.f32 %v4637, %v4642
          %s4647 = sld [smem:[#allocation2 + $0x3b]]
          %s4648 = sld [smem:[#allocation2 + $0x8c]]
          %v4649 = vstv %s4647
          %v4650 = vmul.f32 %v4649, %v4611
          %v4651 = vmul.f32 %v4649, %v4612
          %v4652 = vmul.f32 %v4649, %v4613
          %v4653 = vmul.f32 %v4649, %v4614
          %v4654 = vadd.f32 %v4583, %v4650
          %v4655 = vadd.f32 %v4584, %v4651
          %v4656 = vadd.f32 %v4585, %v4652
          %v4657 = vadd.f32 %v4586, %v4653
          %v4658 = vstv %s4648
          %v4659 = vmul.f32 %v4658, %v4623
          %v4660 = vmul.f32 %v4658, %v4624
          %v4661 = vmul.f32 %v4658, %v4625
          %v4662 = vmul.f32 %v4658, %v4626
          %v4663 = vadd.f32 %v4654, %v4659
          %v4664 = vadd.f32 %v4655, %v4660
          %v4665 = vadd.f32 %v4656, %v4661
          %v4666 = vadd.f32 %v4657, %v4662
          %s4667 = sld [smem:[#allocation2 + $0x3e]]
          %s4668 = sld [smem:[#allocation2 + $0x8f]]
          %v4669 = vstv %s4667
          %v4670 = vmul.f32 %v4669, %v4611
          %v4671 = vmul.f32 %v4669, %v4612
          %v4672 = vmul.f32 %v4669, %v4613
          %v4673 = vmul.f32 %v4669, %v4614
          %v4674 = vadd.f32 %v4603, %v4670
          %v4675 = vadd.f32 %v4604, %v4671
          %v4676 = vadd.f32 %v4605, %v4672
          %v4677 = vadd.f32 %v4606, %v4673
          %v4678 = vstv %s4668
          %v4679 = vmul.f32 %v4678, %v4623
          %v4680 = vmul.f32 %v4678, %v4624
          %v4681 = vmul.f32 %v4678, %v4625
          %v4682 = vmul.f32 %v4678, %v4626
          %v4683 = vadd.f32 %v4674, %v4679
          %v4684 = vadd.f32 %v4675, %v4680
          %v4685 = vadd.f32 %v4676, %v4681
          %v4686 = vadd.f32 %v4677, %v4682
          %v4687 = vmul.f32 %v4611, %v4623
          %v4688 = vmul.f32 %v4612, %v4624
          %v4689 = vmul.f32 %v4613, %v4625
          %v4690 = vmul.f32 %v4614, %v4626
          %v4691 = vmul.f32 %v4687, 2.0
          %v4692 = vmul.f32 %v4688, 2.0
          %v4693 = vmul.f32 %v4689, 2.0
          %v4694 = vmul.f32 %v4690, 2.0
          %v4695 = vmul.f32 %v4611, %v4611
          %v4696 = vmul.f32 %v4612, %v4612
          %v4697 = vmul.f32 %v4613, %v4613
          %v4698 = vmul.f32 %v4614, %v4614
          %v4699 = vmul.f32 %v4695, 2.0
          %v4700 = vmul.f32 %v4696, 2.0
          %v4701 = vmul.f32 %v4697, 2.0
          %v4702 = vmul.f32 %v4698, 2.0
          %v4703 = vsub.f32 1.0, %v4699
          %v4704 = vsub.f32 1.0, %v4700
          %v4705 = vsub.f32 1.0, %v4701
          %v4706 = vsub.f32 1.0, %v4702
          %s4707 = sld [smem:[#allocation2 + $0x41]]
          %s4708 = sld [smem:[#allocation2 + $0x92]]
          %v4709 = vstv %s4707
          %v4710 = vmul.f32 %v4709, %v4691
          %v4711 = vmul.f32 %v4709, %v4692
          %v4712 = vmul.f32 %v4709, %v4693
          %v4713 = vmul.f32 %v4709, %v4694
          %v4714 = vadd.f32 %v4643, %v4710
          %v4715 = vadd.f32 %v4644, %v4711
          %v4716 = vadd.f32 %v4645, %v4712
          %v4717 = vadd.f32 %v4646, %v4713
          %v4718 = vstv %s4708
          %v4719 = vmul.f32 %v4718, %v4703
          %v4720 = vmul.f32 %v4718, %v4704
          %v4721 = vmul.f32 %v4718, %v4705
          %v4722 = vmul.f32 %v4718, %v4706
          %v4723 = vadd.f32 %v4714, %v4719
          %v4724 = vadd.f32 %v4715, %v4720
          %v4725 = vadd.f32 %v4716, %v4721
          %v4726 = vadd.f32 %v4717, %v4722
          %s4727 = sld [smem:[#allocation2 + $0x44]]
          %s4728 = sld [smem:[#allocation2 + $0x95]]
          %v4729 = vstv %s4727
          %v4730 = vmul.f32 %v4729, %v4691
          %v4731 = vmul.f32 %v4729, %v4692
          %v4732 = vmul.f32 %v4729, %v4693
          %v4733 = vmul.f32 %v4729, %v4694
          %v4734 = vadd.f32 %v4663, %v4730
          %v4735 = vadd.f32 %v4664, %v4731
          %v4736 = vadd.f32 %v4665, %v4732
          %v4737 = vadd.f32 %v4666, %v4733
          %v4738 = vstv %s4728
          %v4739 = vmul.f32 %v4738, %v4703
          %v4740 = vmul.f32 %v4738, %v4704
          %v4741 = vmul.f32 %v4738, %v4705
          %v4742 = vmul.f32 %v4738, %v4706
          %v4743 = vadd.f32 %v4734, %v4739
          %v4744 = vadd.f32 %v4735, %v4740
          %v4745 = vadd.f32 %v4736, %v4741
          %v4746 = vadd.f32 %v4737, %v4742
          %s4747 = sld [smem:[#allocation2 + $0x47]]
          %s4748 = sld [smem:[#allocation2 + $0x98]]
          %v4749 = vstv %s4747
          %v4750 = vmul.f32 %v4749, %v4691
          %v4751 = vmul.f32 %v4749, %v4692
          %v4752 = vmul.f32 %v4749, %v4693
          %v4753 = vmul.f32 %v4749, %v4694
          %v4754 = vadd.f32 %v4683, %v4750
          %v4755 = vadd.f32 %v4684, %v4751
          %v4756 = vadd.f32 %v4685, %v4752
          %v4757 = vadd.f32 %v4686, %v4753
          %v4758 = vstv %s4748
          %v4759 = vmul.f32 %v4758, %v4703
          %v4760 = vmul.f32 %v4758, %v4704
          %v4761 = vmul.f32 %v4758, %v4705
          %v4762 = vmul.f32 %v4758, %v4706
          %v4763 = vadd.f32 %v4754, %v4759
          %v4764 = vadd.f32 %v4755, %v4760
          %v4765 = vadd.f32 %v4756, %v4761
          %v4766 = vadd.f32 %v4757, %v4762
          %v4767 = vmul.f32 %v4691, %v4703
          %v4768 = vmul.f32 %v4692, %v4704
          %v4769 = vmul.f32 %v4693, %v4705
          %v4770 = vmul.f32 %v4694, %v4706
          %v4771 = vmul.f32 %v4767, 2.0
          %v4772 = vmul.f32 %v4768, 2.0
          %v4773 = vmul.f32 %v4769, 2.0
          %v4774 = vmul.f32 %v4770, 2.0
          %v4775 = vmul.f32 %v4691, %v4691
          %v4776 = vmul.f32 %v4692, %v4692
          %v4777 = vmul.f32 %v4693, %v4693
          %v4778 = vmul.f32 %v4694, %v4694
          %v4779 = vmul.f32 %v4775, 2.0
          %v4780 = vmul.f32 %v4776, 2.0
          %v4781 = vmul.f32 %v4777, 2.0
          %v4782 = vmul.f32 %v4778, 2.0
          %v4783 = vsub.f32 1.0, %v4779
          %v4784 = vsub.f32 1.0, %v4780
          %v4785 = vsub.f32 1.0, %v4781
          %v4786 = vsub.f32 1.0, %v4782
          %s4787 = sld [smem:[#allocation2 + $0x4a]]
          %s4788 = sld [smem:[#allocation2 + $0x9b]]
          %v4789 = vstv %s4787
          %v4790 = vmul.f32 %v4789, %v4771
          %v4791 = vmul.f32 %v4789, %v4772
          %v4792 = vmul.f32 %v4789, %v4773
          %v4793 = vmul.f32 %v4789, %v4774
          %v4794 = vadd.f32 %v4723, %v4790
          %v4795 = vadd.f32 %v4724, %v4791
          %v4796 = vadd.f32 %v4725, %v4792
          %v4797 = vadd.f32 %v4726, %v4793
          %v4798 = vstv %s4788
          %v4799 = vmul.f32 %v4798, %v4783
          %v4800 = vmul.f32 %v4798, %v4784
          %v4801 = vmul.f32 %v4798, %v4785
          %v4802 = vmul.f32 %v4798, %v4786
          %v4803 = vadd.f32 %v4794, %v4799
          %v4804 = vadd.f32 %v4795, %v4800
          %v4805 = vadd.f32 %v4796, %v4801
          %v4806 = vadd.f32 %v4797, %v4802
          %s4807 = sld [smem:[#allocation2 + $0x4d]]
          %s4808 = sld [smem:[#allocation2 + $0x9e]]
          %v4809 = vstv %s4807
          %v4810 = vmul.f32 %v4809, %v4771
          %v4811 = vmul.f32 %v4809, %v4772
          %v4812 = vmul.f32 %v4809, %v4773
          %v4813 = vmul.f32 %v4809, %v4774
          %v4814 = vadd.f32 %v4743, %v4810
          %v4815 = vadd.f32 %v4744, %v4811
          %v4816 = vadd.f32 %v4745, %v4812
          %v4817 = vadd.f32 %v4746, %v4813
          %v4818 = vstv %s4808
          %v4819 = vmul.f32 %v4818, %v4783
          %v4820 = vmul.f32 %v4818, %v4784
          %v4821 = vmul.f32 %v4818, %v4785
          %v4822 = vmul.f32 %v4818, %v4786
          %v4823 = vadd.f32 %v4814, %v4819
          %v4824 = vadd.f32 %v4815, %v4820
          %v4825 = vadd.f32 %v4816, %v4821
          %v4826 = vadd.f32 %v4817, %v4822
          %s4827 = sld [smem:[#allocation2 + $0x50]]
          %s4828 = sld [smem:[#allocation2 + $0xa1]]
          %v4829 = vstv %s4827
          %v4830 = vmul.f32 %v4829, %v4771
          %v4831 = vmul.f32 %v4829, %v4772
          %v4832 = vmul.f32 %v4829, %v4773
          %v4833 = vmul.f32 %v4829, %v4774
          %v4834 = vadd.f32 %v4763, %v4830
          %v4835 = vadd.f32 %v4764, %v4831
          %v4836 = vadd.f32 %v4765, %v4832
          %v4837 = vadd.f32 %v4766, %v4833
          %v4838 = vstv %s4828
          %v4839 = vmul.f32 %v4838, %v4783
          %v4840 = vmul.f32 %v4838, %v4784
          %v4841 = vmul.f32 %v4838, %v4785
          %v4842 = vmul.f32 %v4838, %v4786
          %v4843 = vadd.f32 %v4834, %v4839
          %v4844 = vadd.f32 %v4835, %v4840
          %v4845 = vadd.f32 %v4836, %v4841
          %v4846 = vadd.f32 %v4837, %v4842
          %s4847 = sld [smem:[#allocation2 + $0xa2]]
          %v4848 = vstv %s4847
          %v4849 = vadd.f32 %v4803, %v4848
          %v4850 = vadd.f32 %v4804, %v4848
          %v4851 = vadd.f32 %v4805, %v4848
          %v4852 = vadd.f32 %v4806, %v4848
          %s4853 = smul.addr %s230, 8
          %s4854 = scalar_lea.vmem %s218, %s4853 [#allocation5]
          %4855 = vst [vmem:[%s4854] sm:$0xff] %v4849
          %4856 = vst [vmem:[%s4854 + $0x8] sm:$0xff] %v4850
          %4857 = vst [vmem:[%s4854 + $0x10] sm:$0xff] %v4851
          %4858 = vst [vmem:[%s4854 + $0x18] sm:$0xff] %v4852
          %s4859 = sld [smem:[#allocation2 + $0xa3]]
          %v4860 = vstv %s4859
          %v4861 = vadd.f32 %v4823, %v4860
          %v4862 = vadd.f32 %v4824, %v4860
          %v4863 = vadd.f32 %v4825, %v4860
          %v4864 = vadd.f32 %v4826, %v4860
          %s4865 = smul.addr %s1769, 8
          %s4866 = scalar_lea.vmem %s218, %s4865 [#allocation5]
          %4867 = vst [vmem:[%s4866] sm:$0xff] %v4861
          %4868 = vst [vmem:[%s4866 + $0x8] sm:$0xff] %v4862
          %4869 = vst [vmem:[%s4866 + $0x10] sm:$0xff] %v4863
          %4870 = vst [vmem:[%s4866 + $0x18] sm:$0xff] %v4864
          %s4871 = sld [smem:[#allocation2 + $0xa4]]
          %v4872 = vstv %s4871
          %v4873 = vadd.f32 %v4843, %v4872
          %v4874 = vadd.f32 %v4844, %v4872
          %v4875 = vadd.f32 %v4845, %v4872
          %v4876 = vadd.f32 %v4846, %v4872
          %s4877 = smul.addr %s3308, 8
          %s4878 = scalar_lea.vmem %s218, %s4877 [#allocation5]
          %4879 = vst [vmem:[%s4878] sm:$0xff] %v4873
          %4880 = vst [vmem:[%s4878 + $0x8] sm:$0xff] %v4874
          %4881 = vst [vmem:[%s4878 + $0x10] sm:$0xff] %v4875
          %4882 = vst [vmem:[%s4878 + $0x18] sm:$0xff] %v4876
        $region60: #{mlp_transformer_rhino.1} parent=46 // loop_footer
          %s226 = sadd.s32 1, %s222
        $region61: #{mlp_transformer_rhino.1} parent=46 // loop_footer_branch
          %221 = sbr.rel target = $region57
        $region62: #{mlp_transformer_rhino.1} parent=46 // loop_exit
          _
        %s4883 = sand.u32 %s69, 1
        %s4884 = sand.u32 %s69, 1
        %s4885 = smul.addr %s4884, 192
        %s4886 = scalar_lea.vmem [#allocation5], %s4885
        // Predicated region
        $region63: #{mlp_transformer_rhino.1} parent=46 // pred_check
          %p4887 = pneg %p79
        $region64: #{mlp_transformer_rhino.1} parent=46 // pred_check_branch
          %4889 = sbr.rel (%p4887) target = $region66
        $region65: #{mlp_transformer_rhino.1} parent=46 // pred_region
          %s4890 = smul.u32 2, %s14
          %s4891 = smul.addr %s4890, 4
          %s4892 = smul.addr %s4891, 8
          %s4893 = scalar_lea.vmem %s2, %s4892
          // Predicated region
          $region67: #{mlp_transformer_rhino.1} parent=65 // pred_check
            _
          $region68: #{mlp_transformer_rhino.1} parent=65 // pred_check_branch
            %4895 = sbr.rel (0) target = $region70
          $region69: #{mlp_transformer_rhino.1} parent=65 // pred_region
            // Predicated region
            $region71: #{mlp_transformer_rhino.1} parent=69 // pred_check
              _
            $region72: #{mlp_transformer_rhino.1} parent=69 // pred_check_branch
              %4897 = sbr.rel (0) target = $region74
            $region73: #{mlp_transformer_rhino.1} parent=69 // pred_region
              loop: start=0, step=1, limit=1
              $region75: #{mlp_transformer_rhino.1} parent=73 // loop_pre_header
                _
              $region76: #{mlp_transformer_rhino.1} parent=73 // loop_header
                %s4899 = sphi 0, %s4903
                %p4900 = scmp.ge.s32.totalorder %s4899, 1
                %s4904 = sphi %s4886, %s4886
                %s4905 = sphi %s4893, %s4893
              $region77: #{mlp_transformer_rhino.1} parent=73 // loop_header_branch
                %4902 = sbr.rel (%p4900) target = $region81
              $region78: #{mlp_transformer_rhino.1} parent=73 // loop_body
                %v4906 = vld [vmem:[%s4904] sm:$0xff]
                %4907 = vst [vmem:[%s4905] sm:$0xff] %v4906
                %v4908 = vld [vmem:[%s4904 + $0x8] sm:$0xff]
                %4909 = vst [vmem:[%s4905 + $0x8] sm:$0xff] %v4908
                %v4910 = vld [vmem:[%s4904 + $0x10] sm:$0xff]
                %4911 = vst [vmem:[%s4905 + $0x10] sm:$0xff] %v4910
                %v4912 = vld [vmem:[%s4904 + $0x18] sm:$0xff]
                %4913 = vst [vmem:[%s4905 + $0x18] sm:$0xff] %v4912
                %v4914 = vld [vmem:[%s4904 + $0x20] sm:$0xff]
                %4915 = vst [vmem:[%s4905 + $0x20] sm:$0xff] %v4914
                %v4916 = vld [vmem:[%s4904 + $0x28] sm:$0xff]
                %4917 = vst [vmem:[%s4905 + $0x28] sm:$0xff] %v4916
                %v4918 = vld [vmem:[%s4904 + $0x30] sm:$0xff]
                %4919 = vst [vmem:[%s4905 + $0x30] sm:$0xff] %v4918
                %v4920 = vld [vmem:[%s4904 + $0x38] sm:$0xff]
                %4921 = vst [vmem:[%s4905 + $0x38] sm:$0xff] %v4920
                %v4922 = vld [vmem:[%s4904 + $0x40] sm:$0xff]
                %4923 = vst [vmem:[%s4905 + $0x80] sm:$0xff] %v4922
                %v4924 = vld [vmem:[%s4904 + $0x48] sm:$0xff]
                %4925 = vst [vmem:[%s4905 + $0x88] sm:$0xff] %v4924
                %v4926 = vld [vmem:[%s4904 + $0x50] sm:$0xff]
                %4927 = vst [vmem:[%s4905 + $0x90] sm:$0xff] %v4926
                %v4928 = vld [vmem:[%s4904 + $0x58] sm:$0xff]
                %4929 = vst [vmem:[%s4905 + $0x98] sm:$0xff] %v4928
                %v4930 = vld [vmem:[%s4904 + $0x60] sm:$0xff]
                %4931 = vst [vmem:[%s4905 + $0xa0] sm:$0xff] %v4930
                %v4932 = vld [vmem:[%s4904 + $0x68] sm:$0xff]
                %4933 = vst [vmem:[%s4905 + $0xa8] sm:$0xff] %v4932
                %v4934 = vld [vmem:[%s4904 + $0x70] sm:$0xff]
                %4935 = vst [vmem:[%s4905 + $0xb0] sm:$0xff] %v4934
                %v4936 = vld [vmem:[%s4904 + $0x78] sm:$0xff]
                %4937 = vst [vmem:[%s4905 + $0xb8] sm:$0xff] %v4936
                %v4938 = vld [vmem:[%s4904 + $0x80] sm:$0xff]
                %4939 = vst [vmem:[%s4905 + $0x100] sm:$0xff] %v4938
                %v4940 = vld [vmem:[%s4904 + $0x88] sm:$0xff]
                %4941 = vst [vmem:[%s4905 + $0x108] sm:$0xff] %v4940
                %v4942 = vld [vmem:[%s4904 + $0x90] sm:$0xff]
                %4943 = vst [vmem:[%s4905 + $0x110] sm:$0xff] %v4942
                %v4944 = vld [vmem:[%s4904 + $0x98] sm:$0xff]
                %4945 = vst [vmem:[%s4905 + $0x118] sm:$0xff] %v4944
                %v4946 = vld [vmem:[%s4904 + $0xa0] sm:$0xff]
                %4947 = vst [vmem:[%s4905 + $0x120] sm:$0xff] %v4946
                %v4948 = vld [vmem:[%s4904 + $0xa8] sm:$0xff]
                %4949 = vst [vmem:[%s4905 + $0x128] sm:$0xff] %v4948
                %v4950 = vld [vmem:[%s4904 + $0xb0] sm:$0xff]
                %4951 = vst [vmem:[%s4905 + $0x130] sm:$0xff] %v4950
                %v4952 = vld [vmem:[%s4904 + $0xb8] sm:$0xff]
                %4953 = vst [vmem:[%s4905 + $0x138] sm:$0xff] %v4952
              $region79: #{mlp_transformer_rhino.1} parent=73 // loop_footer
                %s4903 = sadd.s32 1, %s4899
              $region80: #{mlp_transformer_rhino.1} parent=73 // loop_footer_branch
                %4898 = sbr.rel target = $region76
              $region81: #{mlp_transformer_rhino.1} parent=73 // loop_exit
                _
            $region74: #{mlp_transformer_rhino.1} parent=69 // pred_fallthru
              _
            // Predicated region
            $region82: #{mlp_transformer_rhino.1} parent=69 // pred_check
              _
            $region83: #{mlp_transformer_rhino.1} parent=69 // pred_check_branch
              %4955 = sbr.rel target = $region85
            $region84: #{mlp_transformer_rhino.1} parent=69 // pred_region
              _
            $region85: #{mlp_transformer_rhino.1} parent=69 // pred_fallthru
              _
          $region70: #{mlp_transformer_rhino.1} parent=65 // pred_fallthru
            _
          %4956 = vnop
        $region66: #{mlp_transformer_rhino.1} parent=46 // pred_fallthru
          _
      $region47: #{mlp_transformer_rhino.1} parent=5 // pred_fallthru
        _
      %p4957 = scmp.le.s32.totalorder 2, %s9
      // Predicated region
      $region86: #{mlp_transformer_rhino.1} parent=5 // pred_check
        %p4958 = pneg %p4957
      $region87: #{mlp_transformer_rhino.1} parent=5 // pred_check_branch
        %4960 = sbr.rel (%p4958) target = $region89
      $region88: #{mlp_transformer_rhino.1} parent=5 // pred_region
        %s4961 = ssub.s32 %s9, 2
        // Predicated region
        $region90: #{mlp_transformer_rhino.1} parent=88 // pred_check
          %p4962 = pneg %p85
        $region91: #{mlp_transformer_rhino.1} parent=88 // pred_check_branch
          %4964 = sbr.rel (%p4962) target = $region93
        $region92: #{mlp_transformer_rhino.1} parent=88 // pred_region
          %s4965 = sand.u32 %s70, 1
          %s4966 = sand.u32 %s70, 1
          %s4967 = smul.addr %s4966, 192
          %s4968 = scalar_lea.vmem [#allocation5], %s4967
        $region93: #{mlp_transformer_rhino.1} parent=88 // pred_fallthru
          _
      $region89: #{mlp_transformer_rhino.1} parent=5 // pred_fallthru
        _
    $region6: #{mlp_transformer_rhino.1} parent=1 // loop_footer
      %s13 = sadd.s32 1, %s9
    $region7: #{mlp_transformer_rhino.1} parent=1 // loop_footer_branch
      %8 = sbr.rel target = $region3
    $region8: #{mlp_transformer_rhino.1} parent=1 // loop_exit
      _
    %4969 = vsyncpa [#allocation3], 1
    %s4970 = scalar_lea.sflag [#allocation3], 1
    %4971 = vsyncpa %s4970, 1

</llo_original>
